<compile_context>
chip_gen: v7x
topology: tpu7x:2x2x1
jax: 0.10.0
libtpu: 0.0.40
codegen_flags: <defaults>
</compile_context>

<pallas_src>
import functools

import jax
import jax.numpy as jnp
from jax.experimental import pallas as pl
from jax.experimental.pallas import tpu as pltpu

_LANE = 128   # vreg lane width
_SUB = 8      # vreg sublane count (f32)


def _round_up(n, m):
    return ((n + m - 1) // m) * m


# ----------------------------------------------------------------------------
# Pallas kernel: whole decoder forward (2 stacked LSTMs + linear head)
# ----------------------------------------------------------------------------
def _decoder_kernel(x_ref,
                    wih1_ref, whh1_ref, b1_ref,
                    wih2_ref, whh2_ref, b2_ref,
                    wo_ref, bo_ref,
                    out_ref,
                    hs_ref):
    BP = x_ref.shape[0]               # sublane-padded batch (multiple of 8)
    G1 = b1_ref.shape[-1] // 4        # lane-padded gate width of rnn1
    G2 = b2_ref.shape[-1] // 4        # lane-padded gate width of rnn2
    T = hs_ref.shape[0] // BP         # seq_len

    x = x_ref[...]

    # ---- loop-invariant hoists ----------------------------------------------
    # rnn1 sees the same input vector at every timestep (PyTorch expand), so
    # its input-gate contribution (and bias) is computed once.
    xg1 = (jnp.dot(x, wih1_ref[...], preferred_element_type=jnp.float32)
           + b1_ref[...])                              # (BP, 4*G1)
    whh1 = whh1_ref[...]                               # (G1, 4*G1): small, resident
    b2 = jnp.broadcast_to(b2_ref[...], (BP, 4 * G2))   # broadcast once (no CSE in-loop)

    def lstm_cell(g, c, gw):
        # gate order [i, f, o, g]; each 128-padded gate block is a whole vreg
        # slab, so these slices are register renames (no XLU lane shifts).
        sig = jax.nn.sigmoid(g[:, : 3 * gw])
        i = sig[:, 0 * gw:1 * gw]
        f = sig[:, 1 * gw:2 * gw]
        o = sig[:, 2 * gw:3 * gw]
        gg = jnp.tanh(g[:, 3 * gw:])
        c_new = f * c + i * gg
        h_new = o * jnp.tanh(c_new)
        return h_new, c_new

    # ---- recurrence: fully unrolled (T small & static) ----------------------
    h1 = jnp.zeros((BP, G1), jnp.float32)
    c1 = jnp.zeros((BP, G1), jnp.float32)
    h2 = jnp.zeros((BP, G2), jnp.float32)
    c2 = jnp.zeros((BP, G2), jnp.float32)
    # TODO(synk): if seq_len grows beyond ~32-64, switch to
    #   lax.fori_loop(..., unroll=2..4) with (h1,c1,h2,c2) carries to cap
    #   bundle count / vreg live ranges.
    # TODO(synk): hold whh1/whh2 MXU-weight-stationary via
    #   pltpu.matmul_push_rhs / matmul_acc_lhs / matmul_pop to drop the
    #   per-step RHS re-feed from VMEM.
    for t in range(T):
        # LSTM2's hidden-recurrent partial depends only on h2(t-1): it is off
        # the h1(t) dependency chain and can overlap with LSTM1 of step t.
        g2_rec = (jnp.dot(h2, whh2_ref[...], preferred_element_type=jnp.float32)
                  + b2)

        # LSTM1 (input_dim -> input_dim)
        g1 = xg1 + jnp.dot(h1, whh1, preferred_element_type=jnp.float32)
        h1, c1 = lstm_cell(g1, c1, G1)

        # LSTM2 (input_dim -> 2*input_dim): join the two partials (un-fused,
        # no per-step lane concat on the critical path).
        g2 = g2_rec + jnp.dot(h1, wih2_ref[...],
                              preferred_element_type=jnp.float32)
        h2, c2 = lstm_cell(g2, c2, G2)

        # Stash h2: static, sublane-aligned full-tile store (no masking, no
        # inter-step tile aliasing); the output head is hoisted out of the loop.
        hs_ref[t * BP:(t + 1) * BP, :] = h2

    # ---- output head: one matmul + one contiguous store ---------------------
    y = (jnp.dot(hs_ref[...], wo_ref[...], preferred_element_type=jnp.float32)
         + bo_ref[...])                                # (T*BP, F)
    out_ref[...] = y.astype(out_ref.dtype)


# ----------------------------------------------------------------------------
# Wrapper: gate reorder [i,f,g,o] -> [i,f,o,g], lane-pad gate blocks to 128,
# sublane-pad batch to 8, fuse biases, transpose weights to (in, out).
# ----------------------------------------------------------------------------
def _reorder_gates(w):
    """Permute PyTorch LSTM gate blocks [i, f, g, o] -> [i, f, o, g] (axis 0)."""
    i, f, g, o = jnp.split(w, 4, axis=0)
    return jnp.concatenate([i, f, o, g], axis=0)


def _pad_gate_cols(w_t, gate_dim, padded_dim):
    """w_t: (K, 4*gate_dim) -> (K, 4*padded_dim), zero-padding each gate block."""
    pad = padded_dim - gate_dim
    blocks = jnp.split(w_t, 4, axis=1)
    return jnp.concatenate(
        [jnp.pad(b, ((0, 0), (0, pad))) for b in blocks], axis=1)


def _pad_rows(w, rows_to):
    return jnp.pad(w, ((0, rows_to - w.shape[0]), (0, 0)))


@functools.partial(jax.jit, static_argnames=("seq_len",))
def decoder_forward(x, params, *, seq_len):
    """x: (batch, input_dim) float32 -> (batch, seq_len, n_features) float32."""
    B, D = x.shape
    H = 2 * D
    F = params["wo"].shape[0]

    G1 = _round_up(D, _LANE)    # lane-padded gate/state width of rnn1
    G2 = _round_up(H, _LANE)    # lane-padded gate/state width of rnn2
    BP = _round_up(B, _SUB)     # sublane-padded batch

    # rnn1 weights: (in, out) layout, [i,f,o,g] order, gate blocks padded to G1.
    wih1 = _pad_gate_cols(_reorder_gates(params["wih1"]).T, D, G1)          # (D, 4*G1)
    whh1 = _pad_rows(_pad_gate_cols(_reorder_gates(params["whh1"]).T, D, G1),
                     G1)                                                     # (G1, 4*G1)
    b1 = _pad_gate_cols(
        _reorder_gates(params["bih1"] + params["bhh1"])[None, :], D, G1)     # (1, 4*G1)

    # rnn2 weights: kept SEPARATE (un-fused) so the kernel can issue the
    # h2-recurrent partial off the h1 critical path.
    wih2 = _pad_rows(_pad_gate_cols(_reorder_gates(params["wih2"]).T, H, G2),
                     G1)                                                     # (G1, 4*G2)
    whh2 = _pad_rows(_pad_gate_cols(_reorder_gates(params["whh2"]).T, H, G2),
                     G2)                                                     # (G2, 4*G2)
    b2 = _pad_gate_cols(
        _reorder_gates(params["bih2"] + params["bhh2"])[None, :], H, G2)     # (1, 4*G2)

    # Output head: (G2, F) with padded rows zero.
    wo = _pad_rows(params["wo"].T, G2)                                       # (G2, F)
    bo = params["bo"][None, :]                                               # (1, F)

    # Batch padded to a full sublane tile; padded rows are zero (finite math).
    x_p = jnp.pad(x, ((0, BP - B), (0, 0)))                                  # (BP, D)

    args = (x_p, wih1, whh1, b1, wih2, whh2, b2, wo, bo)
    vmem = pl.BlockSpec(memory_space=pltpu.MemorySpace.VMEM)

    # Time-major flat output (T*BP, F): one store + one DMA writeback inside
    # the kernel instead of T per-step masked stores.
    # TODO(synk): if batch grows (B >= ~16) on v7x, add a leading grid axis
    # over batch with dimension_semantics=("parallel",) to use the second TC.
    out_flat = pl.pallas_call(
        _decoder_kernel,
        out_shape=jax.ShapeDtypeStruct((seq_len * BP, F), jnp.float32),
        in_specs=[vmem] * len(args),
        out_specs=vmem,
        scratch_shapes=[pltpu.VMEM((seq_len * BP, G2), jnp.float32)],
    )(*args)

    # time-major (T, BP, F) -> drop batch padding -> batch_first (PyTorch).
    out = out_flat.reshape(seq_len, BP, F)[:, :B, :]
    return jnp.transpose(out, (1, 0, 2))


# ----------------------------------------------------------------------------
# Pure-JAX reference (PyTorch gate order / un-padded weights)
# ----------------------------------------------------------------------------
def decoder_reference(x, params, *, seq_len):
    def lstm(x_seq, wih, whh, bih, bhh, hid):
        B = x_seq.shape[0]
        h0 = jnp.zeros((B, hid), jnp.float32)
        c0 = jnp.zeros((B, hid), jnp.float32)

        def step(carry, x_t):
            h, c = carry
            g = x_t @ wih.T + bih + h @ whh.T + bhh
            i, f, gg, o = jnp.split(g, 4, axis=-1)
            c = jax.nn.sigmoid(f) * c + jax.nn.sigmoid(i) * jnp.tanh(gg)
            h = jax.nn.sigmoid(o) * jnp.tanh(c)
            return (h, c), h

        _, hs = jax.lax.scan(step, (h0, c0), jnp.swapaxes(x_seq, 0, 1))
        return jnp.swapaxes(hs, 0, 1)

    D = x.shape[1]
    xe = jnp.broadcast_to(x[:, None, :], (x.shape[0], seq_len, D))
    h1 = lstm(xe, params["wih1"], params["whh1"], params["bih1"], params["bhh1"], D)
    h2 = lstm(h1, params["wih2"], params["whh2"], params["bih2"], params["bhh2"], 2 * D)
    return h2 @ params["wo"].T + params["bo"]


# ----------------------------------------------------------------------------
# Deterministic parameter init (PyTorch-like uniform(-1/sqrt(h), 1/sqrt(h)))
# ----------------------------------------------------------------------------
def init_params(key, input_dim, n_features):
    hidden_dim = 2 * input_dim
    ks = jax.random.split(key, 10)

    def u(k, shape, fan):
        bound = 1.0 / jnp.sqrt(fan)
        return jax.random.uniform(k, shape, jnp.float32, -bound, bound)

    return {
        # rnn1: LSTM(input_dim -> input_dim)
        "wih1": u(ks[0], (4 * input_dim, input_dim), input_dim),
        "whh1": u(ks[1], (4 * input_dim, input_dim), input_dim),
        "bih1": u(ks[2], (4 * input_dim,), input_dim),
        "bhh1": u(ks[3], (4 * input_dim,), input_dim),
        # rnn2: LSTM(input_dim -> hidden_dim)
        "wih2": u(ks[4], (4 * hidden_dim, input_dim), hidden_dim),
        "whh2": u(ks[5], (4 * hidden_dim, hidden_dim), hidden_dim),
        "bih2": u(ks[6], (4 * hidden_dim,), hidden_dim),
        "bhh2": u(ks[7], (4 * hidden_dim,), hidden_dim),
        # output_layer: Linear(hidden_dim -> n_features)
        "wo": u(ks[8], (n_features, hidden_dim), hidden_dim),
        "bo": u(ks[9], (n_features,), hidden_dim),
    }


if __name__ == "__main__":
    batch, seq_len, input_dim, n_features = 2, 8, 32, 1

    key = jax.random.PRNGKey(0)
    pkey, xkey = jax.random.split(key)
    params = init_params(pkey, input_dim, n_features)
    x = jax.random.normal(xkey, (batch, input_dim), jnp.float32)

    out = decoder_forward(x, params, seq_len=seq_len)
    out = jax.block_until_ready(out)
    assert out.shape == (batch, seq_len, n_features), out.shape

    ref = decoder_reference(x, params, seq_len=seq_len)
    assert jnp.allclose(out, ref, atol=2e-5, rtol=2e-5), (
        float(jnp.max(jnp.abs(out - ref))))

    print("KERNEL_OK")
</pallas_src>

<mosaic_0001>
module attributes {stable_mosaic.version = 11 : i64} {
  func.func @_decoder_kernel(%arg0: memref<8x32xf32, #tpu.memory_space<vmem>>, %arg1: memref<32x512xf32, #tpu.memory_space<vmem>>, %arg2: memref<128x512xf32, #tpu.memory_space<vmem>>, %arg3: memref<1x512xf32, #tpu.memory_space<vmem>>, %arg4: memref<128x512xf32, #tpu.memory_space<vmem>>, %arg5: memref<128x512xf32, #tpu.memory_space<vmem>>, %arg6: memref<1x512xf32, #tpu.memory_space<vmem>>, %arg7: memref<128x1xf32, #tpu.memory_space<vmem>>, %arg8: memref<1x1xf32, #tpu.memory_space<vmem>>, %arg9: memref<64x1xf32, #tpu.memory_space<vmem>>, %arg10: memref<64x128xf32, #tpu.memory_space<vmem>>) attributes {dimension_semantics = [], scalar_prefetch = 0 : i64, scratch_operands = 1 : i64, tpu.core_type = #tpu.core_type<tc>} {
    %c0 = arith.constant 0 : index
    %c0_0 = arith.constant 0 : index
    %0 = vector.load %arg0[%c0, %c0_0] : memref<8x32xf32, #tpu.memory_space<vmem>>, vector<8x32xf32>
    %c0_1 = arith.constant 0 : index
    %c0_2 = arith.constant 0 : index
    %1 = vector.load %arg1[%c0_1, %c0_2] : memref<32x512xf32, #tpu.memory_space<vmem>>, vector<32x512xf32>
    %cst = arith.constant dense<0.000000e+00> : vector<8x512xf32>
    %2 = tpu.matmul %0, %1, %cst {dimension_numbers = #tpu.dot_dimension_numbers<[1], [0], [0], [1], [0, 0, 1, 1], [], []>} : vector<8x32xf32>, vector<32x512xf32>, vector<8x512xf32> -> vector<8x512xf32>
    %c0_3 = arith.constant 0 : index
    %c0_4 = arith.constant 0 : index
    %3 = vector.load %arg3[%c0_3, %c0_4] : memref<1x512xf32, #tpu.memory_space<vmem>>, vector<1x512xf32>
    %4 = vector.broadcast %3 : vector<1x512xf32> to vector<8x512xf32>
    %5 = arith.addf %2, %4 : vector<8x512xf32>
    %c0_5 = arith.constant 0 : index
    %c0_6 = arith.constant 0 : index
    %6 = vector.load %arg2[%c0_5, %c0_6] : memref<128x512xf32, #tpu.memory_space<vmem>>, vector<128x512xf32>
    %c0_7 = arith.constant 0 : index
    %c0_8 = arith.constant 0 : index
    %7 = vector.load %arg6[%c0_7, %c0_8] : memref<1x512xf32, #tpu.memory_space<vmem>>, vector<1x512xf32>
    %8 = vector.shape_cast %7 : vector<1x512xf32> to vector<1x512xf32>
    %9 = vector.broadcast %8 : vector<1x512xf32> to vector<8x512xf32>
    %cst_9 = arith.constant 0.000000e+00 : f32
    %10 = vector.broadcast %cst_9 : f32 to vector<8x128xf32>
    %cst_10 = arith.constant 0.000000e+00 : f32
    %11 = vector.broadcast %cst_10 : f32 to vector<8x128xf32>
    %cst_11 = arith.constant 0.000000e+00 : f32
    %12 = vector.broadcast %cst_11 : f32 to vector<8x128xf32>
    %cst_12 = arith.constant 0.000000e+00 : f32
    %13 = vector.broadcast %cst_12 : f32 to vector<8x128xf32>
    %c0_13 = arith.constant 0 : index
    %c0_14 = arith.constant 0 : index
    %14 = vector.load %arg5[%c0_13, %c0_14] : memref<128x512xf32, #tpu.memory_space<vmem>>, vector<128x512xf32>
    %cst_15 = arith.constant dense<0.000000e+00> : vector<8x512xf32>
    %15 = tpu.matmul %12, %14, %cst_15 {dimension_numbers = #tpu.dot_dimension_numbers<[1], [0], [0], [1], [0, 0, 1, 1], [], []>} : vector<8x128xf32>, vector<128x512xf32>, vector<8x512xf32> -> vector<8x512xf32>
    %16 = arith.addf %15, %9 : vector<8x512xf32>
    %cst_16 = arith.constant dense<0.000000e+00> : vector<8x512xf32>
    %17 = tpu.matmul %10, %6, %cst_16 {dimension_numbers = #tpu.dot_dimension_numbers<[1], [0], [0], [1], [0, 0, 1, 1], [], []>} : vector<8x128xf32>, vector<128x512xf32>, vector<8x512xf32> -> vector<8x512xf32>
    %18 = arith.addf %5, %17 : vector<8x512xf32>
    %19 = vector.extract_strided_slice %18 {offsets = [0, 0], sizes = [8, 384], strides = [1, 1]} : vector<8x512xf32> to vector<8x384xf32>
    %20 = arith.negf %19 : vector<8x384xf32>
    %21 = math.exp %20 : vector<8x384xf32>
    %cst_17 = arith.constant 1.000000e+00 : f32
    %22 = vector.broadcast %cst_17 : f32 to vector<8x384xf32>
    %23 = arith.addf %22, %21 : vector<8x384xf32>
    %24 = arith.divf %22, %23 : vector<8x384xf32>
    %25 = vector.extract_strided_slice %24 {offsets = [0, 0], sizes = [8, 128], strides = [1, 1]} : vector<8x384xf32> to vector<8x128xf32>
    %26 = vector.extract_strided_slice %24 {offsets = [0, 128], sizes = [8, 128], strides = [1, 1]} : vector<8x384xf32> to vector<8x128xf32>
    %27 = vector.extract_strided_slice %24 {offsets = [0, 256], sizes = [8, 128], strides = [1, 1]} : vector<8x384xf32> to vector<8x128xf32>
    %28 = vector.extract_strided_slice %18 {offsets = [0, 384], sizes = [8, 128], strides = [1, 1]} : vector<8x512xf32> to vector<8x128xf32>
    %29 = math.tanh %28 : vector<8x128xf32>
    %30 = arith.mulf %26, %11 : vector<8x128xf32>
    %31 = arith.mulf %25, %29 : vector<8x128xf32>
    %32 = arith.addf %30, %31 : vector<8x128xf32>
    %33 = math.tanh %32 : vector<8x128xf32>
    %34 = arith.mulf %27, %33 : vector<8x128xf32>
    %c0_18 = arith.constant 0 : index
    %c0_19 = arith.constant 0 : index
    %35 = vector.load %arg4[%c0_18, %c0_19] : memref<128x512xf32, #tpu.memory_space<vmem>>, vector<128x512xf32>
    %cst_20 = arith.constant dense<0.000000e+00> : vector<8x512xf32>
    %36 = tpu.matmul %34, %35, %cst_20 {dimension_numbers = #tpu.dot_dimension_numbers<[1], [0], [0], [1], [0, 0, 1, 1], [], []>} : vector<8x128xf32>, vector<128x512xf32>, vector<8x512xf32> -> vector<8x512xf32>
    %37 = arith.addf %16, %36 : vector<8x512xf32>
    %38 = vector.extract_strided_slice %37 {offsets = [0, 0], sizes = [8, 384], strides = [1, 1]} : vector<8x512xf32> to vector<8x384xf32>
    %39 = arith.negf %38 : vector<8x384xf32>
    %40 = math.exp %39 : vector<8x384xf32>
    %cst_21 = arith.constant 1.000000e+00 : f32
    %41 = vector.broadcast %cst_21 : f32 to vector<8x384xf32>
    %42 = arith.addf %41, %40 : vector<8x384xf32>
    %43 = arith.divf %41, %42 : vector<8x384xf32>
    %44 = vector.extract_strided_slice %43 {offsets = [0, 0], sizes = [8, 128], strides = [1, 1]} : vector<8x384xf32> to vector<8x128xf32>
    %45 = vector.extract_strided_slice %43 {offsets = [0, 128], sizes = [8, 128], strides = [1, 1]} : vector<8x384xf32> to vector<8x128xf32>
    %46 = vector.extract_strided_slice %43 {offsets = [0, 256], sizes = [8, 128], strides = [1, 1]} : vector<8x384xf32> to vector<8x128xf32>
    %47 = vector.extract_strided_slice %37 {offsets = [0, 384], sizes = [8, 128], strides = [1, 1]} : vector<8x512xf32> to vector<8x128xf32>
    %48 = math.tanh %47 : vector<8x128xf32>
    %49 = arith.mulf %45, %13 : vector<8x128xf32>
    %50 = arith.mulf %44, %48 : vector<8x128xf32>
    %51 = arith.addf %49, %50 : vector<8x128xf32>
    %52 = math.tanh %51 : vector<8x128xf32>
    %53 = arith.mulf %46, %52 : vector<8x128xf32>
    %c0_22 = arith.constant 0 : index
    %c0_23 = arith.constant 0 : index
    %54 = vector.load %arg10[%c0_22, %c0_23] : memref<64x128xf32, #tpu.memory_space<vmem>>, vector<8x128xf32>
    tpu.vector_store %arg10[%c0_22, %c0_23], %53 {strides = array<i32>} : memref<64x128xf32, #tpu.memory_space<vmem>>, vector<8x128xf32>,
    %c0_24 = arith.constant 0 : index
    %c0_25 = arith.constant 0 : index
    %55 = vector.load %arg5[%c0_24, %c0_25] : memref<128x512xf32, #tpu.memory_space<vmem>>, vector<128x512xf32>
    %cst_26 = arith.constant dense<0.000000e+00> : vector<8x512xf32>
    %56 = tpu.matmul %53, %55, %cst_26 {dimension_numbers = #tpu.dot_dimension_numbers<[1], [0], [0], [1], [0, 0, 1, 1], [], []>} : vector<8x128xf32>, vector<128x512xf32>, vector<8x512xf32> -> vector<8x512xf32>
    %57 = arith.addf %56, %9 : vector<8x512xf32>
    %cst_27 = arith.constant dense<0.000000e+00> : vector<8x512xf32>
    %58 = tpu.matmul %34, %6, %cst_27 {dimension_numbers = #tpu.dot_dimension_numbers<[1], [0], [0], [1], [0, 0, 1, 1], [], []>} : vector<8x128xf32>, vector<128x512xf32>, vector<8x512xf32> -> vector<8x512xf32>
    %59 = arith.addf %5, %58 : vector<8x512xf32>
    %60 = vector.extract_strided_slice %59 {offsets = [0, 0], sizes = [8, 384], strides = [1, 1]} : vector<8x512xf32> to vector<8x384xf32>
    %61 = arith.negf %60 : vector<8x384xf32>
    %62 = math.exp %61 : vector<8x384xf32>
    %cst_28 = arith.constant 1.000000e+00 : f32
    %63 = vector.broadcast %cst_28 : f32 to vector<8x384xf32>
    %64 = arith.addf %63, %62 : vector<8x384xf32>
    %65 = arith.divf %63, %64 : vector<8x384xf32>
    %66 = vector.extract_strided_slice %65 {offsets = [0, 0], sizes = [8, 128], strides = [1, 1]} : vector<8x384xf32> to vector<8x128xf32>
    %67 = vector.extract_strided_slice %65 {offsets = [0, 128], sizes = [8, 128], strides = [1, 1]} : vector<8x384xf32> to vector<8x128xf32>
    %68 = vector.extract_strided_slice %65 {offsets = [0, 256], sizes = [8, 128], strides = [1, 1]} : vector<8x384xf32> to vector<8x128xf32>
    %69 = vector.extract_strided_slice %59 {offsets = [0, 384], sizes = [8, 128], strides = [1, 1]} : vector<8x512xf32> to vector<8x128xf32>
    %70 = math.tanh %69 : vector<8x128xf32>
    %71 = arith.mulf %67, %32 : vector<8x128xf32>
    %72 = arith.mulf %66, %70 : vector<8x128xf32>
    %73 = arith.addf %71, %72 : vector<8x128xf32>
    %74 = math.tanh %73 : vector<8x128xf32>
    %75 = arith.mulf %68, %74 : vector<8x128xf32>
    %c0_29 = arith.constant 0 : index
    %c0_30 = arith.constant 0 : index
    %76 = vector.load %arg4[%c0_29, %c0_30] : memref<128x512xf32, #tpu.memory_space<vmem>>, vector<128x512xf32>
    %cst_31 = arith.constant dense<0.000000e+00> : vector<8x512xf32>
    %77 = tpu.matmul %75, %76, %cst_31 {dimension_numbers = #tpu.dot_dimension_numbers<[1], [0], [0], [1], [0, 0, 1, 1], [], []>} : vector<8x128xf32>, vector<128x512xf32>, vector<8x512xf32> -> vector<8x512xf32>
    %78 = arith.addf %57, %77 : vector<8x512xf32>
    %79 = vector.extract_strided_slice %78 {offsets = [0, 0], sizes = [8, 384], strides = [1, 1]} : vector<8x512xf32> to vector<8x384xf32>
    %80 = arith.negf %79 : vector<8x384xf32>
    %81 = math.exp %80 : vector<8x384xf32>
    %cst_32 = arith.constant 1.000000e+00 : f32
    %82 = vector.broadcast %cst_32 : f32 to vector<8x384xf32>
    %83 = arith.addf %82, %81 : vector<8x384xf32>
    %84 = arith.divf %82, %83 : vector<8x384xf32>
    %85 = vector.extract_strided_slice %84 {offsets = [0, 0], sizes = [8, 128], strides = [1, 1]} : vector<8x384xf32> to vector<8x128xf32>
    %86 = vector.extract_strided_slice %84 {offsets = [0, 128], sizes = [8, 128], strides = [1, 1]} : vector<8x384xf32> to vector<8x128xf32>
    %87 = vector.extract_strided_slice %84 {offsets = [0, 256], sizes = [8, 128], strides = [1, 1]} : vector<8x384xf32> to vector<8x128xf32>
    %88 = vector.extract_strided_slice %78 {offsets = [0, 384], sizes = [8, 128], strides = [1, 1]} : vector<8x512xf32> to vector<8x128xf32>
    %89 = math.tanh %88 : vector<8x128xf32>
    %90 = arith.mulf %86, %51 : vector<8x128xf32>
    %91 = arith.mulf %85, %89 : vector<8x128xf32>
    %92 = arith.addf %90, %91 : vector<8x128xf32>
    %93 = math.tanh %92 : vector<8x128xf32>
    %94 = arith.mulf %87, %93 : vector<8x128xf32>
    %c8 = arith.constant 8 : index
    %c0_33 = arith.constant 0 : index
    %95 = vector.load %arg10[%c8, %c0_33] : memref<64x128xf32, #tpu.memory_space<vmem>>, vector<8x128xf32>
    tpu.vector_store %arg10[%c8, %c0_33], %94 {strides = array<i32>} : memref<64x128xf32, #tpu.memory_space<vmem>>, vector<8x128xf32>,
    %c0_34 = arith.constant 0 : index
    %c0_35 = arith.constant 0 : index
    %96 = vector.load %arg5[%c0_34, %c0_35] : memref<128x512xf32, #tpu.memory_space<vmem>>, vector<128x512xf32>
    %cst_36 = arith.constant dense<0.000000e+00> : vector<8x512xf32>
    %97 = tpu.matmul %94, %96, %cst_36 {dimension_numbers = #tpu.dot_dimension_numbers<[1], [0], [0], [1], [0, 0, 1, 1], [], []>} : vector<8x128xf32>, vector<128x512xf32>, vector<8x512xf32> -> vector<8x512xf32>
    %98 = arith.addf %97, %9 : vector<8x512xf32>
    %cst_37 = arith.constant dense<0.000000e+00> : vector<8x512xf32>
    %99 = tpu.matmul %75, %6, %cst_37 {dimension_numbers = #tpu.dot_dimension_numbers<[1], [0], [0], [1], [0, 0, 1, 1], [], []>} : vector<8x128xf32>, vector<128x512xf32>, vector<8x512xf32> -> vector<8x512xf32>
    %100 = arith.addf %5, %99 : vector<8x512xf32>
    %101 = vector.extract_strided_slice %100 {offsets = [0, 0], sizes = [8, 384], strides = [1, 1]} : vector<8x512xf32> to vector<8x384xf32>
    %102 = arith.negf %101 : vector<8x384xf32>
    %103 = math.exp %102 : vector<8x384xf32>
    %cst_38 = arith.constant 1.000000e+00 : f32
    %104 = vector.broadcast %cst_38 : f32 to vector<8x384xf32>
    %105 = arith.addf %104, %103 : vector<8x384xf32>
    %106 = arith.divf %104, %105 : vector<8x384xf32>
    %107 = vector.extract_strided_slice %106 {offsets = [0, 0], sizes = [8, 128], strides = [1, 1]} : vector<8x384xf32> to vector<8x128xf32>
    %108 = vector.extract_strided_slice %106 {offsets = [0, 128], sizes = [8, 128], strides = [1, 1]} : vector<8x384xf32> to vector<8x128xf32>
    %109 = vector.extract_strided_slice %106 {offsets = [0, 256], sizes = [8, 128], strides = [1, 1]} : vector<8x384xf32> to vector<8x128xf32>
    %110 = vector.extract_strided_slice %100 {offsets = [0, 384], sizes = [8, 128], strides = [1, 1]} : vector<8x512xf32> to vector<8x128xf32>
    %111 = math.tanh %110 : vector<8x128xf32>
    %112 = arith.mulf %108, %73 : vector<8x128xf32>
    %113 = arith.mulf %107, %111 : vector<8x128xf32>
    %114 = arith.addf %112, %113 : vector<8x128xf32>
    %115 = math.tanh %114 : vector<8x128xf32>
    %116 = arith.mulf %109, %115 : vector<8x128xf32>
    %c0_39 = arith.constant 0 : index
    %c0_40 = arith.constant 0 : index
    %117 = vector.load %arg4[%c0_39, %c0_40] : memref<128x512xf32, #tpu.memory_space<vmem>>, vector<128x512xf32>
    %cst_41 = arith.constant dense<0.000000e+00> : vector<8x512xf32>
    %118 = tpu.matmul %116, %117, %cst_41 {dimension_numbers = #tpu.dot_dimension_numbers<[1], [0], [0], [1], [0, 0, 1, 1], [], []>} : vector<8x128xf32>, vector<128x512xf32>, vector<8x512xf32> -> vector<8x512xf32>
    %119 = arith.addf %98, %118 : vector<8x512xf32>
    %120 = vector.extract_strided_slice %119 {offsets = [0, 0], sizes = [8, 384], strides = [1, 1]} : vector<8x512xf32> to vector<8x384xf32>
    %121 = arith.negf %120 : vector<8x384xf32>
    %122 = math.exp %121 : vector<8x384xf32>
    %cst_42 = arith.constant 1.000000e+00 : f32
    %123 = vector.broadcast %cst_42 : f32 to vector<8x384xf32>
    %124 = arith.addf %123, %122 : vector<8x384xf32>
    %125 = arith.divf %123, %124 : vector<8x384xf32>
    %126 = vector.extract_strided_slice %125 {offsets = [0, 0], sizes = [8, 128], strides = [1, 1]} : vector<8x384xf32> to vector<8x128xf32>
    %127 = vector.extract_strided_slice %125 {offsets = [0, 128], sizes = [8, 128], strides = [1, 1]} : vector<8x384xf32> to vector<8x128xf32>
    %128 = vector.extract_strided_slice %125 {offsets = [0, 256], sizes = [8, 128], strides = [1, 1]} : vector<8x384xf32> to vector<8x128xf32>
    %129 = vector.extract_strided_slice %119 {offsets = [0, 384], sizes = [8, 128], strides = [1, 1]} : vector<8x512xf32> to vector<8x128xf32>
    %130 = math.tanh %129 : vector<8x128xf32>
    %131 = arith.mulf %127, %92 : vector<8x128xf32>
    %132 = arith.mulf %126, %130 : vector<8x128xf32>
    %133 = arith.addf %131, %132 : vector<8x128xf32>
    %134 = math.tanh %133 : vector<8x128xf32>
    %135 = arith.mulf %128, %134 : vector<8x128xf32>
    %c16 = arith.constant 16 : index
    %c0_43 = arith.constant 0 : index
    %136 = vector.load %arg10[%c16, %c0_43] : memref<64x128xf32, #tpu.memory_space<vmem>>, vector<8x128xf32>
    tpu.vector_store %arg10[%c16, %c0_43], %135 {strides = array<i32>} : memref<64x128xf32, #tpu.memory_space<vmem>>, vector<8x128xf32>,
    %c0_44 = arith.constant 0 : index
    %c0_45 = arith.constant 0 : index
    %137 = vector.load %arg5[%c0_44, %c0_45] : memref<128x512xf32, #tpu.memory_space<vmem>>, vector<128x512xf32>
    %cst_46 = arith.constant dense<0.000000e+00> : vector<8x512xf32>
    %138 = tpu.matmul %135, %137, %cst_46 {dimension_numbers = #tpu.dot_dimension_numbers<[1], [0], [0], [1], [0, 0, 1, 1], [], []>} : vector<8x128xf32>, vector<128x512xf32>, vector<8x512xf32> -> vector<8x512xf32>
    %139 = arith.addf %138, %9 : vector<8x512xf32>
    %cst_47 = arith.constant dense<0.000000e+00> : vector<8x512xf32>
    %140 = tpu.matmul %116, %6, %cst_47 {dimension_numbers = #tpu.dot_dimension_numbers<[1], [0], [0], [1], [0, 0, 1, 1], [], []>} : vector<8x128xf32>, vector<128x512xf32>, vector<8x512xf32> -> vector<8x512xf32>
    %141 = arith.addf %5, %140 : vector<8x512xf32>
    %142 = vector.extract_strided_slice %141 {offsets = [0, 0], sizes = [8, 384], strides = [1, 1]} : vector<8x512xf32> to vector<8x384xf32>
    %143 = arith.negf %142 : vector<8x384xf32>
    %144 = math.exp %143 : vector<8x384xf32>
    %cst_48 = arith.constant 1.000000e+00 : f32
    %145 = vector.broadcast %cst_48 : f32 to vector<8x384xf32>
    %146 = arith.addf %145, %144 : vector<8x384xf32>
    %147 = arith.divf %145, %146 : vector<8x384xf32>
    %148 = vector.extract_strided_slice %147 {offsets = [0, 0], sizes = [8, 128], strides = [1, 1]} : vector<8x384xf32> to vector<8x128xf32>
    %149 = vector.extract_strided_slice %147 {offsets = [0, 128], sizes = [8, 128], strides = [1, 1]} : vector<8x384xf32> to vector<8x128xf32>
    %150 = vector.extract_strided_slice %147 {offsets = [0, 256], sizes = [8, 128], strides = [1, 1]} : vector<8x384xf32> to vector<8x128xf32>
    %151 = vector.extract_strided_slice %141 {offsets = [0, 384], sizes = [8, 128], strides = [1, 1]} : vector<8x512xf32> to vector<8x128xf32>
    %152 = math.tanh %151 : vector<8x128xf32>
    %153 = arith.mulf %149, %114 : vector<8x128xf32>
    %154 = arith.mulf %148, %152 : vector<8x128xf32>
    %155 = arith.addf %153, %154 : vector<8x128xf32>
    %156 = math.tanh %155 : vector<8x128xf32>
    %157 = arith.mulf %150, %156 : vector<8x128xf32>
    %c0_49 = arith.constant 0 : index
    %c0_50 = arith.constant 0 : index
    %158 = vector.load %arg4[%c0_49, %c0_50] : memref<128x512xf32, #tpu.memory_space<vmem>>, vector<128x512xf32>
    %cst_51 = arith.constant dense<0.000000e+00> : vector<8x512xf32>
    %159 = tpu.matmul %157, %158, %cst_51 {dimension_numbers = #tpu.dot_dimension_numbers<[1], [0], [0], [1], [0, 0, 1, 1], [], []>} : vector<8x128xf32>, vector<128x512xf32>, vector<8x512xf32> -> vector<8x512xf32>
    %160 = arith.addf %139, %159 : vector<8x512xf32>
    %161 = vector.extract_strided_slice %160 {offsets = [0, 0], sizes = [8, 384], strides = [1, 1]} : vector<8x512xf32> to vector<8x384xf32>
    %162 = arith.negf %161 : vector<8x384xf32>
    %163 = math.exp %162 : vector<8x384xf32>
    %cst_52 = arith.constant 1.000000e+00 : f32
    %164 = vector.broadcast %cst_52 : f32 to vector<8x384xf32>
    %165 = arith.addf %164, %163 : vector<8x384xf32>
    %166 = arith.divf %164, %165 : vector<8x384xf32>
    %167 = vector.extract_strided_slice %166 {offsets = [0, 0], sizes = [8, 128], strides = [1, 1]} : vector<8x384xf32> to vector<8x128xf32>
    %168 = vector.extract_strided_slice %166 {offsets = [0, 128], sizes = [8, 128], strides = [1, 1]} : vector<8x384xf32> to vector<8x128xf32>
    %169 = vector.extract_strided_slice %166 {offsets = [0, 256], sizes = [8, 128], strides = [1, 1]} : vector<8x384xf32> to vector<8x128xf32>
    %170 = vector.extract_strided_slice %160 {offsets = [0, 384], sizes = [8, 128], strides = [1, 1]} : vector<8x512xf32> to vector<8x128xf32>
    %171 = math.tanh %170 : vector<8x128xf32>
    %172 = arith.mulf %168, %133 : vector<8x128xf32>
    %173 = arith.mulf %167, %171 : vector<8x128xf32>
    %174 = arith.addf %172, %173 : vector<8x128xf32>
    %175 = math.tanh %174 : vector<8x128xf32>
    %176 = arith.mulf %169, %175 : vector<8x128xf32>
    %c24 = arith.constant 24 : index
    %c0_53 = arith.constant 0 : index
    %177 = vector.load %arg10[%c24, %c0_53] : memref<64x128xf32, #tpu.memory_space<vmem>>, vector<8x128xf32>
    tpu.vector_store %arg10[%c24, %c0_53], %176 {strides = array<i32>} : memref<64x128xf32, #tpu.memory_space<vmem>>, vector<8x128xf32>,
    %c0_54 = arith.constant 0 : index
    %c0_55 = arith.constant 0 : index
    %178 = vector.load %arg5[%c0_54, %c0_55] : memref<128x512xf32, #tpu.memory_space<vmem>>, vector<128x512xf32>
    %cst_56 = arith.constant dense<0.000000e+00> : vector<8x512xf32>
    %179 = tpu.matmul %176, %178, %cst_56 {dimension_numbers = #tpu.dot_dimension_numbers<[1], [0], [0], [1], [0, 0, 1, 1], [], []>} : vector<8x128xf32>, vector<128x512xf32>, vector<8x512xf32> -> vector<8x512xf32>
    %180 = arith.addf %179, %9 : vector<8x512xf32>
    %cst_57 = arith.constant dense<0.000000e+00> : vector<8x512xf32>
    %181 = tpu.matmul %157, %6, %cst_57 {dimension_numbers = #tpu.dot_dimension_numbers<[1], [0], [0], [1], [0, 0, 1, 1], [], []>} : vector<8x128xf32>, vector<128x512xf32>, vector<8x512xf32> -> vector<8x512xf32>
    %182 = arith.addf %5, %181 : vector<8x512xf32>
    %183 = vector.extract_strided_slice %182 {offsets = [0, 0], sizes = [8, 384], strides = [1, 1]} : vector<8x512xf32> to vector<8x384xf32>
    %184 = arith.negf %183 : vector<8x384xf32>
    %185 = math.exp %184 : vector<8x384xf32>
    %cst_58 = arith.constant 1.000000e+00 : f32
    %186 = vector.broadcast %cst_58 : f32 to vector<8x384xf32>
    %187 = arith.addf %186, %185 : vector<8x384xf32>
    %188 = arith.divf %186, %187 : vector<8x384xf32>
    %189 = vector.extract_strided_slice %188 {offsets = [0, 0], sizes = [8, 128], strides = [1, 1]} : vector<8x384xf32> to vector<8x128xf32>
    %190 = vector.extract_strided_slice %188 {offsets = [0, 128], sizes = [8, 128], strides = [1, 1]} : vector<8x384xf32> to vector<8x128xf32>
    %191 = vector.extract_strided_slice %188 {offsets = [0, 256], sizes = [8, 128], strides = [1, 1]} : vector<8x384xf32> to vector<8x128xf32>
    %192 = vector.extract_strided_slice %182 {offsets = [0, 384], sizes = [8, 128], strides = [1, 1]} : vector<8x512xf32> to vector<8x128xf32>
    %193 = math.tanh %192 : vector<8x128xf32>
    %194 = arith.mulf %190, %155 : vector<8x128xf32>
    %195 = arith.mulf %189, %193 : vector<8x128xf32>
    %196 = arith.addf %194, %195 : vector<8x128xf32>
    %197 = math.tanh %196 : vector<8x128xf32>
    %198 = arith.mulf %191, %197 : vector<8x128xf32>
    %c0_59 = arith.constant 0 : index
    %c0_60 = arith.constant 0 : index
    %199 = vector.load %arg4[%c0_59, %c0_60] : memref<128x512xf32, #tpu.memory_space<vmem>>, vector<128x512xf32>
    %cst_61 = arith.constant dense<0.000000e+00> : vector<8x512xf32>
    %200 = tpu.matmul %198, %199, %cst_61 {dimension_numbers = #tpu.dot_dimension_numbers<[1], [0], [0], [1], [0, 0, 1, 1], [], []>} : vector<8x128xf32>, vector<128x512xf32>, vector<8x512xf32> -> vector<8x512xf32>
    %201 = arith.addf %180, %200 : vector<8x512xf32>
    %202 = vector.extract_strided_slice %201 {offsets = [0, 0], sizes = [8, 384], strides = [1, 1]} : vector<8x512xf32> to vector<8x384xf32>
    %203 = arith.negf %202 : vector<8x384xf32>
    %204 = math.exp %203 : vector<8x384xf32>
    %cst_62 = arith.constant 1.000000e+00 : f32
    %205 = vector.broadcast %cst_62 : f32 to vector<8x384xf32>
    %206 = arith.addf %205, %204 : vector<8x384xf32>
    %207 = arith.divf %205, %206 : vector<8x384xf32>
    %208 = vector.extract_strided_slice %207 {offsets = [0, 0], sizes = [8, 128], strides = [1, 1]} : vector<8x384xf32> to vector<8x128xf32>
    %209 = vector.extract_strided_slice %207 {offsets = [0, 128], sizes = [8, 128], strides = [1, 1]} : vector<8x384xf32> to vector<8x128xf32>
    %210 = vector.extract_strided_slice %207 {offsets = [0, 256], sizes = [8, 128], strides = [1, 1]} : vector<8x384xf32> to vector<8x128xf32>
    %211 = vector.extract_strided_slice %201 {offsets = [0, 384], sizes = [8, 128], strides = [1, 1]} : vector<8x512xf32> to vector<8x128xf32>
    %212 = math.tanh %211 : vector<8x128xf32>
    %213 = arith.mulf %209, %174 : vector<8x128xf32>
    %214 = arith.mulf %208, %212 : vector<8x128xf32>
    %215 = arith.addf %213, %214 : vector<8x128xf32>
    %216 = math.tanh %215 : vector<8x128xf32>
    %217 = arith.mulf %210, %216 : vector<8x128xf32>
    %c32 = arith.constant 32 : index
    %c0_63 = arith.constant 0 : index
    %218 = vector.load %arg10[%c32, %c0_63] : memref<64x128xf32, #tpu.memory_space<vmem>>, vector<8x128xf32>
    tpu.vector_store %arg10[%c32, %c0_63], %217 {strides = array<i32>} : memref<64x128xf32, #tpu.memory_space<vmem>>, vector<8x128xf32>,
    %c0_64 = arith.constant 0 : index
    %c0_65 = arith.constant 0 : index
    %219 = vector.load %arg5[%c0_64, %c0_65] : memref<128x512xf32, #tpu.memory_space<vmem>>, vector<128x512xf32>
    %cst_66 = arith.constant dense<0.000000e+00> : vector<8x512xf32>
    %220 = tpu.matmul %217, %219, %cst_66 {dimension_numbers = #tpu.dot_dimension_numbers<[1], [0], [0], [1], [0, 0, 1, 1], [], []>} : vector<8x128xf32>, vector<128x512xf32>, vector<8x512xf32> -> vector<8x512xf32>
    %221 = arith.addf %220, %9 : vector<8x512xf32>
    %cst_67 = arith.constant dense<0.000000e+00> : vector<8x512xf32>
    %222 = tpu.matmul %198, %6, %cst_67 {dimension_numbers = #tpu.dot_dimension_numbers<[1], [0], [0], [1], [0, 0, 1, 1], [], []>} : vector<8x128xf32>, vector<128x512xf32>, vector<8x512xf32> -> vector<8x512xf32>
    %223 = arith.addf %5, %222 : vector<8x512xf32>
    %224 = vector.extract_strided_slice %223 {offsets = [0, 0], sizes = [8, 384], strides = [1, 1]} : vector<8x512xf32> to vector<8x384xf32>
    %225 = arith.negf %224 : vector<8x384xf32>
    %226 = math.exp %225 : vector<8x384xf32>
    %cst_68 = arith.constant 1.000000e+00 : f32
    %227 = vector.broadcast %cst_68 : f32 to vector<8x384xf32>
    %228 = arith.addf %227, %226 : vector<8x384xf32>
    %229 = arith.divf %227, %228 : vector<8x384xf32>
    %230 = vector.extract_strided_slice %229 {offsets = [0, 0], sizes = [8, 128], strides = [1, 1]} : vector<8x384xf32> to vector<8x128xf32>
    %231 = vector.extract_strided_slice %229 {offsets = [0, 128], sizes = [8, 128], strides = [1, 1]} : vector<8x384xf32> to vector<8x128xf32>
    %232 = vector.extract_strided_slice %229 {offsets = [0, 256], sizes = [8, 128], strides = [1, 1]} : vector<8x384xf32> to vector<8x128xf32>
    %233 = vector.extract_strided_slice %223 {offsets = [0, 384], sizes = [8, 128], strides = [1, 1]} : vector<8x512xf32> to vector<8x128xf32>
    %234 = math.tanh %233 : vector<8x128xf32>
    %235 = arith.mulf %231, %196 : vector<8x128xf32>
    %236 = arith.mulf %230, %234 : vector<8x128xf32>
    %237 = arith.addf %235, %236 : vector<8x128xf32>
    %238 = math.tanh %237 : vector<8x128xf32>
    %239 = arith.mulf %232, %238 : vector<8x128xf32>
    %c0_69 = arith.constant 0 : index
    %c0_70 = arith.constant 0 : index
    %240 = vector.load %arg4[%c0_69, %c0_70] : memref<128x512xf32, #tpu.memory_space<vmem>>, vector<128x512xf32>
    %cst_71 = arith.constant dense<0.000000e+00> : vector<8x512xf32>
    %241 = tpu.matmul %239, %240, %cst_71 {dimension_numbers = #tpu.dot_dimension_numbers<[1], [0], [0], [1], [0, 0, 1, 1], [], []>} : vector<8x128xf32>, vector<128x512xf32>, vector<8x512xf32> -> vector<8x512xf32>
    %242 = arith.addf %221, %241 : vector<8x512xf32>
    %243 = vector.extract_strided_slice %242 {offsets = [0, 0], sizes = [8, 384], strides = [1, 1]} : vector<8x512xf32> to vector<8x384xf32>
    %244 = arith.negf %243 : vector<8x384xf32>
    %245 = math.exp %244 : vector<8x384xf32>
    %cst_72 = arith.constant 1.000000e+00 : f32
    %246 = vector.broadcast %cst_72 : f32 to vector<8x384xf32>
    %247 = arith.addf %246, %245 : vector<8x384xf32>
    %248 = arith.divf %246, %247 : vector<8x384xf32>
    %249 = vector.extract_strided_slice %248 {offsets = [0, 0], sizes = [8, 128], strides = [1, 1]} : vector<8x384xf32> to vector<8x128xf32>
    %250 = vector.extract_strided_slice %248 {offsets = [0, 128], sizes = [8, 128], strides = [1, 1]} : vector<8x384xf32> to vector<8x128xf32>
    %251 = vector.extract_strided_slice %248 {offsets = [0, 256], sizes = [8, 128], strides = [1, 1]} : vector<8x384xf32> to vector<8x128xf32>
    %252 = vector.extract_strided_slice %242 {offsets = [0, 384], sizes = [8, 128], strides = [1, 1]} : vector<8x512xf32> to vector<8x128xf32>
    %253 = math.tanh %252 : vector<8x128xf32>
    %254 = arith.mulf %250, %215 : vector<8x128xf32>
    %255 = arith.mulf %249, %253 : vector<8x128xf32>
    %256 = arith.addf %254, %255 : vector<8x128xf32>
    %257 = math.tanh %256 : vector<8x128xf32>
    %258 = arith.mulf %251, %257 : vector<8x128xf32>
    %c40 = arith.constant 40 : index
    %c0_73 = arith.constant 0 : index
    %259 = vector.load %arg10[%c40, %c0_73] : memref<64x128xf32, #tpu.memory_space<vmem>>, vector<8x128xf32>
    tpu.vector_store %arg10[%c40, %c0_73], %258 {strides = array<i32>} : memref<64x128xf32, #tpu.memory_space<vmem>>, vector<8x128xf32>,
    %c0_74 = arith.constant 0 : index
    %c0_75 = arith.constant 0 : index
    %260 = vector.load %arg5[%c0_74, %c0_75] : memref<128x512xf32, #tpu.memory_space<vmem>>, vector<128x512xf32>
    %cst_76 = arith.constant dense<0.000000e+00> : vector<8x512xf32>
    %261 = tpu.matmul %258, %260, %cst_76 {dimension_numbers = #tpu.dot_dimension_numbers<[1], [0], [0], [1], [0, 0, 1, 1], [], []>} : vector<8x128xf32>, vector<128x512xf32>, vector<8x512xf32> -> vector<8x512xf32>
    %262 = arith.addf %261, %9 : vector<8x512xf32>
    %cst_77 = arith.constant dense<0.000000e+00> : vector<8x512xf32>
    %263 = tpu.matmul %239, %6, %cst_77 {dimension_numbers = #tpu.dot_dimension_numbers<[1], [0], [0], [1], [0, 0, 1, 1], [], []>} : vector<8x128xf32>, vector<128x512xf32>, vector<8x512xf32> -> vector<8x512xf32>
    %264 = arith.addf %5, %263 : vector<8x512xf32>
    %265 = vector.extract_strided_slice %264 {offsets = [0, 0], sizes = [8, 384], strides = [1, 1]} : vector<8x512xf32> to vector<8x384xf32>
    %266 = arith.negf %265 : vector<8x384xf32>
    %267 = math.exp %266 : vector<8x384xf32>
    %cst_78 = arith.constant 1.000000e+00 : f32
    %268 = vector.broadcast %cst_78 : f32 to vector<8x384xf32>
    %269 = arith.addf %268, %267 : vector<8x384xf32>
    %270 = arith.divf %268, %269 : vector<8x384xf32>
    %271 = vector.extract_strided_slice %270 {offsets = [0, 0], sizes = [8, 128], strides = [1, 1]} : vector<8x384xf32> to vector<8x128xf32>
    %272 = vector.extract_strided_slice %270 {offsets = [0, 128], sizes = [8, 128], strides = [1, 1]} : vector<8x384xf32> to vector<8x128xf32>
    %273 = vector.extract_strided_slice %270 {offsets = [0, 256], sizes = [8, 128], strides = [1, 1]} : vector<8x384xf32> to vector<8x128xf32>
    %274 = vector.extract_strided_slice %264 {offsets = [0, 384], sizes = [8, 128], strides = [1, 1]} : vector<8x512xf32> to vector<8x128xf32>
    %275 = math.tanh %274 : vector<8x128xf32>
    %276 = arith.mulf %272, %237 : vector<8x128xf32>
    %277 = arith.mulf %271, %275 : vector<8x128xf32>
    %278 = arith.addf %276, %277 : vector<8x128xf32>
    %279 = math.tanh %278 : vector<8x128xf32>
    %280 = arith.mulf %273, %279 : vector<8x128xf32>
    %c0_79 = arith.constant 0 : index
    %c0_80 = arith.constant 0 : index
    %281 = vector.load %arg4[%c0_79, %c0_80] : memref<128x512xf32, #tpu.memory_space<vmem>>, vector<128x512xf32>
    %cst_81 = arith.constant dense<0.000000e+00> : vector<8x512xf32>
    %282 = tpu.matmul %280, %281, %cst_81 {dimension_numbers = #tpu.dot_dimension_numbers<[1], [0], [0], [1], [0, 0, 1, 1], [], []>} : vector<8x128xf32>, vector<128x512xf32>, vector<8x512xf32> -> vector<8x512xf32>
    %283 = arith.addf %262, %282 : vector<8x512xf32>
    %284 = vector.extract_strided_slice %283 {offsets = [0, 0], sizes = [8, 384], strides = [1, 1]} : vector<8x512xf32> to vector<8x384xf32>
    %285 = arith.negf %284 : vector<8x384xf32>
    %286 = math.exp %285 : vector<8x384xf32>
    %cst_82 = arith.constant 1.000000e+00 : f32
    %287 = vector.broadcast %cst_82 : f32 to vector<8x384xf32>
    %288 = arith.addf %287, %286 : vector<8x384xf32>
    %289 = arith.divf %287, %288 : vector<8x384xf32>
    %290 = vector.extract_strided_slice %289 {offsets = [0, 0], sizes = [8, 128], strides = [1, 1]} : vector<8x384xf32> to vector<8x128xf32>
    %291 = vector.extract_strided_slice %289 {offsets = [0, 128], sizes = [8, 128], strides = [1, 1]} : vector<8x384xf32> to vector<8x128xf32>
    %292 = vector.extract_strided_slice %289 {offsets = [0, 256], sizes = [8, 128], strides = [1, 1]} : vector<8x384xf32> to vector<8x128xf32>
    %293 = vector.extract_strided_slice %283 {offsets = [0, 384], sizes = [8, 128], strides = [1, 1]} : vector<8x512xf32> to vector<8x128xf32>
    %294 = math.tanh %293 : vector<8x128xf32>
    %295 = arith.mulf %291, %256 : vector<8x128xf32>
    %296 = arith.mulf %290, %294 : vector<8x128xf32>
    %297 = arith.addf %295, %296 : vector<8x128xf32>
    %298 = math.tanh %297 : vector<8x128xf32>
    %299 = arith.mulf %292, %298 : vector<8x128xf32>
    %c48 = arith.constant 48 : index
    %c0_83 = arith.constant 0 : index
    %300 = vector.load %arg10[%c48, %c0_83] : memref<64x128xf32, #tpu.memory_space<vmem>>, vector<8x128xf32>
    tpu.vector_store %arg10[%c48, %c0_83], %299 {strides = array<i32>} : memref<64x128xf32, #tpu.memory_space<vmem>>, vector<8x128xf32>,
    %c0_84 = arith.constant 0 : index
    %c0_85 = arith.constant 0 : index
    %301 = vector.load %arg5[%c0_84, %c0_85] : memref<128x512xf32, #tpu.memory_space<vmem>>, vector<128x512xf32>
    %cst_86 = arith.constant dense<0.000000e+00> : vector<8x512xf32>
    %302 = tpu.matmul %299, %301, %cst_86 {dimension_numbers = #tpu.dot_dimension_numbers<[1], [0], [0], [1], [0, 0, 1, 1], [], []>} : vector<8x128xf32>, vector<128x512xf32>, vector<8x512xf32> -> vector<8x512xf32>
    %303 = arith.addf %302, %9 : vector<8x512xf32>
    %cst_87 = arith.constant dense<0.000000e+00> : vector<8x512xf32>
    %304 = tpu.matmul %280, %6, %cst_87 {dimension_numbers = #tpu.dot_dimension_numbers<[1], [0], [0], [1], [0, 0, 1, 1], [], []>} : vector<8x128xf32>, vector<128x512xf32>, vector<8x512xf32> -> vector<8x512xf32>
    %305 = arith.addf %5, %304 : vector<8x512xf32>
    %306 = vector.extract_strided_slice %305 {offsets = [0, 0], sizes = [8, 384], strides = [1, 1]} : vector<8x512xf32> to vector<8x384xf32>
    %307 = arith.negf %306 : vector<8x384xf32>
    %308 = math.exp %307 : vector<8x384xf32>
    %cst_88 = arith.constant 1.000000e+00 : f32
    %309 = vector.broadcast %cst_88 : f32 to vector<8x384xf32>
    %310 = arith.addf %309, %308 : vector<8x384xf32>
    %311 = arith.divf %309, %310 : vector<8x384xf32>
    %312 = vector.extract_strided_slice %311 {offsets = [0, 0], sizes = [8, 128], strides = [1, 1]} : vector<8x384xf32> to vector<8x128xf32>
    %313 = vector.extract_strided_slice %311 {offsets = [0, 128], sizes = [8, 128], strides = [1, 1]} : vector<8x384xf32> to vector<8x128xf32>
    %314 = vector.extract_strided_slice %311 {offsets = [0, 256], sizes = [8, 128], strides = [1, 1]} : vector<8x384xf32> to vector<8x128xf32>
    %315 = vector.extract_strided_slice %305 {offsets = [0, 384], sizes = [8, 128], strides = [1, 1]} : vector<8x512xf32> to vector<8x128xf32>
    %316 = math.tanh %315 : vector<8x128xf32>
    %317 = arith.mulf %313, %278 : vector<8x128xf32>
    %318 = arith.mulf %312, %316 : vector<8x128xf32>
    %319 = arith.addf %317, %318 : vector<8x128xf32>
    %320 = math.tanh %319 : vector<8x128xf32>
    %321 = arith.mulf %314, %320 : vector<8x128xf32>
    %c0_89 = arith.constant 0 : index
    %c0_90 = arith.constant 0 : index
    %322 = vector.load %arg4[%c0_89, %c0_90] : memref<128x512xf32, #tpu.memory_space<vmem>>, vector<128x512xf32>
    %cst_91 = arith.constant dense<0.000000e+00> : vector<8x512xf32>
    %323 = tpu.matmul %321, %322, %cst_91 {dimension_numbers = #tpu.dot_dimension_numbers<[1], [0], [0], [1], [0, 0, 1, 1], [], []>} : vector<8x128xf32>, vector<128x512xf32>, vector<8x512xf32> -> vector<8x512xf32>
    %324 = arith.addf %303, %323 : vector<8x512xf32>
    %325 = vector.extract_strided_slice %324 {offsets = [0, 0], sizes = [8, 384], strides = [1, 1]} : vector<8x512xf32> to vector<8x384xf32>
    %326 = arith.negf %325 : vector<8x384xf32>
    %327 = math.exp %326 : vector<8x384xf32>
    %cst_92 = arith.constant 1.000000e+00 : f32
    %328 = vector.broadcast %cst_92 : f32 to vector<8x384xf32>
    %329 = arith.addf %328, %327 : vector<8x384xf32>
    %330 = arith.divf %328, %329 : vector<8x384xf32>
    %331 = vector.extract_strided_slice %330 {offsets = [0, 0], sizes = [8, 128], strides = [1, 1]} : vector<8x384xf32> to vector<8x128xf32>
    %332 = vector.extract_strided_slice %330 {offsets = [0, 128], sizes = [8, 128], strides = [1, 1]} : vector<8x384xf32> to vector<8x128xf32>
    %333 = vector.extract_strided_slice %330 {offsets = [0, 256], sizes = [8, 128], strides = [1, 1]} : vector<8x384xf32> to vector<8x128xf32>
    %334 = vector.extract_strided_slice %324 {offsets = [0, 384], sizes = [8, 128], strides = [1, 1]} : vector<8x512xf32> to vector<8x128xf32>
    %335 = math.tanh %334 : vector<8x128xf32>
    %336 = arith.mulf %332, %297 : vector<8x128xf32>
    %337 = arith.mulf %331, %335 : vector<8x128xf32>
    %338 = arith.addf %336, %337 : vector<8x128xf32>
    %339 = math.tanh %338 : vector<8x128xf32>
    %340 = arith.mulf %333, %339 : vector<8x128xf32>
    %c56 = arith.constant 56 : index
    %c0_93 = arith.constant 0 : index
    %341 = vector.load %arg10[%c56, %c0_93] : memref<64x128xf32, #tpu.memory_space<vmem>>, vector<8x128xf32>
    tpu.vector_store %arg10[%c56, %c0_93], %340 {strides = array<i32>} : memref<64x128xf32, #tpu.memory_space<vmem>>, vector<8x128xf32>,
    %c0_94 = arith.constant 0 : index
    %c0_95 = arith.constant 0 : index
    %342 = vector.load %arg10[%c0_94, %c0_95] : memref<64x128xf32, #tpu.memory_space<vmem>>, vector<64x128xf32>
    %c0_96 = arith.constant 0 : index
    %c0_97 = arith.constant 0 : index
    %343 = vector.load %arg7[%c0_96, %c0_97] : memref<128x1xf32, #tpu.memory_space<vmem>>, vector<128x1xf32>
    %cst_98 = arith.constant dense<0.000000e+00> : vector<64x1xf32>
    %344 = tpu.matmul %342, %343, %cst_98 {dimension_numbers = #tpu.dot_dimension_numbers<[1], [0], [0], [1], [0, 0, 1, 1], [], []>} : vector<64x128xf32>, vector<128x1xf32>, vector<64x1xf32> -> vector<64x1xf32>
    %c0_99 = arith.constant 0 : index
    %c0_100 = arith.constant 0 : index
    %345 = vector.load %arg8[%c0_99, %c0_100] : memref<1x1xf32, #tpu.memory_space<vmem>>, vector<1x1xf32>
    %346 = vector.broadcast %345 : vector<1x1xf32> to vector<64x1xf32>
    %347 = arith.addf %344, %346 : vector<64x1xf32>
    %c0_101 = arith.constant 0 : index
    %c0_102 = arith.constant 0 : index
    %348 = vector.load %arg9[%c0_101, %c0_102] : memref<64x1xf32, #tpu.memory_space<vmem>>, vector<64x1xf32>
    tpu.vector_store %arg9[%c0_101, %c0_102], %347 {strides = array<i32>} : memref<64x1xf32, #tpu.memory_space<vmem>>, vector<64x1xf32>,
    return
  }
}

</mosaic_0001>

<llo_original>
// kernel: decoder_forward.1
$region0: #{decoder_forward.1}
  #allocation0 [shape = 'u32[]', space=smem, size = 0x4, offset = 0x4, fixed_abs, tag = 'smem constant byte address 0x4 - core index']
  #allocation1 [shape = 'u32[144,128]{1,0:T(1,128)}', space=vmem, size = 0x12000, scoped, tag = 'internal scratch']
  #allocation2 [shape = 'f32[64,128]{1,0:T(8,128)}', space=vmem, size = 0x8000, scoped, tag = 'scratch operand']
  #allocation3 [shape = 'f32[1,1]{1,0:T(1,128)S(1)}', space=vmem, size = 0x200, scoped, tag = 'scoped memory for decoder_forward.1']
  %s0 = inlined_call_operand.vmem [shape: f32[8,32], index: 0, kind: input, shape index: {}]
  %s1 = inlined_call_operand.vmem [shape: f32[32,512], index: 1, kind: input, shape index: {}]
  %s2 = inlined_call_operand.vmem [shape: f32[128,512], index: 2, kind: input, shape index: {}]
  %s3 = inlined_call_operand.vmem [shape: f32[1,512], index: 3, kind: input, shape index: {}]
  %s4 = inlined_call_operand.vmem [shape: f32[128,512], index: 4, kind: input, shape index: {}]
  %s5 = inlined_call_operand.vmem [shape: f32[128,512], index: 5, kind: input, shape index: {}]
  %s6 = inlined_call_operand.vmem [shape: f32[1,512], index: 6, kind: input, shape index: {}]
  %s7 = inlined_call_operand.vmem [shape: f32[128,1], index: 7, kind: input, shape index: {}]
  %s8 = inlined_call_operand.<no memory space> [shape: f32[1,1], index: 8, kind: input, shape index: {}]
  %s9 = inlined_call_operand.vmem [shape: f32[64,1], index: 9, kind: output, shape index: {}]
  %s10 = sld [smem:[#allocation0]]
  $region46: #{decoder_forward.1} parent=0
    _
  %s12 = ssub.s32 1, %s10
  %s13 = scalar_select 0, %s12, %s10
  %v14 = vstv %s8
  %15 = vst [vmem:[#allocation3] sm:$0x1] %v14
  // Predicated region
  $region2: #{decoder_forward.1} parent=0 // pred_check
    _
  $region3: #{decoder_forward.1} parent=0 // pred_check_branch
    %17 = sbr.rel (0) target = $region5
  $region4: #{decoder_forward.1} parent=0 // pred_region
    _
  $region5: #{decoder_forward.1} parent=0 // pred_fallthru
    _
  // Predicated region
  $region6: #{decoder_forward.1} parent=0 // pred_check
    _
  $region7: #{decoder_forward.1} parent=0 // pred_check_branch
    %19 = sbr.rel (0) target = $region9
  $region8: #{decoder_forward.1} parent=0 // pred_region
    _
  $region9: #{decoder_forward.1} parent=0 // pred_fallthru
    _
  // Predicated region
  $region10: #{decoder_forward.1} parent=0 // pred_check
    _
  $region11: #{decoder_forward.1} parent=0 // pred_check_branch
    %21 = sbr.rel (0) target = $region13
  $region12: #{decoder_forward.1} parent=0 // pred_region
    _
  $region13: #{decoder_forward.1} parent=0 // pred_fallthru
    _
  // Predicated region
  $region14: #{decoder_forward.1} parent=0 // pred_check
    _
  $region15: #{decoder_forward.1} parent=0 // pred_check_branch
    %23 = sbr.rel (0) target = $region17
  $region16: #{decoder_forward.1} parent=0 // pred_region
    _
  $region17: #{decoder_forward.1} parent=0 // pred_fallthru
    _
  // Predicated region
  $region18: #{decoder_forward.1} parent=0 // pred_check
    _
  $region19: #{decoder_forward.1} parent=0 // pred_check_branch
    %25 = sbr.rel (0) target = $region21
  $region20: #{decoder_forward.1} parent=0 // pred_region
    _
  $region21: #{decoder_forward.1} parent=0 // pred_fallthru
    _
  // Predicated region
  $region22: #{decoder_forward.1} parent=0 // pred_check
    _
  $region23: #{decoder_forward.1} parent=0 // pred_check_branch
    %27 = sbr.rel (0) target = $region25
  $region24: #{decoder_forward.1} parent=0 // pred_region
    _
  $region25: #{decoder_forward.1} parent=0 // pred_fallthru
    _
  // Predicated region
  $region26: #{decoder_forward.1} parent=0 // pred_check
    _
  $region27: #{decoder_forward.1} parent=0 // pred_check_branch
    %29 = sbr.rel (0) target = $region29
  $region28: #{decoder_forward.1} parent=0 // pred_region
    _
  $region29: #{decoder_forward.1} parent=0 // pred_fallthru
    _
  // Predicated region
  $region30: #{decoder_forward.1} parent=0 // pred_check
    _
  $region31: #{decoder_forward.1} parent=0 // pred_check_branch
    %31 = sbr.rel (0) target = $region33
  $region32: #{decoder_forward.1} parent=0 // pred_region
    _
  $region33: #{decoder_forward.1} parent=0 // pred_fallthru
    _
  // Predicated region
  $region34: #{decoder_forward.1} parent=0 // pred_check
    _
  $region35: #{decoder_forward.1} parent=0 // pred_check_branch
    %33 = sbr.rel (0) target = $region37
  $region36: #{decoder_forward.1} parent=0 // pred_region
    _
  $region37: #{decoder_forward.1} parent=0 // pred_fallthru
    _
  %v34 = vld [vmem:[%s0] sm:$0xff]
  %v35 = vld [vmem:[%s1] sm:$0xff]
  %v36 = vld [vmem:[%s1 + $0x8] sm:$0xff]
  %v37 = vld [vmem:[%s1 + $0x10] sm:$0xff]
  %v38 = vld [vmem:[%s1 + $0x18] sm:$0xff]
  %v39 = vld [vmem:[%s1 + $0x20] sm:$0xff]
  %v40 = vld [vmem:[%s1 + $0x28] sm:$0xff]
  %v41 = vld [vmem:[%s1 + $0x30] sm:$0xff]
  %v42 = vld [vmem:[%s1 + $0x38] sm:$0xff]
  %v43 = vld [vmem:[%s1 + $0x40] sm:$0xff]
  %v44 = vld [vmem:[%s1 + $0x48] sm:$0xff]
  %v45 = vld [vmem:[%s1 + $0x50] sm:$0xff]
  %v46 = vld [vmem:[%s1 + $0x58] sm:$0xff]
  %v47 = vld [vmem:[%s1 + $0x60] sm:$0xff]
  %v48 = vld [vmem:[%s1 + $0x68] sm:$0xff]
  %v49 = vld [vmem:[%s1 + $0x70] sm:$0xff]
  %v50 = vld [vmem:[%s1 + $0x78] sm:$0xff]
  %v51 = vld [vmem:[%s3] sm:$0xf]
  %v53 = vlaneseq
  %v54 = vshrl.u32 %v53, 7
  %v55 = vsub.s32 0, %v54
  %v56 = vrot.slane %v51, %v55
  %v57 = vlaneseq
  %v58 = vshrl.u32 %v57, 7
  %v59 = vsub.s32 1, %v58
  %v60 = vrot.slane %v51, %v59
  %v61 = vlaneseq
  %v62 = vshrl.u32 %v61, 7
  %v63 = vsub.s32 2, %v62
  %v64 = vrot.slane %v51, %v63
  %v65 = vlaneseq
  %v66 = vshrl.u32 %v65, 7
  %v67 = vsub.s32 3, %v66
  %v68 = vrot.slane %v51, %v67
  %vm73 = vcmask 261120
  %v75 = vsel %vm73, %v34, 0
  %77 = vmatprep.subr.mxu0 %v36
  %78 = vmatpush1.msra.mxu0 %v35
  %79 = vmatprep.subr.mxu0 %v40
  %80 = vmatpush1.msra.mxu0 %v39
  %81 = vmatprep.subr.mxu0 %v44
  %82 = vmatpush1.msra.mxu0 %v43
  %83 = vmatprep.subr.mxu0 %v48
  %84 = vmatpush1.msra.mxu0 %v47
  %85 = vmatprep.subr.mxu0 0.0
  %86 = vmatpush1.msra.mxu0 0.0
  %87 = vmatprep.subr.mxu0 0.0
  %88 = vmatpush1.msra.mxu0 0.0
  %89 = vmatprep.subr.mxu0 0.0
  %90 = vmatpush1.msra.mxu0 0.0
  %91 = vmatprep.subr.mxu0 0.0
  %92 = vmatpush1.msra.mxu0 0.0
  %93 = vmatprep.subr.mxu0 0.0
  %94 = vmatpush1.msra.mxu0 0.0
  %95 = vmatprep.subr.mxu0 0.0
  %96 = vmatpush1.msra.mxu0 0.0
  %97 = vmatprep.subr.mxu0 0.0
  %98 = vmatpush1.msra.mxu0 0.0
  %99 = vmatprep.subr.mxu0 0.0
  %100 = vmatpush1.msra.mxu0 0.0
  %101 = vmatprep.subr.mxu0 0.0
  %102 = vmatpush1.msra.mxu0 0.0
  %103 = vmatprep.subr.mxu0 0.0
  %104 = vmatpush1.msra.mxu0 0.0
  %105 = vmatprep.subr.mxu0 0.0
  %106 = vmatpush1.msra.mxu0 0.0
  %107 = vmatprep.subr.mxu0 0.0
  %108 = vmatpush1.msra.mxu0 0.0
  %109 = vmatprep.subr.mxu0 0.0
  %110 = vmatpush1.msra.mxu0 0.0
  %111 = vmatprep.subr.mxu0 0.0
  %112 = vmatpush1.msra.mxu0 0.0
  %113 = vmatprep.subr.mxu0 0.0
  %114 = vmatpush1.msra.mxu0 0.0
  %115 = vmatprep.subr.mxu0 0.0
  %116 = vmatpush1.msra.mxu0 0.0
  %117 = vmatprep.subr.mxu0 0.0
  %118 = vmatpush1.msra.mxu0 0.0
  %119 = vmatprep.subr.mxu0 0.0
  %120 = vmatpush1.msra.mxu0 0.0
  %121 = vmatprep.subr.mxu0 0.0
  %122 = vmatpush1.msra.mxu0 0.0
  %123 = vmatprep.subr.mxu0 0.0
  %124 = vmatpush1.msra.mxu0 0.0
  %125 = vmatprep.subr.mxu0 0.0
  %126 = vmatpush1.msra.mxu0 0.0
  %127 = vmatprep.subr.mxu0 0.0
  %128 = vmatpush1.msra.mxu0 0.0
  %129 = vmatprep.subr.mxu0 0.0
  %130 = vmatpush1.msra.mxu0 0.0
  %131 = vmatprep.subr.mxu0 0.0
  %132 = vmatpush1.msra.mxu0 0.0
  %133 = vmatprep.subr.mxu0 0.0
  %134 = vmatpush1.msra.mxu0 0.0
  %135 = vmatprep.subr.mxu0 0.0
  %136 = vmatpush1.msra.mxu0 0.0
  %137 = vmatprep.subr.mxu0 0.0
  %138 = vmatpush1.msra.mxu0 0.0
  %139 = vmatprep.subr.mxu0 0.0
  %140 = vmatpush1.msra.mxu0 0.0
  %141 = vmatprep.mubr.f32.mxu0 0.0
  %142 = vmatmul.mubr.f32.gmra.mrb[0].mxu0 %v75
  %v143 = vpop.f32.mrb[0].mxu0
  %v144 = vadd.f32 %v56, %v143
  %v145 = vpop.f32.mrb[0].mxu0
  %v146 = vadd.f32 %v60, %v145
  %147 = vdwg.mxu0
  %148 = vmatprep.subr.mxu0 %v38
  %149 = vmatpush1.msra.mxu0 %v37
  %150 = vmatprep.subr.mxu0 %v42
  %151 = vmatpush1.msra.mxu0 %v41
  %152 = vmatprep.subr.mxu0 %v46
  %153 = vmatpush1.msra.mxu0 %v45
  %154 = vmatprep.subr.mxu0 %v50
  %155 = vmatpush1.msra.mxu0 %v49
  %156 = vmatprep.subr.mxu0 0.0
  %157 = vmatpush1.msra.mxu0 0.0
  %158 = vmatprep.subr.mxu0 0.0
  %159 = vmatpush1.msra.mxu0 0.0
  %160 = vmatprep.subr.mxu0 0.0
  %161 = vmatpush1.msra.mxu0 0.0
  %162 = vmatprep.subr.mxu0 0.0
  %163 = vmatpush1.msra.mxu0 0.0
  %164 = vmatprep.subr.mxu0 0.0
  %165 = vmatpush1.msra.mxu0 0.0
  %166 = vmatprep.subr.mxu0 0.0
  %167 = vmatpush1.msra.mxu0 0.0
  %168 = vmatprep.subr.mxu0 0.0
  %169 = vmatpush1.msra.mxu0 0.0
  %170 = vmatprep.subr.mxu0 0.0
  %171 = vmatpush1.msra.mxu0 0.0
  %172 = vmatprep.subr.mxu0 0.0
  %173 = vmatpush1.msra.mxu0 0.0
  %174 = vmatprep.subr.mxu0 0.0
  %175 = vmatpush1.msra.mxu0 0.0
  %176 = vmatprep.subr.mxu0 0.0
  %177 = vmatpush1.msra.mxu0 0.0
  %178 = vmatprep.subr.mxu0 0.0
  %179 = vmatpush1.msra.mxu0 0.0
  %180 = vmatprep.subr.mxu0 0.0
  %181 = vmatpush1.msra.mxu0 0.0
  %182 = vmatprep.subr.mxu0 0.0
  %183 = vmatpush1.msra.mxu0 0.0
  %184 = vmatprep.subr.mxu0 0.0
  %185 = vmatpush1.msra.mxu0 0.0
  %186 = vmatprep.subr.mxu0 0.0
  %187 = vmatpush1.msra.mxu0 0.0
  %188 = vmatprep.subr.mxu0 0.0
  %189 = vmatpush1.msra.mxu0 0.0
  %190 = vmatprep.subr.mxu0 0.0
  %191 = vmatpush1.msra.mxu0 0.0
  %192 = vmatprep.subr.mxu0 0.0
  %193 = vmatpush1.msra.mxu0 0.0
  %194 = vmatprep.subr.mxu0 0.0
  %195 = vmatpush1.msra.mxu0 0.0
  %196 = vmatprep.subr.mxu0 0.0
  %197 = vmatpush1.msra.mxu0 0.0
  %198 = vmatprep.subr.mxu0 0.0
  %199 = vmatpush1.msra.mxu0 0.0
  %200 = vmatprep.subr.mxu0 0.0
  %201 = vmatpush1.msra.mxu0 0.0
  %202 = vmatprep.subr.mxu0 0.0
  %203 = vmatpush1.msra.mxu0 0.0
  %204 = vmatprep.subr.mxu0 0.0
  %205 = vmatpush1.msra.mxu0 0.0
  %206 = vmatprep.subr.mxu0 0.0
  %207 = vmatpush1.msra.mxu0 0.0
  %208 = vmatprep.subr.mxu0 0.0
  %209 = vmatpush1.msra.mxu0 0.0
  %210 = vmatprep.subr.mxu0 0.0
  %211 = vmatpush1.msra.mxu0 0.0
  %212 = vmatprep.mubr.f32.mxu0 0.0
  %213 = vmatmul.mubr.f32.gmra.mrb[0].mxu0 %v75
  %v214 = vpop.f32.mrb[0].mxu0
  %v215 = vadd.f32 %v64, %v214
  %v216 = vpop.f32.mrb[0].mxu0
  %v217 = vadd.f32 %v68, %v216
  %218 = vdwg.mxu0
  %v219 = vld [vmem:[%s2] sm:$0xff]
  %v220 = vld [vmem:[%s2 + $0x8] sm:$0xff]
  %v221 = vld [vmem:[%s2 + $0x10] sm:$0xff]
  %v222 = vld [vmem:[%s2 + $0x18] sm:$0xff]
  %v223 = vld [vmem:[%s2 + $0x20] sm:$0xff]
  %v224 = vld [vmem:[%s2 + $0x28] sm:$0xff]
  %v225 = vld [vmem:[%s2 + $0x30] sm:$0xff]
  %v226 = vld [vmem:[%s2 + $0x38] sm:$0xff]
  %v227 = vld [vmem:[%s2 + $0x40] sm:$0xff]
  %v228 = vld [vmem:[%s2 + $0x48] sm:$0xff]
  %v229 = vld [vmem:[%s2 + $0x50] sm:$0xff]
  %v230 = vld [vmem:[%s2 + $0x58] sm:$0xff]
  %v231 = vld [vmem:[%s2 + $0x60] sm:$0xff]
  %v232 = vld [vmem:[%s2 + $0x68] sm:$0xff]
  %v233 = vld [vmem:[%s2 + $0x70] sm:$0xff]
  %v234 = vld [vmem:[%s2 + $0x78] sm:$0xff]
  %v235 = vld [vmem:[%s2 + $0x80] sm:$0xff]
  %v236 = vld [vmem:[%s2 + $0x88] sm:$0xff]
  %v237 = vld [vmem:[%s2 + $0x90] sm:$0xff]
  %v238 = vld [vmem:[%s2 + $0x98] sm:$0xff]
  %v239 = vld [vmem:[%s2 + $0xa0] sm:$0xff]
  %v240 = vld [vmem:[%s2 + $0xa8] sm:$0xff]
  %v241 = vld [vmem:[%s2 + $0xb0] sm:$0xff]
  %v242 = vld [vmem:[%s2 + $0xb8] sm:$0xff]
  %v243 = vld [vmem:[%s2 + $0xc0] sm:$0xff]
  %v244 = vld [vmem:[%s2 + $0xc8] sm:$0xff]
  %v245 = vld [vmem:[%s2 + $0xd0] sm:$0xff]
  %v246 = vld [vmem:[%s2 + $0xd8] sm:$0xff]
  %v247 = vld [vmem:[%s2 + $0xe0] sm:$0xff]
  %v248 = vld [vmem:[%s2 + $0xe8] sm:$0xff]
  %v249 = vld [vmem:[%s2 + $0xf0] sm:$0xff]
  %v250 = vld [vmem:[%s2 + $0xf8] sm:$0xff]
  %v251 = vld [vmem:[%s2 + $0x100] sm:$0xff]
  %v252 = vld [vmem:[%s2 + $0x108] sm:$0xff]
  %v253 = vld [vmem:[%s2 + $0x110] sm:$0xff]
  %v254 = vld [vmem:[%s2 + $0x118] sm:$0xff]
  %v255 = vld [vmem:[%s2 + $0x120] sm:$0xff]
  %v256 = vld [vmem:[%s2 + $0x128] sm:$0xff]
  %v257 = vld [vmem:[%s2 + $0x130] sm:$0xff]
  %v258 = vld [vmem:[%s2 + $0x138] sm:$0xff]
  %v259 = vld [vmem:[%s2 + $0x140] sm:$0xff]
  %v260 = vld [vmem:[%s2 + $0x148] sm:$0xff]
  %v261 = vld [vmem:[%s2 + $0x150] sm:$0xff]
  %v262 = vld [vmem:[%s2 + $0x158] sm:$0xff]
  %v263 = vld [vmem:[%s2 + $0x160] sm:$0xff]
  %v264 = vld [vmem:[%s2 + $0x168] sm:$0xff]
  %v265 = vld [vmem:[%s2 + $0x170] sm:$0xff]
  %v266 = vld [vmem:[%s2 + $0x178] sm:$0xff]
  %v267 = vld [vmem:[%s2 + $0x180] sm:$0xff]
  %v268 = vld [vmem:[%s2 + $0x188] sm:$0xff]
  %v269 = vld [vmem:[%s2 + $0x190] sm:$0xff]
  %v270 = vld [vmem:[%s2 + $0x198] sm:$0xff]
  %v271 = vld [vmem:[%s2 + $0x1a0] sm:$0xff]
  %v272 = vld [vmem:[%s2 + $0x1a8] sm:$0xff]
  %v273 = vld [vmem:[%s2 + $0x1b0] sm:$0xff]
  %v274 = vld [vmem:[%s2 + $0x1b8] sm:$0xff]
  %v275 = vld [vmem:[%s2 + $0x1c0] sm:$0xff]
  %v276 = vld [vmem:[%s2 + $0x1c8] sm:$0xff]
  %v277 = vld [vmem:[%s2 + $0x1d0] sm:$0xff]
  %v278 = vld [vmem:[%s2 + $0x1d8] sm:$0xff]
  %v279 = vld [vmem:[%s2 + $0x1e0] sm:$0xff]
  %v280 = vld [vmem:[%s2 + $0x1e8] sm:$0xff]
  %v281 = vld [vmem:[%s2 + $0x1f0] sm:$0xff]
  %v282 = vld [vmem:[%s2 + $0x1f8] sm:$0xff]
  %v283 = vld [vmem:[%s6] sm:$0xf]
  %v285 = vlaneseq
  %v286 = vshrl.u32 %v285, 7
  %v287 = vsub.s32 0, %v286
  %v288 = vrot.slane %v283, %v287
  %v289 = vlaneseq
  %v290 = vshrl.u32 %v289, 7
  %v291 = vsub.s32 1, %v290
  %v292 = vrot.slane %v283, %v291
  %v293 = vlaneseq
  %v294 = vshrl.u32 %v293, 7
  %v295 = vsub.s32 2, %v294
  %v296 = vrot.slane %v283, %v295
  %v297 = vlaneseq
  %v298 = vshrl.u32 %v297, 7
  %v299 = vsub.s32 3, %v298
  %v300 = vrot.slane %v283, %v299
  %v305 = vld [vmem:[%s5] sm:$0xff]
  %v306 = vld [vmem:[%s5 + $0x8] sm:$0xff]
  %v307 = vld [vmem:[%s5 + $0x10] sm:$0xff]
  %v308 = vld [vmem:[%s5 + $0x18] sm:$0xff]
  %v309 = vld [vmem:[%s5 + $0x20] sm:$0xff]
  %v310 = vld [vmem:[%s5 + $0x28] sm:$0xff]
  %v311 = vld [vmem:[%s5 + $0x30] sm:$0xff]
  %v312 = vld [vmem:[%s5 + $0x38] sm:$0xff]
  %v313 = vld [vmem:[%s5 + $0x40] sm:$0xff]
  %v314 = vld [vmem:[%s5 + $0x48] sm:$0xff]
  %v315 = vld [vmem:[%s5 + $0x50] sm:$0xff]
  %v316 = vld [vmem:[%s5 + $0x58] sm:$0xff]
  %v317 = vld [vmem:[%s5 + $0x60] sm:$0xff]
  %v318 = vld [vmem:[%s5 + $0x68] sm:$0xff]
  %v319 = vld [vmem:[%s5 + $0x70] sm:$0xff]
  %v320 = vld [vmem:[%s5 + $0x78] sm:$0xff]
  %v321 = vld [vmem:[%s5 + $0x80] sm:$0xff]
  %v322 = vld [vmem:[%s5 + $0x88] sm:$0xff]
  %v323 = vld [vmem:[%s5 + $0x90] sm:$0xff]
  %v324 = vld [vmem:[%s5 + $0x98] sm:$0xff]
  %v325 = vld [vmem:[%s5 + $0xa0] sm:$0xff]
  %v326 = vld [vmem:[%s5 + $0xa8] sm:$0xff]
  %v327 = vld [vmem:[%s5 + $0xb0] sm:$0xff]
  %v328 = vld [vmem:[%s5 + $0xb8] sm:$0xff]
  %v329 = vld [vmem:[%s5 + $0xc0] sm:$0xff]
  %v330 = vld [vmem:[%s5 + $0xc8] sm:$0xff]
  %v331 = vld [vmem:[%s5 + $0xd0] sm:$0xff]
  %v332 = vld [vmem:[%s5 + $0xd8] sm:$0xff]
  %v333 = vld [vmem:[%s5 + $0xe0] sm:$0xff]
  %v334 = vld [vmem:[%s5 + $0xe8] sm:$0xff]
  %v335 = vld [vmem:[%s5 + $0xf0] sm:$0xff]
  %v336 = vld [vmem:[%s5 + $0xf8] sm:$0xff]
  %v337 = vld [vmem:[%s5 + $0x100] sm:$0xff]
  %v338 = vld [vmem:[%s5 + $0x108] sm:$0xff]
  %v339 = vld [vmem:[%s5 + $0x110] sm:$0xff]
  %v340 = vld [vmem:[%s5 + $0x118] sm:$0xff]
  %v341 = vld [vmem:[%s5 + $0x120] sm:$0xff]
  %v342 = vld [vmem:[%s5 + $0x128] sm:$0xff]
  %v343 = vld [vmem:[%s5 + $0x130] sm:$0xff]
  %v344 = vld [vmem:[%s5 + $0x138] sm:$0xff]
  %v345 = vld [vmem:[%s5 + $0x140] sm:$0xff]
  %v346 = vld [vmem:[%s5 + $0x148] sm:$0xff]
  %v347 = vld [vmem:[%s5 + $0x150] sm:$0xff]
  %v348 = vld [vmem:[%s5 + $0x158] sm:$0xff]
  %v349 = vld [vmem:[%s5 + $0x160] sm:$0xff]
  %v350 = vld [vmem:[%s5 + $0x168] sm:$0xff]
  %v351 = vld [vmem:[%s5 + $0x170] sm:$0xff]
  %v352 = vld [vmem:[%s5 + $0x178] sm:$0xff]
  %v353 = vld [vmem:[%s5 + $0x180] sm:$0xff]
  %v354 = vld [vmem:[%s5 + $0x188] sm:$0xff]
  %v355 = vld [vmem:[%s5 + $0x190] sm:$0xff]
  %v356 = vld [vmem:[%s5 + $0x198] sm:$0xff]
  %v357 = vld [vmem:[%s5 + $0x1a0] sm:$0xff]
  %v358 = vld [vmem:[%s5 + $0x1a8] sm:$0xff]
  %v359 = vld [vmem:[%s5 + $0x1b0] sm:$0xff]
  %v360 = vld [vmem:[%s5 + $0x1b8] sm:$0xff]
  %v361 = vld [vmem:[%s5 + $0x1c0] sm:$0xff]
  %v362 = vld [vmem:[%s5 + $0x1c8] sm:$0xff]
  %v363 = vld [vmem:[%s5 + $0x1d0] sm:$0xff]
  %v364 = vld [vmem:[%s5 + $0x1d8] sm:$0xff]
  %v365 = vld [vmem:[%s5 + $0x1e0] sm:$0xff]
  %v366 = vld [vmem:[%s5 + $0x1e8] sm:$0xff]
  %v367 = vld [vmem:[%s5 + $0x1f0] sm:$0xff]
  %v368 = vld [vmem:[%s5 + $0x1f8] sm:$0xff]
  %369 = vmatprep.subr.mxu0 %v306
  %370 = vmatpush1.msra.mxu0 %v305
  %371 = vmatprep.subr.mxu0 %v310
  %372 = vmatpush1.msra.mxu0 %v309
  %373 = vmatprep.subr.mxu0 %v314
  %374 = vmatpush1.msra.mxu0 %v313
  %375 = vmatprep.subr.mxu0 %v318
  %376 = vmatpush1.msra.mxu0 %v317
  %377 = vmatprep.subr.mxu0 %v322
  %378 = vmatpush1.msra.mxu0 %v321
  %379 = vmatprep.subr.mxu0 %v326
  %380 = vmatpush1.msra.mxu0 %v325
  %381 = vmatprep.subr.mxu0 %v330
  %382 = vmatpush1.msra.mxu0 %v329
  %383 = vmatprep.subr.mxu0 %v334
  %384 = vmatpush1.msra.mxu0 %v333
  %385 = vmatprep.subr.mxu0 %v338
  %386 = vmatpush1.msra.mxu0 %v337
  %387 = vmatprep.subr.mxu0 %v342
  %388 = vmatpush1.msra.mxu0 %v341
  %389 = vmatprep.subr.mxu0 %v346
  %390 = vmatpush1.msra.mxu0 %v345
  %391 = vmatprep.subr.mxu0 %v350
  %392 = vmatpush1.msra.mxu0 %v349
  %393 = vmatprep.subr.mxu0 %v354
  %394 = vmatpush1.msra.mxu0 %v353
  %395 = vmatprep.subr.mxu0 %v358
  %396 = vmatpush1.msra.mxu0 %v357
  %397 = vmatprep.subr.mxu0 %v362
  %398 = vmatpush1.msra.mxu0 %v361
  %399 = vmatprep.subr.mxu0 %v366
  %400 = vmatpush1.msra.mxu0 %v365
  %401 = vmatprep.subr.mxu0 0.0
  %402 = vmatpush1.msra.mxu0 0.0
  %403 = vmatprep.subr.mxu0 0.0
  %404 = vmatpush1.msra.mxu0 0.0
  %405 = vmatprep.subr.mxu0 0.0
  %406 = vmatpush1.msra.mxu0 0.0
  %407 = vmatprep.subr.mxu0 0.0
  %408 = vmatpush1.msra.mxu0 0.0
  %409 = vmatprep.subr.mxu0 0.0
  %410 = vmatpush1.msra.mxu0 0.0
  %411 = vmatprep.subr.mxu0 0.0
  %412 = vmatpush1.msra.mxu0 0.0
  %413 = vmatprep.subr.mxu0 0.0
  %414 = vmatpush1.msra.mxu0 0.0
  %415 = vmatprep.subr.mxu0 0.0
  %416 = vmatpush1.msra.mxu0 0.0
  %417 = vmatprep.subr.mxu0 0.0
  %418 = vmatpush1.msra.mxu0 0.0
  %419 = vmatprep.subr.mxu0 0.0
  %420 = vmatpush1.msra.mxu0 0.0
  %421 = vmatprep.subr.mxu0 0.0
  %422 = vmatpush1.msra.mxu0 0.0
  %423 = vmatprep.subr.mxu0 0.0
  %424 = vmatpush1.msra.mxu0 0.0
  %425 = vmatprep.subr.mxu0 0.0
  %426 = vmatpush1.msra.mxu0 0.0
  %427 = vmatprep.subr.mxu0 0.0
  %428 = vmatpush1.msra.mxu0 0.0
  %429 = vmatprep.subr.mxu0 0.0
  %430 = vmatpush1.msra.mxu0 0.0
  %431 = vmatprep.subr.mxu0 0.0
  %432 = vmatpush1.msra.mxu0 0.0
  %433 = vmatprep.mubr.f32.mxu0 0.0
  %434 = vmatmul.mubr.f32.gmra.mrb[0].mxu0 0.0
  %v435 = vpop.f32.mrb[0].mxu0
  %v436 = vadd.f32 %v288, %v435
  %v437 = vpop.f32.mrb[0].mxu0
  %v438 = vadd.f32 %v292, %v437
  %439 = vdwg.mxu0
  %440 = vmatprep.subr.mxu0 %v308
  %441 = vmatpush1.msra.mxu0 %v307
  %442 = vmatprep.subr.mxu0 %v312
  %443 = vmatpush1.msra.mxu0 %v311
  %444 = vmatprep.subr.mxu0 %v316
  %445 = vmatpush1.msra.mxu0 %v315
  %446 = vmatprep.subr.mxu0 %v320
  %447 = vmatpush1.msra.mxu0 %v319
  %448 = vmatprep.subr.mxu0 %v324
  %449 = vmatpush1.msra.mxu0 %v323
  %450 = vmatprep.subr.mxu0 %v328
  %451 = vmatpush1.msra.mxu0 %v327
  %452 = vmatprep.subr.mxu0 %v332
  %453 = vmatpush1.msra.mxu0 %v331
  %454 = vmatprep.subr.mxu0 %v336
  %455 = vmatpush1.msra.mxu0 %v335
  %456 = vmatprep.subr.mxu0 %v340
  %457 = vmatpush1.msra.mxu0 %v339
  %458 = vmatprep.subr.mxu0 %v344
  %459 = vmatpush1.msra.mxu0 %v343
  %460 = vmatprep.subr.mxu0 %v348
  %461 = vmatpush1.msra.mxu0 %v347
  %462 = vmatprep.subr.mxu0 %v352
  %463 = vmatpush1.msra.mxu0 %v351
  %464 = vmatprep.subr.mxu0 %v356
  %465 = vmatpush1.msra.mxu0 %v355
  %466 = vmatprep.subr.mxu0 %v360
  %467 = vmatpush1.msra.mxu0 %v359
  %468 = vmatprep.subr.mxu0 %v364
  %469 = vmatpush1.msra.mxu0 %v363
  %470 = vmatprep.subr.mxu0 %v368
  %471 = vmatpush1.msra.mxu0 %v367
  %472 = vmatprep.subr.mxu0 0.0
  %473 = vmatpush1.msra.mxu0 0.0
  %474 = vmatprep.subr.mxu0 0.0
  %475 = vmatpush1.msra.mxu0 0.0
  %476 = vmatprep.subr.mxu0 0.0
  %477 = vmatpush1.msra.mxu0 0.0
  %478 = vmatprep.subr.mxu0 0.0
  %479 = vmatpush1.msra.mxu0 0.0
  %480 = vmatprep.subr.mxu0 0.0
  %481 = vmatpush1.msra.mxu0 0.0
  %482 = vmatprep.subr.mxu0 0.0
  %483 = vmatpush1.msra.mxu0 0.0
  %484 = vmatprep.subr.mxu0 0.0
  %485 = vmatpush1.msra.mxu0 0.0
  %486 = vmatprep.subr.mxu0 0.0
  %487 = vmatpush1.msra.mxu0 0.0
  %488 = vmatprep.subr.mxu0 0.0
  %489 = vmatpush1.msra.mxu0 0.0
  %490 = vmatprep.subr.mxu0 0.0
  %491 = vmatpush1.msra.mxu0 0.0
  %492 = vmatprep.subr.mxu0 0.0
  %493 = vmatpush1.msra.mxu0 0.0
  %494 = vmatprep.subr.mxu0 0.0
  %495 = vmatpush1.msra.mxu0 0.0
  %496 = vmatprep.subr.mxu0 0.0
  %497 = vmatpush1.msra.mxu0 0.0
  %498 = vmatprep.subr.mxu0 0.0
  %499 = vmatpush1.msra.mxu0 0.0
  %500 = vmatprep.subr.mxu0 0.0
  %501 = vmatpush1.msra.mxu0 0.0
  %502 = vmatprep.subr.mxu0 0.0
  %503 = vmatpush1.msra.mxu0 0.0
  %504 = vmatprep.mubr.f32.mxu0 0.0
  %505 = vmatmul.mubr.f32.gmra.mrb[0].mxu0 0.0
  %v506 = vpop.f32.mrb[0].mxu0
  %v507 = vadd.f32 %v296, %v506
  %v508 = vpop.f32.mrb[0].mxu0
  %v509 = vadd.f32 %v300, %v508
  %510 = vdwg.mxu0
  %511 = vmatprep.subr.mxu0 %v220
  %512 = vmatpush1.msra.mxu0 %v219
  %513 = vmatprep.subr.mxu0 %v224
  %514 = vmatpush1.msra.mxu0 %v223
  %515 = vmatprep.subr.mxu0 %v228
  %516 = vmatpush1.msra.mxu0 %v227
  %517 = vmatprep.subr.mxu0 %v232
  %518 = vmatpush1.msra.mxu0 %v231
  %519 = vmatprep.subr.mxu0 %v236
  %520 = vmatpush1.msra.mxu0 %v235
  %521 = vmatprep.subr.mxu0 %v240
  %522 = vmatpush1.msra.mxu0 %v239
  %523 = vmatprep.subr.mxu0 %v244
  %524 = vmatpush1.msra.mxu0 %v243
  %525 = vmatprep.subr.mxu0 %v248
  %526 = vmatpush1.msra.mxu0 %v247
  %527 = vmatprep.subr.mxu0 %v252
  %528 = vmatpush1.msra.mxu0 %v251
  %529 = vmatprep.subr.mxu0 %v256
  %530 = vmatpush1.msra.mxu0 %v255
  %531 = vmatprep.subr.mxu0 %v260
  %532 = vmatpush1.msra.mxu0 %v259
  %533 = vmatprep.subr.mxu0 %v264
  %534 = vmatpush1.msra.mxu0 %v263
  %535 = vmatprep.subr.mxu0 %v268
  %536 = vmatpush1.msra.mxu0 %v267
  %537 = vmatprep.subr.mxu0 %v272
  %538 = vmatpush1.msra.mxu0 %v271
  %539 = vmatprep.subr.mxu0 %v276
  %540 = vmatpush1.msra.mxu0 %v275
  %541 = vmatprep.subr.mxu0 %v280
  %542 = vmatpush1.msra.mxu0 %v279
  %543 = vmatprep.subr.mxu0 0.0
  %544 = vmatpush1.msra.mxu0 0.0
  %545 = vmatprep.subr.mxu0 0.0
  %546 = vmatpush1.msra.mxu0 0.0
  %547 = vmatprep.subr.mxu0 0.0
  %548 = vmatpush1.msra.mxu0 0.0
  %549 = vmatprep.subr.mxu0 0.0
  %550 = vmatpush1.msra.mxu0 0.0
  %551 = vmatprep.subr.mxu0 0.0
  %552 = vmatpush1.msra.mxu0 0.0
  %553 = vmatprep.subr.mxu0 0.0
  %554 = vmatpush1.msra.mxu0 0.0
  %555 = vmatprep.subr.mxu0 0.0
  %556 = vmatpush1.msra.mxu0 0.0
  %557 = vmatprep.subr.mxu0 0.0
  %558 = vmatpush1.msra.mxu0 0.0
  %559 = vmatprep.subr.mxu0 0.0
  %560 = vmatpush1.msra.mxu0 0.0
  %561 = vmatprep.subr.mxu0 0.0
  %562 = vmatpush1.msra.mxu0 0.0
  %563 = vmatprep.subr.mxu0 0.0
  %564 = vmatpush1.msra.mxu0 0.0
  %565 = vmatprep.subr.mxu0 0.0
  %566 = vmatpush1.msra.mxu0 0.0
  %567 = vmatprep.subr.mxu0 0.0
  %568 = vmatpush1.msra.mxu0 0.0
  %569 = vmatprep.subr.mxu0 0.0
  %570 = vmatpush1.msra.mxu0 0.0
  %571 = vmatprep.subr.mxu0 0.0
  %572 = vmatpush1.msra.mxu0 0.0
  %573 = vmatprep.subr.mxu0 0.0
  %574 = vmatpush1.msra.mxu0 0.0
  %575 = vmatprep.mubr.f32.mxu0 0.0
  %576 = vmatmul.mubr.f32.gmra.mrb[0].mxu0 0.0
  %v577 = vpop.f32.mrb[0].mxu0
  %v578 = vadd.f32 0.0, %v577
  %v579 = vpop.f32.mrb[0].mxu0
  %v580 = vadd.f32 0.0, %v579
  %581 = vdwg.mxu0
  %582 = vmatprep.subr.mxu0 %v222
  %583 = vmatpush1.msra.mxu0 %v221
  %584 = vmatprep.subr.mxu0 %v226
  %585 = vmatpush1.msra.mxu0 %v225
  %586 = vmatprep.subr.mxu0 %v230
  %587 = vmatpush1.msra.mxu0 %v229
  %588 = vmatprep.subr.mxu0 %v234
  %589 = vmatpush1.msra.mxu0 %v233
  %590 = vmatprep.subr.mxu0 %v238
  %591 = vmatpush1.msra.mxu0 %v237
  %592 = vmatprep.subr.mxu0 %v242
  %593 = vmatpush1.msra.mxu0 %v241
  %594 = vmatprep.subr.mxu0 %v246
  %595 = vmatpush1.msra.mxu0 %v245
  %596 = vmatprep.subr.mxu0 %v250
  %597 = vmatpush1.msra.mxu0 %v249
  %598 = vmatprep.subr.mxu0 %v254
  %599 = vmatpush1.msra.mxu0 %v253
  %600 = vmatprep.subr.mxu0 %v258
  %601 = vmatpush1.msra.mxu0 %v257
  %602 = vmatprep.subr.mxu0 %v262
  %603 = vmatpush1.msra.mxu0 %v261
  %604 = vmatprep.subr.mxu0 %v266
  %605 = vmatpush1.msra.mxu0 %v265
  %606 = vmatprep.subr.mxu0 %v270
  %607 = vmatpush1.msra.mxu0 %v269
  %608 = vmatprep.subr.mxu0 %v274
  %609 = vmatpush1.msra.mxu0 %v273
  %610 = vmatprep.subr.mxu0 %v278
  %611 = vmatpush1.msra.mxu0 %v277
  %612 = vmatprep.subr.mxu0 %v282
  %613 = vmatpush1.msra.mxu0 %v281
  %614 = vmatprep.subr.mxu0 0.0
  %615 = vmatpush1.msra.mxu0 0.0
  %616 = vmatprep.subr.mxu0 0.0
  %617 = vmatpush1.msra.mxu0 0.0
  %618 = vmatprep.subr.mxu0 0.0
  %619 = vmatpush1.msra.mxu0 0.0
  %620 = vmatprep.subr.mxu0 0.0
  %621 = vmatpush1.msra.mxu0 0.0
  %622 = vmatprep.subr.mxu0 0.0
  %623 = vmatpush1.msra.mxu0 0.0
  %624 = vmatprep.subr.mxu0 0.0
  %625 = vmatpush1.msra.mxu0 0.0
  %626 = vmatprep.subr.mxu0 0.0
  %627 = vmatpush1.msra.mxu0 0.0
  %628 = vmatprep.subr.mxu0 0.0
  %629 = vmatpush1.msra.mxu0 0.0
  %630 = vmatprep.subr.mxu0 0.0
  %631 = vmatpush1.msra.mxu0 0.0
  %632 = vmatprep.subr.mxu0 0.0
  %633 = vmatpush1.msra.mxu0 0.0
  %634 = vmatprep.subr.mxu0 0.0
  %635 = vmatpush1.msra.mxu0 0.0
  %636 = vmatprep.subr.mxu0 0.0
  %637 = vmatpush1.msra.mxu0 0.0
  %638 = vmatprep.subr.mxu0 0.0
  %639 = vmatpush1.msra.mxu0 0.0
  %640 = vmatprep.subr.mxu0 0.0
  %641 = vmatpush1.msra.mxu0 0.0
  %642 = vmatprep.subr.mxu0 0.0
  %643 = vmatpush1.msra.mxu0 0.0
  %644 = vmatprep.subr.mxu0 0.0
  %645 = vmatpush1.msra.mxu0 0.0
  %646 = vmatprep.mubr.f32.mxu0 0.0
  %647 = vmatmul.mubr.f32.gmra.mrb[0].mxu0 0.0
  %v648 = vpop.f32.mrb[0].mxu0
  %v649 = vadd.f32 0.0, %v648
  %v650 = vpop.f32.mrb[0].mxu0
  %v651 = vadd.f32 0.0, %v650
  %652 = vdwg.mxu0
  %v653 = vadd.f32 %v144, %v578
  %v654 = vadd.f32 %v146, %v580
  %v655 = vadd.f32 %v215, %v649
  %v656 = vadd.f32 %v217, %v651
  %v657 = vxor.u32 %v653, 2147483648
  %v658 = vxor.u32 %v654, 2147483648
  %v659 = vxor.u32 %v655, 2147483648
  %v660 = vmul.f32 %v657, 1.442695
  %v661 = vpow.pop %v660
  %v662 = vmul.f32 %v658, 1.442695
  %v663 = vpow.pop %v662
  %v664 = vmul.f32 %v659, 1.442695
  %v665 = vpow.pop %v664
  %v666 = vadd.f32 %v661, 1.0
  %v667 = vadd.f32 %v663, 1.0
  %v668 = vadd.f32 %v665, 1.0
  %v669 = vrcp.pop %v666
  %v670 = vmul.f32 1.0, %v669
  %v671 = vrcp.pop %v667
  %v672 = vmul.f32 1.0, %v671
  %v673 = vrcp.pop %v668
  %v674 = vmul.f32 1.0, %v673
  %v675 = vtanh.pop %v656
  %v676 = vmul.f32 %v672, 0.0
  %v677 = vmul.f32 %v670, %v675
  %v678 = vadd.f32 %v676, %v677
  %v679 = vtanh.pop %v678
  %v680 = vmul.f32 %v674, %v679
  %v681 = vld [vmem:[%s4] sm:$0xff]
  %v682 = vld [vmem:[%s4 + $0x8] sm:$0xff]
  %v683 = vld [vmem:[%s4 + $0x10] sm:$0xff]
  %v684 = vld [vmem:[%s4 + $0x18] sm:$0xff]
  %v685 = vld [vmem:[%s4 + $0x20] sm:$0xff]
  %v686 = vld [vmem:[%s4 + $0x28] sm:$0xff]
  %v687 = vld [vmem:[%s4 + $0x30] sm:$0xff]
  %v688 = vld [vmem:[%s4 + $0x38] sm:$0xff]
  %v689 = vld [vmem:[%s4 + $0x40] sm:$0xff]
  %v690 = vld [vmem:[%s4 + $0x48] sm:$0xff]
  %v691 = vld [vmem:[%s4 + $0x50] sm:$0xff]
  %v692 = vld [vmem:[%s4 + $0x58] sm:$0xff]
  %v693 = vld [vmem:[%s4 + $0x60] sm:$0xff]
  %v694 = vld [vmem:[%s4 + $0x68] sm:$0xff]
  %v695 = vld [vmem:[%s4 + $0x70] sm:$0xff]
  %v696 = vld [vmem:[%s4 + $0x78] sm:$0xff]
  %v697 = vld [vmem:[%s4 + $0x80] sm:$0xff]
  %v698 = vld [vmem:[%s4 + $0x88] sm:$0xff]
  %v699 = vld [vmem:[%s4 + $0x90] sm:$0xff]
  %v700 = vld [vmem:[%s4 + $0x98] sm:$0xff]
  %v701 = vld [vmem:[%s4 + $0xa0] sm:$0xff]
  %v702 = vld [vmem:[%s4 + $0xa8] sm:$0xff]
  %v703 = vld [vmem:[%s4 + $0xb0] sm:$0xff]
  %v704 = vld [vmem:[%s4 + $0xb8] sm:$0xff]
  %v705 = vld [vmem:[%s4 + $0xc0] sm:$0xff]
  %v706 = vld [vmem:[%s4 + $0xc8] sm:$0xff]
  %v707 = vld [vmem:[%s4 + $0xd0] sm:$0xff]
  %v708 = vld [vmem:[%s4 + $0xd8] sm:$0xff]
  %v709 = vld [vmem:[%s4 + $0xe0] sm:$0xff]
  %v710 = vld [vmem:[%s4 + $0xe8] sm:$0xff]
  %v711 = vld [vmem:[%s4 + $0xf0] sm:$0xff]
  %v712 = vld [vmem:[%s4 + $0xf8] sm:$0xff]
  %v713 = vld [vmem:[%s4 + $0x100] sm:$0xff]
  %v714 = vld [vmem:[%s4 + $0x108] sm:$0xff]
  %v715 = vld [vmem:[%s4 + $0x110] sm:$0xff]
  %v716 = vld [vmem:[%s4 + $0x118] sm:$0xff]
  %v717 = vld [vmem:[%s4 + $0x120] sm:$0xff]
  %v718 = vld [vmem:[%s4 + $0x128] sm:$0xff]
  %v719 = vld [vmem:[%s4 + $0x130] sm:$0xff]
  %v720 = vld [vmem:[%s4 + $0x138] sm:$0xff]
  %v721 = vld [vmem:[%s4 + $0x140] sm:$0xff]
  %v722 = vld [vmem:[%s4 + $0x148] sm:$0xff]
  %v723 = vld [vmem:[%s4 + $0x150] sm:$0xff]
  %v724 = vld [vmem:[%s4 + $0x158] sm:$0xff]
  %v725 = vld [vmem:[%s4 + $0x160] sm:$0xff]
  %v726 = vld [vmem:[%s4 + $0x168] sm:$0xff]
  %v727 = vld [vmem:[%s4 + $0x170] sm:$0xff]
  %v728 = vld [vmem:[%s4 + $0x178] sm:$0xff]
  %v729 = vld [vmem:[%s4 + $0x180] sm:$0xff]
  %v730 = vld [vmem:[%s4 + $0x188] sm:$0xff]
  %v731 = vld [vmem:[%s4 + $0x190] sm:$0xff]
  %v732 = vld [vmem:[%s4 + $0x198] sm:$0xff]
  %v733 = vld [vmem:[%s4 + $0x1a0] sm:$0xff]
  %v734 = vld [vmem:[%s4 + $0x1a8] sm:$0xff]
  %v735 = vld [vmem:[%s4 + $0x1b0] sm:$0xff]
  %v736 = vld [vmem:[%s4 + $0x1b8] sm:$0xff]
  %v737 = vld [vmem:[%s4 + $0x1c0] sm:$0xff]
  %v738 = vld [vmem:[%s4 + $0x1c8] sm:$0xff]
  %v739 = vld [vmem:[%s4 + $0x1d0] sm:$0xff]
  %v740 = vld [vmem:[%s4 + $0x1d8] sm:$0xff]
  %v741 = vld [vmem:[%s4 + $0x1e0] sm:$0xff]
  %v742 = vld [vmem:[%s4 + $0x1e8] sm:$0xff]
  %v743 = vld [vmem:[%s4 + $0x1f0] sm:$0xff]
  %v744 = vld [vmem:[%s4 + $0x1f8] sm:$0xff]
  %745 = vmatprep.subr.mxu0 %v682
  %746 = vmatpush1.msra.mxu0 %v681
  %747 = vmatprep.subr.mxu0 %v686
  %748 = vmatpush1.msra.mxu0 %v685
  %749 = vmatprep.subr.mxu0 %v690
  %750 = vmatpush1.msra.mxu0 %v689
  %751 = vmatprep.subr.mxu0 %v694
  %752 = vmatpush1.msra.mxu0 %v693
  %753 = vmatprep.subr.mxu0 %v698
  %754 = vmatpush1.msra.mxu0 %v697
  %755 = vmatprep.subr.mxu0 %v702
  %756 = vmatpush1.msra.mxu0 %v701
  %757 = vmatprep.subr.mxu0 %v706
  %758 = vmatpush1.msra.mxu0 %v705
  %759 = vmatprep.subr.mxu0 %v710
  %760 = vmatpush1.msra.mxu0 %v709
  %761 = vmatprep.subr.mxu0 %v714
  %762 = vmatpush1.msra.mxu0 %v713
  %763 = vmatprep.subr.mxu0 %v718
  %764 = vmatpush1.msra.mxu0 %v717
  %765 = vmatprep.subr.mxu0 %v722
  %766 = vmatpush1.msra.mxu0 %v721
  %767 = vmatprep.subr.mxu0 %v726
  %768 = vmatpush1.msra.mxu0 %v725
  %769 = vmatprep.subr.mxu0 %v730
  %770 = vmatpush1.msra.mxu0 %v729
  %771 = vmatprep.subr.mxu0 %v734
  %772 = vmatpush1.msra.mxu0 %v733
  %773 = vmatprep.subr.mxu0 %v738
  %774 = vmatpush1.msra.mxu0 %v737
  %775 = vmatprep.subr.mxu0 %v742
  %776 = vmatpush1.msra.mxu0 %v741
  %777 = vmatprep.subr.mxu0 0.0
  %778 = vmatpush1.msra.mxu0 0.0
  %779 = vmatprep.subr.mxu0 0.0
  %780 = vmatpush1.msra.mxu0 0.0
  %781 = vmatprep.subr.mxu0 0.0
  %782 = vmatpush1.msra.mxu0 0.0
  %783 = vmatprep.subr.mxu0 0.0
  %784 = vmatpush1.msra.mxu0 0.0
  %785 = vmatprep.subr.mxu0 0.0
  %786 = vmatpush1.msra.mxu0 0.0
  %787 = vmatprep.subr.mxu0 0.0
  %788 = vmatpush1.msra.mxu0 0.0
  %789 = vmatprep.subr.mxu0 0.0
  %790 = vmatpush1.msra.mxu0 0.0
  %791 = vmatprep.subr.mxu0 0.0
  %792 = vmatpush1.msra.mxu0 0.0
  %793 = vmatprep.subr.mxu0 0.0
  %794 = vmatpush1.msra.mxu0 0.0
  %795 = vmatprep.subr.mxu0 0.0
  %796 = vmatpush1.msra.mxu0 0.0
  %797 = vmatprep.subr.mxu0 0.0
  %798 = vmatpush1.msra.mxu0 0.0
  %799 = vmatprep.subr.mxu0 0.0
  %800 = vmatpush1.msra.mxu0 0.0
  %801 = vmatprep.subr.mxu0 0.0
  %802 = vmatpush1.msra.mxu0 0.0
  %803 = vmatprep.subr.mxu0 0.0
  %804 = vmatpush1.msra.mxu0 0.0
  %805 = vmatprep.subr.mxu0 0.0
  %806 = vmatpush1.msra.mxu0 0.0
  %807 = vmatprep.subr.mxu0 0.0
  %808 = vmatpush1.msra.mxu0 0.0
  %809 = vmatprep.mubr.f32.mxu0 0.0
  %810 = vmatmul.mubr.f32.gmra.mrb[0].mxu0 %v680
  %v811 = vpop.f32.mrb[0].mxu0
  %v812 = vadd.f32 0.0, %v811
  %v813 = vpop.f32.mrb[0].mxu0
  %v814 = vadd.f32 0.0, %v813
  %815 = vdwg.mxu0
  %816 = vmatprep.subr.mxu0 %v684
  %817 = vmatpush1.msra.mxu0 %v683
  %818 = vmatprep.subr.mxu0 %v688
  %819 = vmatpush1.msra.mxu0 %v687
  %820 = vmatprep.subr.mxu0 %v692
  %821 = vmatpush1.msra.mxu0 %v691
  %822 = vmatprep.subr.mxu0 %v696
  %823 = vmatpush1.msra.mxu0 %v695
  %824 = vmatprep.subr.mxu0 %v700
  %825 = vmatpush1.msra.mxu0 %v699
  %826 = vmatprep.subr.mxu0 %v704
  %827 = vmatpush1.msra.mxu0 %v703
  %828 = vmatprep.subr.mxu0 %v708
  %829 = vmatpush1.msra.mxu0 %v707
  %830 = vmatprep.subr.mxu0 %v712
  %831 = vmatpush1.msra.mxu0 %v711
  %832 = vmatprep.subr.mxu0 %v716
  %833 = vmatpush1.msra.mxu0 %v715
  %834 = vmatprep.subr.mxu0 %v720
  %835 = vmatpush1.msra.mxu0 %v719
  %836 = vmatprep.subr.mxu0 %v724
  %837 = vmatpush1.msra.mxu0 %v723
  %838 = vmatprep.subr.mxu0 %v728
  %839 = vmatpush1.msra.mxu0 %v727
  %840 = vmatprep.subr.mxu0 %v732
  %841 = vmatpush1.msra.mxu0 %v731
  %842 = vmatprep.subr.mxu0 %v736
  %843 = vmatpush1.msra.mxu0 %v735
  %844 = vmatprep.subr.mxu0 %v740
  %845 = vmatpush1.msra.mxu0 %v739
  %846 = vmatprep.subr.mxu0 %v744
  %847 = vmatpush1.msra.mxu0 %v743
  %848 = vmatprep.subr.mxu0 0.0
  %849 = vmatpush1.msra.mxu0 0.0
  %850 = vmatprep.subr.mxu0 0.0
  %851 = vmatpush1.msra.mxu0 0.0
  %852 = vmatprep.subr.mxu0 0.0
  %853 = vmatpush1.msra.mxu0 0.0
  %854 = vmatprep.subr.mxu0 0.0
  %855 = vmatpush1.msra.mxu0 0.0
  %856 = vmatprep.subr.mxu0 0.0
  %857 = vmatpush1.msra.mxu0 0.0
  %858 = vmatprep.subr.mxu0 0.0
  %859 = vmatpush1.msra.mxu0 0.0
  %860 = vmatprep.subr.mxu0 0.0
  %861 = vmatpush1.msra.mxu0 0.0
  %862 = vmatprep.subr.mxu0 0.0
  %863 = vmatpush1.msra.mxu0 0.0
  %864 = vmatprep.subr.mxu0 0.0
  %865 = vmatpush1.msra.mxu0 0.0
  %866 = vmatprep.subr.mxu0 0.0
  %867 = vmatpush1.msra.mxu0 0.0
  %868 = vmatprep.subr.mxu0 0.0
  %869 = vmatpush1.msra.mxu0 0.0
  %870 = vmatprep.subr.mxu0 0.0
  %871 = vmatpush1.msra.mxu0 0.0
  %872 = vmatprep.subr.mxu0 0.0
  %873 = vmatpush1.msra.mxu0 0.0
  %874 = vmatprep.subr.mxu0 0.0
  %875 = vmatpush1.msra.mxu0 0.0
  %876 = vmatprep.subr.mxu0 0.0
  %877 = vmatpush1.msra.mxu0 0.0
  %878 = vmatprep.subr.mxu0 0.0
  %879 = vmatpush1.msra.mxu0 0.0
  %880 = vmatprep.mubr.f32.mxu0 0.0
  %881 = vmatmul.mubr.f32.gmra.mrb[0].mxu0 %v680
  %v882 = vpop.f32.mrb[0].mxu0
  %v883 = vadd.f32 0.0, %v882
  %v884 = vpop.f32.mrb[0].mxu0
  %v885 = vadd.f32 0.0, %v884
  %886 = vdwg.mxu0
  %v887 = vadd.f32 %v436, %v812
  %v888 = vadd.f32 %v438, %v814
  %v889 = vadd.f32 %v507, %v883
  %v890 = vadd.f32 %v509, %v885
  %v891 = vxor.u32 %v887, 2147483648
  %v892 = vxor.u32 %v888, 2147483648
  %v893 = vxor.u32 %v889, 2147483648
  %v894 = vmul.f32 %v891, 1.442695
  %v895 = vpow.pop %v894
  %v896 = vmul.f32 %v892, 1.442695
  %v897 = vpow.pop %v896
  %v898 = vmul.f32 %v893, 1.442695
  %v899 = vpow.pop %v898
  %v900 = vadd.f32 %v895, 1.0
  %v901 = vadd.f32 %v897, 1.0
  %v902 = vadd.f32 %v899, 1.0
  %v903 = vrcp.pop %v900
  %v904 = vmul.f32 1.0, %v903
  %v905 = vrcp.pop %v901
  %v906 = vmul.f32 1.0, %v905
  %v907 = vrcp.pop %v902
  %v908 = vmul.f32 1.0, %v907
  %v909 = vtanh.pop %v890
  %v910 = vmul.f32 %v906, 0.0
  %v911 = vmul.f32 %v904, %v909
  %v912 = vadd.f32 %v910, %v911
  %v913 = vtanh.pop %v912
  %v914 = vmul.f32 %v908, %v913
  %915 = vst [vmem:[#allocation2] sm:$0xff] %v914
  %v916 = vld [vmem:[%s5] sm:$0xff]
  %v917 = vld [vmem:[%s5 + $0x8] sm:$0xff]
  %v918 = vld [vmem:[%s5 + $0x10] sm:$0xff]
  %v919 = vld [vmem:[%s5 + $0x18] sm:$0xff]
  %v920 = vld [vmem:[%s5 + $0x20] sm:$0xff]
  %v921 = vld [vmem:[%s5 + $0x28] sm:$0xff]
  %v922 = vld [vmem:[%s5 + $0x30] sm:$0xff]
  %v923 = vld [vmem:[%s5 + $0x38] sm:$0xff]
  %v924 = vld [vmem:[%s5 + $0x40] sm:$0xff]
  %v925 = vld [vmem:[%s5 + $0x48] sm:$0xff]
  %v926 = vld [vmem:[%s5 + $0x50] sm:$0xff]
  %v927 = vld [vmem:[%s5 + $0x58] sm:$0xff]
  %v928 = vld [vmem:[%s5 + $0x60] sm:$0xff]
  %v929 = vld [vmem:[%s5 + $0x68] sm:$0xff]
  %v930 = vld [vmem:[%s5 + $0x70] sm:$0xff]
  %v931 = vld [vmem:[%s5 + $0x78] sm:$0xff]
  %v932 = vld [vmem:[%s5 + $0x80] sm:$0xff]
  %v933 = vld [vmem:[%s5 + $0x88] sm:$0xff]
  %v934 = vld [vmem:[%s5 + $0x90] sm:$0xff]
  %v935 = vld [vmem:[%s5 + $0x98] sm:$0xff]
  %v936 = vld [vmem:[%s5 + $0xa0] sm:$0xff]
  %v937 = vld [vmem:[%s5 + $0xa8] sm:$0xff]
  %v938 = vld [vmem:[%s5 + $0xb0] sm:$0xff]
  %v939 = vld [vmem:[%s5 + $0xb8] sm:$0xff]
  %v940 = vld [vmem:[%s5 + $0xc0] sm:$0xff]
  %v941 = vld [vmem:[%s5 + $0xc8] sm:$0xff]
  %v942 = vld [vmem:[%s5 + $0xd0] sm:$0xff]
  %v943 = vld [vmem:[%s5 + $0xd8] sm:$0xff]
  %v944 = vld [vmem:[%s5 + $0xe0] sm:$0xff]
  %v945 = vld [vmem:[%s5 + $0xe8] sm:$0xff]
  %v946 = vld [vmem:[%s5 + $0xf0] sm:$0xff]
  %v947 = vld [vmem:[%s5 + $0xf8] sm:$0xff]
  %v948 = vld [vmem:[%s5 + $0x100] sm:$0xff]
  %v949 = vld [vmem:[%s5 + $0x108] sm:$0xff]
  %v950 = vld [vmem:[%s5 + $0x110] sm:$0xff]
  %v951 = vld [vmem:[%s5 + $0x118] sm:$0xff]
  %v952 = vld [vmem:[%s5 + $0x120] sm:$0xff]
  %v953 = vld [vmem:[%s5 + $0x128] sm:$0xff]
  %v954 = vld [vmem:[%s5 + $0x130] sm:$0xff]
  %v955 = vld [vmem:[%s5 + $0x138] sm:$0xff]
  %v956 = vld [vmem:[%s5 + $0x140] sm:$0xff]
  %v957 = vld [vmem:[%s5 + $0x148] sm:$0xff]
  %v958 = vld [vmem:[%s5 + $0x150] sm:$0xff]
  %v959 = vld [vmem:[%s5 + $0x158] sm:$0xff]
  %v960 = vld [vmem:[%s5 + $0x160] sm:$0xff]
  %v961 = vld [vmem:[%s5 + $0x168] sm:$0xff]
  %v962 = vld [vmem:[%s5 + $0x170] sm:$0xff]
  %v963 = vld [vmem:[%s5 + $0x178] sm:$0xff]
  %v964 = vld [vmem:[%s5 + $0x180] sm:$0xff]
  %v965 = vld [vmem:[%s5 + $0x188] sm:$0xff]
  %v966 = vld [vmem:[%s5 + $0x190] sm:$0xff]
  %v967 = vld [vmem:[%s5 + $0x198] sm:$0xff]
  %v968 = vld [vmem:[%s5 + $0x1a0] sm:$0xff]
  %v969 = vld [vmem:[%s5 + $0x1a8] sm:$0xff]
  %v970 = vld [vmem:[%s5 + $0x1b0] sm:$0xff]
  %v971 = vld [vmem:[%s5 + $0x1b8] sm:$0xff]
  %v972 = vld [vmem:[%s5 + $0x1c0] sm:$0xff]
  %v973 = vld [vmem:[%s5 + $0x1c8] sm:$0xff]
  %v974 = vld [vmem:[%s5 + $0x1d0] sm:$0xff]
  %v975 = vld [vmem:[%s5 + $0x1d8] sm:$0xff]
  %v976 = vld [vmem:[%s5 + $0x1e0] sm:$0xff]
  %v977 = vld [vmem:[%s5 + $0x1e8] sm:$0xff]
  %v978 = vld [vmem:[%s5 + $0x1f0] sm:$0xff]
  %v979 = vld [vmem:[%s5 + $0x1f8] sm:$0xff]
  %980 = vmatprep.subr.mxu0 %v917
  %981 = vmatpush1.msra.mxu0 %v916
  %982 = vmatprep.subr.mxu0 %v921
  %983 = vmatpush1.msra.mxu0 %v920
  %984 = vmatprep.subr.mxu0 %v925
  %985 = vmatpush1.msra.mxu0 %v924
  %986 = vmatprep.subr.mxu0 %v929
  %987 = vmatpush1.msra.mxu0 %v928
  %988 = vmatprep.subr.mxu0 %v933
  %989 = vmatpush1.msra.mxu0 %v932
  %990 = vmatprep.subr.mxu0 %v937
  %991 = vmatpush1.msra.mxu0 %v936
  %992 = vmatprep.subr.mxu0 %v941
  %993 = vmatpush1.msra.mxu0 %v940
  %994 = vmatprep.subr.mxu0 %v945
  %995 = vmatpush1.msra.mxu0 %v944
  %996 = vmatprep.subr.mxu0 %v949
  %997 = vmatpush1.msra.mxu0 %v948
  %998 = vmatprep.subr.mxu0 %v953
  %999 = vmatpush1.msra.mxu0 %v952
  %1000 = vmatprep.subr.mxu0 %v957
  %1001 = vmatpush1.msra.mxu0 %v956
  %1002 = vmatprep.subr.mxu0 %v961
  %1003 = vmatpush1.msra.mxu0 %v960
  %1004 = vmatprep.subr.mxu0 %v965
  %1005 = vmatpush1.msra.mxu0 %v964
  %1006 = vmatprep.subr.mxu0 %v969
  %1007 = vmatpush1.msra.mxu0 %v968
  %1008 = vmatprep.subr.mxu0 %v973
  %1009 = vmatpush1.msra.mxu0 %v972
  %1010 = vmatprep.subr.mxu0 %v977
  %1011 = vmatpush1.msra.mxu0 %v976
  %1012 = vmatprep.subr.mxu0 0.0
  %1013 = vmatpush1.msra.mxu0 0.0
  %1014 = vmatprep.subr.mxu0 0.0
  %1015 = vmatpush1.msra.mxu0 0.0
  %1016 = vmatprep.subr.mxu0 0.0
  %1017 = vmatpush1.msra.mxu0 0.0
  %1018 = vmatprep.subr.mxu0 0.0
  %1019 = vmatpush1.msra.mxu0 0.0
  %1020 = vmatprep.subr.mxu0 0.0
  %1021 = vmatpush1.msra.mxu0 0.0
  %1022 = vmatprep.subr.mxu0 0.0
  %1023 = vmatpush1.msra.mxu0 0.0
  %1024 = vmatprep.subr.mxu0 0.0
  %1025 = vmatpush1.msra.mxu0 0.0
  %1026 = vmatprep.subr.mxu0 0.0
  %1027 = vmatpush1.msra.mxu0 0.0
  %1028 = vmatprep.subr.mxu0 0.0
  %1029 = vmatpush1.msra.mxu0 0.0
  %1030 = vmatprep.subr.mxu0 0.0
  %1031 = vmatpush1.msra.mxu0 0.0
  %1032 = vmatprep.subr.mxu0 0.0
  %1033 = vmatpush1.msra.mxu0 0.0
  %1034 = vmatprep.subr.mxu0 0.0
  %1035 = vmatpush1.msra.mxu0 0.0
  %1036 = vmatprep.subr.mxu0 0.0
  %1037 = vmatpush1.msra.mxu0 0.0
  %1038 = vmatprep.subr.mxu0 0.0
  %1039 = vmatpush1.msra.mxu0 0.0
  %1040 = vmatprep.subr.mxu0 0.0
  %1041 = vmatpush1.msra.mxu0 0.0
  %1042 = vmatprep.subr.mxu0 0.0
  %1043 = vmatpush1.msra.mxu0 0.0
  %1044 = vmatprep.mubr.f32.mxu0 0.0
  %1045 = vmatmul.mubr.f32.gmra.mrb[0].mxu0 %v914
  %v1046 = vpop.f32.mrb[0].mxu0
  %v1047 = vadd.f32 %v288, %v1046
  %v1048 = vpop.f32.mrb[0].mxu0
  %v1049 = vadd.f32 %v292, %v1048
  %1050 = vdwg.mxu0
  %1051 = vmatprep.subr.mxu0 %v919
  %1052 = vmatpush1.msra.mxu0 %v918
  %1053 = vmatprep.subr.mxu0 %v923
  %1054 = vmatpush1.msra.mxu0 %v922
  %1055 = vmatprep.subr.mxu0 %v927
  %1056 = vmatpush1.msra.mxu0 %v926
  %1057 = vmatprep.subr.mxu0 %v931
  %1058 = vmatpush1.msra.mxu0 %v930
  %1059 = vmatprep.subr.mxu0 %v935
  %1060 = vmatpush1.msra.mxu0 %v934
  %1061 = vmatprep.subr.mxu0 %v939
  %1062 = vmatpush1.msra.mxu0 %v938
  %1063 = vmatprep.subr.mxu0 %v943
  %1064 = vmatpush1.msra.mxu0 %v942
  %1065 = vmatprep.subr.mxu0 %v947
  %1066 = vmatpush1.msra.mxu0 %v946
  %1067 = vmatprep.subr.mxu0 %v951
  %1068 = vmatpush1.msra.mxu0 %v950
  %1069 = vmatprep.subr.mxu0 %v955
  %1070 = vmatpush1.msra.mxu0 %v954
  %1071 = vmatprep.subr.mxu0 %v959
  %1072 = vmatpush1.msra.mxu0 %v958
  %1073 = vmatprep.subr.mxu0 %v963
  %1074 = vmatpush1.msra.mxu0 %v962
  %1075 = vmatprep.subr.mxu0 %v967
  %1076 = vmatpush1.msra.mxu0 %v966
  %1077 = vmatprep.subr.mxu0 %v971
  %1078 = vmatpush1.msra.mxu0 %v970
  %1079 = vmatprep.subr.mxu0 %v975
  %1080 = vmatpush1.msra.mxu0 %v974
  %1081 = vmatprep.subr.mxu0 %v979
  %1082 = vmatpush1.msra.mxu0 %v978
  %1083 = vmatprep.subr.mxu0 0.0
  %1084 = vmatpush1.msra.mxu0 0.0
  %1085 = vmatprep.subr.mxu0 0.0
  %1086 = vmatpush1.msra.mxu0 0.0
  %1087 = vmatprep.subr.mxu0 0.0
  %1088 = vmatpush1.msra.mxu0 0.0
  %1089 = vmatprep.subr.mxu0 0.0
  %1090 = vmatpush1.msra.mxu0 0.0
  %1091 = vmatprep.subr.mxu0 0.0
  %1092 = vmatpush1.msra.mxu0 0.0
  %1093 = vmatprep.subr.mxu0 0.0
  %1094 = vmatpush1.msra.mxu0 0.0
  %1095 = vmatprep.subr.mxu0 0.0
  %1096 = vmatpush1.msra.mxu0 0.0
  %1097 = vmatprep.subr.mxu0 0.0
  %1098 = vmatpush1.msra.mxu0 0.0
  %1099 = vmatprep.subr.mxu0 0.0
  %1100 = vmatpush1.msra.mxu0 0.0
  %1101 = vmatprep.subr.mxu0 0.0
  %1102 = vmatpush1.msra.mxu0 0.0
  %1103 = vmatprep.subr.mxu0 0.0
  %1104 = vmatpush1.msra.mxu0 0.0
  %1105 = vmatprep.subr.mxu0 0.0
  %1106 = vmatpush1.msra.mxu0 0.0
  %1107 = vmatprep.subr.mxu0 0.0
  %1108 = vmatpush1.msra.mxu0 0.0
  %1109 = vmatprep.subr.mxu0 0.0
  %1110 = vmatpush1.msra.mxu0 0.0
  %1111 = vmatprep.subr.mxu0 0.0
  %1112 = vmatpush1.msra.mxu0 0.0
  %1113 = vmatprep.subr.mxu0 0.0
  %1114 = vmatpush1.msra.mxu0 0.0
  %1115 = vmatprep.mubr.f32.mxu0 0.0
  %1116 = vmatmul.mubr.f32.gmra.mrb[0].mxu0 %v914
  %v1117 = vpop.f32.mrb[0].mxu0
  %v1118 = vadd.f32 %v296, %v1117
  %v1119 = vpop.f32.mrb[0].mxu0
  %v1120 = vadd.f32 %v300, %v1119
  %1121 = vdwg.mxu0
  %1122 = vmatprep.subr.mxu0 %v220
  %1123 = vmatpush1.msra.mxu0 %v219
  %1124 = vmatprep.subr.mxu0 %v224
  %1125 = vmatpush1.msra.mxu0 %v223
  %1126 = vmatprep.subr.mxu0 %v228
  %1127 = vmatpush1.msra.mxu0 %v227
  %1128 = vmatprep.subr.mxu0 %v232
  %1129 = vmatpush1.msra.mxu0 %v231
  %1130 = vmatprep.subr.mxu0 %v236
  %1131 = vmatpush1.msra.mxu0 %v235
  %1132 = vmatprep.subr.mxu0 %v240
  %1133 = vmatpush1.msra.mxu0 %v239
  %1134 = vmatprep.subr.mxu0 %v244
  %1135 = vmatpush1.msra.mxu0 %v243
  %1136 = vmatprep.subr.mxu0 %v248
  %1137 = vmatpush1.msra.mxu0 %v247
  %1138 = vmatprep.subr.mxu0 %v252
  %1139 = vmatpush1.msra.mxu0 %v251
  %1140 = vmatprep.subr.mxu0 %v256
  %1141 = vmatpush1.msra.mxu0 %v255
  %1142 = vmatprep.subr.mxu0 %v260
  %1143 = vmatpush1.msra.mxu0 %v259
  %1144 = vmatprep.subr.mxu0 %v264
  %1145 = vmatpush1.msra.mxu0 %v263
  %1146 = vmatprep.subr.mxu0 %v268
  %1147 = vmatpush1.msra.mxu0 %v267
  %1148 = vmatprep.subr.mxu0 %v272
  %1149 = vmatpush1.msra.mxu0 %v271
  %1150 = vmatprep.subr.mxu0 %v276
  %1151 = vmatpush1.msra.mxu0 %v275
  %1152 = vmatprep.subr.mxu0 %v280
  %1153 = vmatpush1.msra.mxu0 %v279
  %1154 = vmatprep.subr.mxu0 0.0
  %1155 = vmatpush1.msra.mxu0 0.0
  %1156 = vmatprep.subr.mxu0 0.0
  %1157 = vmatpush1.msra.mxu0 0.0
  %1158 = vmatprep.subr.mxu0 0.0
  %1159 = vmatpush1.msra.mxu0 0.0
  %1160 = vmatprep.subr.mxu0 0.0
  %1161 = vmatpush1.msra.mxu0 0.0
  %1162 = vmatprep.subr.mxu0 0.0
  %1163 = vmatpush1.msra.mxu0 0.0
  %1164 = vmatprep.subr.mxu0 0.0
  %1165 = vmatpush1.msra.mxu0 0.0
  %1166 = vmatprep.subr.mxu0 0.0
  %1167 = vmatpush1.msra.mxu0 0.0
  %1168 = vmatprep.subr.mxu0 0.0
  %1169 = vmatpush1.msra.mxu0 0.0
  %1170 = vmatprep.subr.mxu0 0.0
  %1171 = vmatpush1.msra.mxu0 0.0
  %1172 = vmatprep.subr.mxu0 0.0
  %1173 = vmatpush1.msra.mxu0 0.0
  %1174 = vmatprep.subr.mxu0 0.0
  %1175 = vmatpush1.msra.mxu0 0.0
  %1176 = vmatprep.subr.mxu0 0.0
  %1177 = vmatpush1.msra.mxu0 0.0
  %1178 = vmatprep.subr.mxu0 0.0
  %1179 = vmatpush1.msra.mxu0 0.0
  %1180 = vmatprep.subr.mxu0 0.0
  %1181 = vmatpush1.msra.mxu0 0.0
  %1182 = vmatprep.subr.mxu0 0.0
  %1183 = vmatpush1.msra.mxu0 0.0
  %1184 = vmatprep.subr.mxu0 0.0
  %1185 = vmatpush1.msra.mxu0 0.0
  %1186 = vmatprep.mubr.f32.mxu0 0.0
  %1187 = vmatmul.mubr.f32.gmra.mrb[0].mxu0 %v680
  %v1188 = vpop.f32.mrb[0].mxu0
  %v1189 = vadd.f32 0.0, %v1188
  %v1190 = vpop.f32.mrb[0].mxu0
  %v1191 = vadd.f32 0.0, %v1190
  %1192 = vdwg.mxu0
  %1193 = vmatprep.subr.mxu0 %v222
  %1194 = vmatpush1.msra.mxu0 %v221
  %1195 = vmatprep.subr.mxu0 %v226
  %1196 = vmatpush1.msra.mxu0 %v225
  %1197 = vmatprep.subr.mxu0 %v230
  %1198 = vmatpush1.msra.mxu0 %v229
  %1199 = vmatprep.subr.mxu0 %v234
  %1200 = vmatpush1.msra.mxu0 %v233
  %1201 = vmatprep.subr.mxu0 %v238
  %1202 = vmatpush1.msra.mxu0 %v237
  %1203 = vmatprep.subr.mxu0 %v242
  %1204 = vmatpush1.msra.mxu0 %v241
  %1205 = vmatprep.subr.mxu0 %v246
  %1206 = vmatpush1.msra.mxu0 %v245
  %1207 = vmatprep.subr.mxu0 %v250
  %1208 = vmatpush1.msra.mxu0 %v249
  %1209 = vmatprep.subr.mxu0 %v254
  %1210 = vmatpush1.msra.mxu0 %v253
  %1211 = vmatprep.subr.mxu0 %v258
  %1212 = vmatpush1.msra.mxu0 %v257
  %1213 = vmatprep.subr.mxu0 %v262
  %1214 = vmatpush1.msra.mxu0 %v261
  %1215 = vmatprep.subr.mxu0 %v266
  %1216 = vmatpush1.msra.mxu0 %v265
  %1217 = vmatprep.subr.mxu0 %v270
  %1218 = vmatpush1.msra.mxu0 %v269
  %1219 = vmatprep.subr.mxu0 %v274
  %1220 = vmatpush1.msra.mxu0 %v273
  %1221 = vmatprep.subr.mxu0 %v278
  %1222 = vmatpush1.msra.mxu0 %v277
  %1223 = vmatprep.subr.mxu0 %v282
  %1224 = vmatpush1.msra.mxu0 %v281
  %1225 = vmatprep.subr.mxu0 0.0
  %1226 = vmatpush1.msra.mxu0 0.0
  %1227 = vmatprep.subr.mxu0 0.0
  %1228 = vmatpush1.msra.mxu0 0.0
  %1229 = vmatprep.subr.mxu0 0.0
  %1230 = vmatpush1.msra.mxu0 0.0
  %1231 = vmatprep.subr.mxu0 0.0
  %1232 = vmatpush1.msra.mxu0 0.0
  %1233 = vmatprep.subr.mxu0 0.0
  %1234 = vmatpush1.msra.mxu0 0.0
  %1235 = vmatprep.subr.mxu0 0.0
  %1236 = vmatpush1.msra.mxu0 0.0
  %1237 = vmatprep.subr.mxu0 0.0
  %1238 = vmatpush1.msra.mxu0 0.0
  %1239 = vmatprep.subr.mxu0 0.0
  %1240 = vmatpush1.msra.mxu0 0.0
  %1241 = vmatprep.subr.mxu0 0.0
  %1242 = vmatpush1.msra.mxu0 0.0
  %1243 = vmatprep.subr.mxu0 0.0
  %1244 = vmatpush1.msra.mxu0 0.0
  %1245 = vmatprep.subr.mxu0 0.0
  %1246 = vmatpush1.msra.mxu0 0.0
  %1247 = vmatprep.subr.mxu0 0.0
  %1248 = vmatpush1.msra.mxu0 0.0
  %1249 = vmatprep.subr.mxu0 0.0
  %1250 = vmatpush1.msra.mxu0 0.0
  %1251 = vmatprep.subr.mxu0 0.0
  %1252 = vmatpush1.msra.mxu0 0.0
  %1253 = vmatprep.subr.mxu0 0.0
  %1254 = vmatpush1.msra.mxu0 0.0
  %1255 = vmatprep.subr.mxu0 0.0
  %1256 = vmatpush1.msra.mxu0 0.0
  %1257 = vmatprep.mubr.f32.mxu0 0.0
  %1258 = vmatmul.mubr.f32.gmra.mrb[0].mxu0 %v680
  %v1259 = vpop.f32.mrb[0].mxu0
  %v1260 = vadd.f32 0.0, %v1259
  %v1261 = vpop.f32.mrb[0].mxu0
  %v1262 = vadd.f32 0.0, %v1261
  %1263 = vdwg.mxu0
  %v1264 = vadd.f32 %v144, %v1189
  %v1265 = vadd.f32 %v146, %v1191
  %v1266 = vadd.f32 %v215, %v1260
  %v1267 = vadd.f32 %v217, %v1262
  %v1268 = vxor.u32 %v1264, 2147483648
  %v1269 = vxor.u32 %v1265, 2147483648
  %v1270 = vxor.u32 %v1266, 2147483648
  %v1271 = vmul.f32 %v1268, 1.442695
  %v1272 = vpow.pop %v1271
  %v1273 = vmul.f32 %v1269, 1.442695
  %v1274 = vpow.pop %v1273
  %v1275 = vmul.f32 %v1270, 1.442695
  %v1276 = vpow.pop %v1275
  %v1277 = vadd.f32 %v1272, 1.0
  %v1278 = vadd.f32 %v1274, 1.0
  %v1279 = vadd.f32 %v1276, 1.0
  %v1280 = vrcp.pop %v1277
  %v1281 = vmul.f32 1.0, %v1280
  %v1282 = vrcp.pop %v1278
  %v1283 = vmul.f32 1.0, %v1282
  %v1284 = vrcp.pop %v1279
  %v1285 = vmul.f32 1.0, %v1284
  %v1286 = vtanh.pop %v1267
  %v1287 = vmul.f32 %v1283, %v678
  %v1288 = vmul.f32 %v1281, %v1286
  %v1289 = vadd.f32 %v1287, %v1288
  %v1290 = vtanh.pop %v1289
  %v1291 = vmul.f32 %v1285, %v1290
  %v1292 = vld [vmem:[%s4] sm:$0xff]
  %v1293 = vld [vmem:[%s4 + $0x8] sm:$0xff]
  %v1294 = vld [vmem:[%s4 + $0x10] sm:$0xff]
  %v1295 = vld [vmem:[%s4 + $0x18] sm:$0xff]
  %v1296 = vld [vmem:[%s4 + $0x20] sm:$0xff]
  %v1297 = vld [vmem:[%s4 + $0x28] sm:$0xff]
  %v1298 = vld [vmem:[%s4 + $0x30] sm:$0xff]
  %v1299 = vld [vmem:[%s4 + $0x38] sm:$0xff]
  %v1300 = vld [vmem:[%s4 + $0x40] sm:$0xff]
  %v1301 = vld [vmem:[%s4 + $0x48] sm:$0xff]
  %v1302 = vld [vmem:[%s4 + $0x50] sm:$0xff]
  %v1303 = vld [vmem:[%s4 + $0x58] sm:$0xff]
  %v1304 = vld [vmem:[%s4 + $0x60] sm:$0xff]
  %v1305 = vld [vmem:[%s4 + $0x68] sm:$0xff]
  %v1306 = vld [vmem:[%s4 + $0x70] sm:$0xff]
  %v1307 = vld [vmem:[%s4 + $0x78] sm:$0xff]
  %v1308 = vld [vmem:[%s4 + $0x80] sm:$0xff]
  %v1309 = vld [vmem:[%s4 + $0x88] sm:$0xff]
  %v1310 = vld [vmem:[%s4 + $0x90] sm:$0xff]
  %v1311 = vld [vmem:[%s4 + $0x98] sm:$0xff]
  %v1312 = vld [vmem:[%s4 + $0xa0] sm:$0xff]
  %v1313 = vld [vmem:[%s4 + $0xa8] sm:$0xff]
  %v1314 = vld [vmem:[%s4 + $0xb0] sm:$0xff]
  %v1315 = vld [vmem:[%s4 + $0xb8] sm:$0xff]
  %v1316 = vld [vmem:[%s4 + $0xc0] sm:$0xff]
  %v1317 = vld [vmem:[%s4 + $0xc8] sm:$0xff]
  %v1318 = vld [vmem:[%s4 + $0xd0] sm:$0xff]
  %v1319 = vld [vmem:[%s4 + $0xd8] sm:$0xff]
  %v1320 = vld [vmem:[%s4 + $0xe0] sm:$0xff]
  %v1321 = vld [vmem:[%s4 + $0xe8] sm:$0xff]
  %v1322 = vld [vmem:[%s4 + $0xf0] sm:$0xff]
  %v1323 = vld [vmem:[%s4 + $0xf8] sm:$0xff]
  %v1324 = vld [vmem:[%s4 + $0x100] sm:$0xff]
  %v1325 = vld [vmem:[%s4 + $0x108] sm:$0xff]
  %v1326 = vld [vmem:[%s4 + $0x110] sm:$0xff]
  %v1327 = vld [vmem:[%s4 + $0x118] sm:$0xff]
  %v1328 = vld [vmem:[%s4 + $0x120] sm:$0xff]
  %v1329 = vld [vmem:[%s4 + $0x128] sm:$0xff]
  %v1330 = vld [vmem:[%s4 + $0x130] sm:$0xff]
  %v1331 = vld [vmem:[%s4 + $0x138] sm:$0xff]
  %v1332 = vld [vmem:[%s4 + $0x140] sm:$0xff]
  %v1333 = vld [vmem:[%s4 + $0x148] sm:$0xff]
  %v1334 = vld [vmem:[%s4 + $0x150] sm:$0xff]
  %v1335 = vld [vmem:[%s4 + $0x158] sm:$0xff]
  %v1336 = vld [vmem:[%s4 + $0x160] sm:$0xff]
  %v1337 = vld [vmem:[%s4 + $0x168] sm:$0xff]
  %v1338 = vld [vmem:[%s4 + $0x170] sm:$0xff]
  %v1339 = vld [vmem:[%s4 + $0x178] sm:$0xff]
  %v1340 = vld [vmem:[%s4 + $0x180] sm:$0xff]
  %v1341 = vld [vmem:[%s4 + $0x188] sm:$0xff]
  %v1342 = vld [vmem:[%s4 + $0x190] sm:$0xff]
  %v1343 = vld [vmem:[%s4 + $0x198] sm:$0xff]
  %v1344 = vld [vmem:[%s4 + $0x1a0] sm:$0xff]
  %v1345 = vld [vmem:[%s4 + $0x1a8] sm:$0xff]
  %v1346 = vld [vmem:[%s4 + $0x1b0] sm:$0xff]
  %v1347 = vld [vmem:[%s4 + $0x1b8] sm:$0xff]
  %v1348 = vld [vmem:[%s4 + $0x1c0] sm:$0xff]
  %v1349 = vld [vmem:[%s4 + $0x1c8] sm:$0xff]
  %v1350 = vld [vmem:[%s4 + $0x1d0] sm:$0xff]
  %v1351 = vld [vmem:[%s4 + $0x1d8] sm:$0xff]
  %v1352 = vld [vmem:[%s4 + $0x1e0] sm:$0xff]
  %v1353 = vld [vmem:[%s4 + $0x1e8] sm:$0xff]
  %v1354 = vld [vmem:[%s4 + $0x1f0] sm:$0xff]
  %v1355 = vld [vmem:[%s4 + $0x1f8] sm:$0xff]
  %1356 = vmatprep.subr.mxu0 %v1293
  %1357 = vmatpush1.msra.mxu0 %v1292
  %1358 = vmatprep.subr.mxu0 %v1297
  %1359 = vmatpush1.msra.mxu0 %v1296
  %1360 = vmatprep.subr.mxu0 %v1301
  %1361 = vmatpush1.msra.mxu0 %v1300
  %1362 = vmatprep.subr.mxu0 %v1305
  %1363 = vmatpush1.msra.mxu0 %v1304
  %1364 = vmatprep.subr.mxu0 %v1309
  %1365 = vmatpush1.msra.mxu0 %v1308
  %1366 = vmatprep.subr.mxu0 %v1313
  %1367 = vmatpush1.msra.mxu0 %v1312
  %1368 = vmatprep.subr.mxu0 %v1317
  %1369 = vmatpush1.msra.mxu0 %v1316
  %1370 = vmatprep.subr.mxu0 %v1321
  %1371 = vmatpush1.msra.mxu0 %v1320
  %1372 = vmatprep.subr.mxu0 %v1325
  %1373 = vmatpush1.msra.mxu0 %v1324
  %1374 = vmatprep.subr.mxu0 %v1329
  %1375 = vmatpush1.msra.mxu0 %v1328
  %1376 = vmatprep.subr.mxu0 %v1333
  %1377 = vmatpush1.msra.mxu0 %v1332
  %1378 = vmatprep.subr.mxu0 %v1337
  %1379 = vmatpush1.msra.mxu0 %v1336
  %1380 = vmatprep.subr.mxu0 %v1341
  %1381 = vmatpush1.msra.mxu0 %v1340
  %1382 = vmatprep.subr.mxu0 %v1345
  %1383 = vmatpush1.msra.mxu0 %v1344
  %1384 = vmatprep.subr.mxu0 %v1349
  %1385 = vmatpush1.msra.mxu0 %v1348
  %1386 = vmatprep.subr.mxu0 %v1353
  %1387 = vmatpush1.msra.mxu0 %v1352
  %1388 = vmatprep.subr.mxu0 0.0
  %1389 = vmatpush1.msra.mxu0 0.0
  %1390 = vmatprep.subr.mxu0 0.0
  %1391 = vmatpush1.msra.mxu0 0.0
  %1392 = vmatprep.subr.mxu0 0.0
  %1393 = vmatpush1.msra.mxu0 0.0
  %1394 = vmatprep.subr.mxu0 0.0
  %1395 = vmatpush1.msra.mxu0 0.0
  %1396 = vmatprep.subr.mxu0 0.0
  %1397 = vmatpush1.msra.mxu0 0.0
  %1398 = vmatprep.subr.mxu0 0.0
  %1399 = vmatpush1.msra.mxu0 0.0
  %1400 = vmatprep.subr.mxu0 0.0
  %1401 = vmatpush1.msra.mxu0 0.0
  %1402 = vmatprep.subr.mxu0 0.0
  %1403 = vmatpush1.msra.mxu0 0.0
  %1404 = vmatprep.subr.mxu0 0.0
  %1405 = vmatpush1.msra.mxu0 0.0
  %1406 = vmatprep.subr.mxu0 0.0
  %1407 = vmatpush1.msra.mxu0 0.0
  %1408 = vmatprep.subr.mxu0 0.0
  %1409 = vmatpush1.msra.mxu0 0.0
  %1410 = vmatprep.subr.mxu0 0.0
  %1411 = vmatpush1.msra.mxu0 0.0
  %1412 = vmatprep.subr.mxu0 0.0
  %1413 = vmatpush1.msra.mxu0 0.0
  %1414 = vmatprep.subr.mxu0 0.0
  %1415 = vmatpush1.msra.mxu0 0.0
  %1416 = vmatprep.subr.mxu0 0.0
  %1417 = vmatpush1.msra.mxu0 0.0
  %1418 = vmatprep.subr.mxu0 0.0
  %1419 = vmatpush1.msra.mxu0 0.0
  %1420 = vmatprep.mubr.f32.mxu0 0.0
  %1421 = vmatmul.mubr.f32.gmra.mrb[0].mxu0 %v1291
  %v1422 = vpop.f32.mrb[0].mxu0
  %v1423 = vadd.f32 0.0, %v1422
  %v1424 = vpop.f32.mrb[0].mxu0
  %v1425 = vadd.f32 0.0, %v1424
  %1426 = vdwg.mxu0
  %1427 = vmatprep.subr.mxu0 %v1295
  %1428 = vmatpush1.msra.mxu0 %v1294
  %1429 = vmatprep.subr.mxu0 %v1299
  %1430 = vmatpush1.msra.mxu0 %v1298
  %1431 = vmatprep.subr.mxu0 %v1303
  %1432 = vmatpush1.msra.mxu0 %v1302
  %1433 = vmatprep.subr.mxu0 %v1307
  %1434 = vmatpush1.msra.mxu0 %v1306
  %1435 = vmatprep.subr.mxu0 %v1311
  %1436 = vmatpush1.msra.mxu0 %v1310
  %1437 = vmatprep.subr.mxu0 %v1315
  %1438 = vmatpush1.msra.mxu0 %v1314
  %1439 = vmatprep.subr.mxu0 %v1319
  %1440 = vmatpush1.msra.mxu0 %v1318
  %1441 = vmatprep.subr.mxu0 %v1323
  %1442 = vmatpush1.msra.mxu0 %v1322
  %1443 = vmatprep.subr.mxu0 %v1327
  %1444 = vmatpush1.msra.mxu0 %v1326
  %1445 = vmatprep.subr.mxu0 %v1331
  %1446 = vmatpush1.msra.mxu0 %v1330
  %1447 = vmatprep.subr.mxu0 %v1335
  %1448 = vmatpush1.msra.mxu0 %v1334
  %1449 = vmatprep.subr.mxu0 %v1339
  %1450 = vmatpush1.msra.mxu0 %v1338
  %1451 = vmatprep.subr.mxu0 %v1343
  %1452 = vmatpush1.msra.mxu0 %v1342
  %1453 = vmatprep.subr.mxu0 %v1347
  %1454 = vmatpush1.msra.mxu0 %v1346
  %1455 = vmatprep.subr.mxu0 %v1351
  %1456 = vmatpush1.msra.mxu0 %v1350
  %1457 = vmatprep.subr.mxu0 %v1355
  %1458 = vmatpush1.msra.mxu0 %v1354
  %1459 = vmatprep.subr.mxu0 0.0
  %1460 = vmatpush1.msra.mxu0 0.0
  %1461 = vmatprep.subr.mxu0 0.0
  %1462 = vmatpush1.msra.mxu0 0.0
  %1463 = vmatprep.subr.mxu0 0.0
  %1464 = vmatpush1.msra.mxu0 0.0
  %1465 = vmatprep.subr.mxu0 0.0
  %1466 = vmatpush1.msra.mxu0 0.0
  %1467 = vmatprep.subr.mxu0 0.0
  %1468 = vmatpush1.msra.mxu0 0.0
  %1469 = vmatprep.subr.mxu0 0.0
  %1470 = vmatpush1.msra.mxu0 0.0
  %1471 = vmatprep.subr.mxu0 0.0
  %1472 = vmatpush1.msra.mxu0 0.0
  %1473 = vmatprep.subr.mxu0 0.0
  %1474 = vmatpush1.msra.mxu0 0.0
  %1475 = vmatprep.subr.mxu0 0.0
  %1476 = vmatpush1.msra.mxu0 0.0
  %1477 = vmatprep.subr.mxu0 0.0
  %1478 = vmatpush1.msra.mxu0 0.0
  %1479 = vmatprep.subr.mxu0 0.0
  %1480 = vmatpush1.msra.mxu0 0.0
  %1481 = vmatprep.subr.mxu0 0.0
  %1482 = vmatpush1.msra.mxu0 0.0
  %1483 = vmatprep.subr.mxu0 0.0
  %1484 = vmatpush1.msra.mxu0 0.0
  %1485 = vmatprep.subr.mxu0 0.0
  %1486 = vmatpush1.msra.mxu0 0.0
  %1487 = vmatprep.subr.mxu0 0.0
  %1488 = vmatpush1.msra.mxu0 0.0
  %1489 = vmatprep.subr.mxu0 0.0
  %1490 = vmatpush1.msra.mxu0 0.0
  %1491 = vmatprep.mubr.f32.mxu0 0.0
  %1492 = vmatmul.mubr.f32.gmra.mrb[0].mxu0 %v1291
  %v1493 = vpop.f32.mrb[0].mxu0
  %v1494 = vadd.f32 0.0, %v1493
  %v1495 = vpop.f32.mrb[0].mxu0
  %v1496 = vadd.f32 0.0, %v1495
  %1497 = vdwg.mxu0
  %v1498 = vadd.f32 %v1047, %v1423
  %v1499 = vadd.f32 %v1049, %v1425
  %v1500 = vadd.f32 %v1118, %v1494
  %v1501 = vadd.f32 %v1120, %v1496
  %v1502 = vxor.u32 %v1498, 2147483648
  %v1503 = vxor.u32 %v1499, 2147483648
  %v1504 = vxor.u32 %v1500, 2147483648
  %v1505 = vmul.f32 %v1502, 1.442695
  %v1506 = vpow.pop %v1505
  %v1507 = vmul.f32 %v1503, 1.442695
  %v1508 = vpow.pop %v1507
  %v1509 = vmul.f32 %v1504, 1.442695
  %v1510 = vpow.pop %v1509
  %v1511 = vadd.f32 %v1506, 1.0
  %v1512 = vadd.f32 %v1508, 1.0
  %v1513 = vadd.f32 %v1510, 1.0
  %v1514 = vrcp.pop %v1511
  %v1515 = vmul.f32 1.0, %v1514
  %v1516 = vrcp.pop %v1512
  %v1517 = vmul.f32 1.0, %v1516
  %v1518 = vrcp.pop %v1513
  %v1519 = vmul.f32 1.0, %v1518
  %v1520 = vtanh.pop %v1501
  %v1521 = vmul.f32 %v1517, %v912
  %v1522 = vmul.f32 %v1515, %v1520
  %v1523 = vadd.f32 %v1521, %v1522
  %v1524 = vtanh.pop %v1523
  %v1525 = vmul.f32 %v1519, %v1524
  %1526 = vst [vmem:[#allocation2 + $0x8] sm:$0xff] %v1525
  %v1527 = vld [vmem:[%s5] sm:$0xff]
  %v1528 = vld [vmem:[%s5 + $0x8] sm:$0xff]
  %v1529 = vld [vmem:[%s5 + $0x10] sm:$0xff]
  %v1530 = vld [vmem:[%s5 + $0x18] sm:$0xff]
  %v1531 = vld [vmem:[%s5 + $0x20] sm:$0xff]
  %v1532 = vld [vmem:[%s5 + $0x28] sm:$0xff]
  %v1533 = vld [vmem:[%s5 + $0x30] sm:$0xff]
  %v1534 = vld [vmem:[%s5 + $0x38] sm:$0xff]
  %v1535 = vld [vmem:[%s5 + $0x40] sm:$0xff]
  %v1536 = vld [vmem:[%s5 + $0x48] sm:$0xff]
  %v1537 = vld [vmem:[%s5 + $0x50] sm:$0xff]
  %v1538 = vld [vmem:[%s5 + $0x58] sm:$0xff]
  %v1539 = vld [vmem:[%s5 + $0x60] sm:$0xff]
  %v1540 = vld [vmem:[%s5 + $0x68] sm:$0xff]
  %v1541 = vld [vmem:[%s5 + $0x70] sm:$0xff]
  %v1542 = vld [vmem:[%s5 + $0x78] sm:$0xff]
  %v1543 = vld [vmem:[%s5 + $0x80] sm:$0xff]
  %v1544 = vld [vmem:[%s5 + $0x88] sm:$0xff]
  %v1545 = vld [vmem:[%s5 + $0x90] sm:$0xff]
  %v1546 = vld [vmem:[%s5 + $0x98] sm:$0xff]
  %v1547 = vld [vmem:[%s5 + $0xa0] sm:$0xff]
  %v1548 = vld [vmem:[%s5 + $0xa8] sm:$0xff]
  %v1549 = vld [vmem:[%s5 + $0xb0] sm:$0xff]
  %v1550 = vld [vmem:[%s5 + $0xb8] sm:$0xff]
  %v1551 = vld [vmem:[%s5 + $0xc0] sm:$0xff]
  %v1552 = vld [vmem:[%s5 + $0xc8] sm:$0xff]
  %v1553 = vld [vmem:[%s5 + $0xd0] sm:$0xff]
  %v1554 = vld [vmem:[%s5 + $0xd8] sm:$0xff]
  %v1555 = vld [vmem:[%s5 + $0xe0] sm:$0xff]
  %v1556 = vld [vmem:[%s5 + $0xe8] sm:$0xff]
  %v1557 = vld [vmem:[%s5 + $0xf0] sm:$0xff]
  %v1558 = vld [vmem:[%s5 + $0xf8] sm:$0xff]
  %v1559 = vld [vmem:[%s5 + $0x100] sm:$0xff]
  %v1560 = vld [vmem:[%s5 + $0x108] sm:$0xff]
  %v1561 = vld [vmem:[%s5 + $0x110] sm:$0xff]
  %v1562 = vld [vmem:[%s5 + $0x118] sm:$0xff]
  %v1563 = vld [vmem:[%s5 + $0x120] sm:$0xff]
  %v1564 = vld [vmem:[%s5 + $0x128] sm:$0xff]
  %v1565 = vld [vmem:[%s5 + $0x130] sm:$0xff]
  %v1566 = vld [vmem:[%s5 + $0x138] sm:$0xff]
  %v1567 = vld [vmem:[%s5 + $0x140] sm:$0xff]
  %v1568 = vld [vmem:[%s5 + $0x148] sm:$0xff]
  %v1569 = vld [vmem:[%s5 + $0x150] sm:$0xff]
  %v1570 = vld [vmem:[%s5 + $0x158] sm:$0xff]
  %v1571 = vld [vmem:[%s5 + $0x160] sm:$0xff]
  %v1572 = vld [vmem:[%s5 + $0x168] sm:$0xff]
  %v1573 = vld [vmem:[%s5 + $0x170] sm:$0xff]
  %v1574 = vld [vmem:[%s5 + $0x178] sm:$0xff]
  %v1575 = vld [vmem:[%s5 + $0x180] sm:$0xff]
  %v1576 = vld [vmem:[%s5 + $0x188] sm:$0xff]
  %v1577 = vld [vmem:[%s5 + $0x190] sm:$0xff]
  %v1578 = vld [vmem:[%s5 + $0x198] sm:$0xff]
  %v1579 = vld [vmem:[%s5 + $0x1a0] sm:$0xff]
  %v1580 = vld [vmem:[%s5 + $0x1a8] sm:$0xff]
  %v1581 = vld [vmem:[%s5 + $0x1b0] sm:$0xff]
  %v1582 = vld [vmem:[%s5 + $0x1b8] sm:$0xff]
  %v1583 = vld [vmem:[%s5 + $0x1c0] sm:$0xff]
  %v1584 = vld [vmem:[%s5 + $0x1c8] sm:$0xff]
  %v1585 = vld [vmem:[%s5 + $0x1d0] sm:$0xff]
  %v1586 = vld [vmem:[%s5 + $0x1d8] sm:$0xff]
  %v1587 = vld [vmem:[%s5 + $0x1e0] sm:$0xff]
  %v1588 = vld [vmem:[%s5 + $0x1e8] sm:$0xff]
  %v1589 = vld [vmem:[%s5 + $0x1f0] sm:$0xff]
  %v1590 = vld [vmem:[%s5 + $0x1f8] sm:$0xff]
  %1591 = vmatprep.subr.mxu0 %v1528
  %1592 = vmatpush1.msra.mxu0 %v1527
  %1593 = vmatprep.subr.mxu0 %v1532
  %1594 = vmatpush1.msra.mxu0 %v1531
  %1595 = vmatprep.subr.mxu0 %v1536
  %1596 = vmatpush1.msra.mxu0 %v1535
  %1597 = vmatprep.subr.mxu0 %v1540
  %1598 = vmatpush1.msra.mxu0 %v1539
  %1599 = vmatprep.subr.mxu0 %v1544
  %1600 = vmatpush1.msra.mxu0 %v1543
  %1601 = vmatprep.subr.mxu0 %v1548
  %1602 = vmatpush1.msra.mxu0 %v1547
  %1603 = vmatprep.subr.mxu0 %v1552
  %1604 = vmatpush1.msra.mxu0 %v1551
  %1605 = vmatprep.subr.mxu0 %v1556
  %1606 = vmatpush1.msra.mxu0 %v1555
  %1607 = vmatprep.subr.mxu0 %v1560
  %1608 = vmatpush1.msra.mxu0 %v1559
  %1609 = vmatprep.subr.mxu0 %v1564
  %1610 = vmatpush1.msra.mxu0 %v1563
  %1611 = vmatprep.subr.mxu0 %v1568
  %1612 = vmatpush1.msra.mxu0 %v1567
  %1613 = vmatprep.subr.mxu0 %v1572
  %1614 = vmatpush1.msra.mxu0 %v1571
  %1615 = vmatprep.subr.mxu0 %v1576
  %1616 = vmatpush1.msra.mxu0 %v1575
  %1617 = vmatprep.subr.mxu0 %v1580
  %1618 = vmatpush1.msra.mxu0 %v1579
  %1619 = vmatprep.subr.mxu0 %v1584
  %1620 = vmatpush1.msra.mxu0 %v1583
  %1621 = vmatprep.subr.mxu0 %v1588
  %1622 = vmatpush1.msra.mxu0 %v1587
  %1623 = vmatprep.subr.mxu0 0.0
  %1624 = vmatpush1.msra.mxu0 0.0
  %1625 = vmatprep.subr.mxu0 0.0
  %1626 = vmatpush1.msra.mxu0 0.0
  %1627 = vmatprep.subr.mxu0 0.0
  %1628 = vmatpush1.msra.mxu0 0.0
  %1629 = vmatprep.subr.mxu0 0.0
  %1630 = vmatpush1.msra.mxu0 0.0
  %1631 = vmatprep.subr.mxu0 0.0
  %1632 = vmatpush1.msra.mxu0 0.0
  %1633 = vmatprep.subr.mxu0 0.0
  %1634 = vmatpush1.msra.mxu0 0.0
  %1635 = vmatprep.subr.mxu0 0.0
  %1636 = vmatpush1.msra.mxu0 0.0
  %1637 = vmatprep.subr.mxu0 0.0
  %1638 = vmatpush1.msra.mxu0 0.0
  %1639 = vmatprep.subr.mxu0 0.0
  %1640 = vmatpush1.msra.mxu0 0.0
  %1641 = vmatprep.subr.mxu0 0.0
  %1642 = vmatpush1.msra.mxu0 0.0
  %1643 = vmatprep.subr.mxu0 0.0
  %1644 = vmatpush1.msra.mxu0 0.0
  %1645 = vmatprep.subr.mxu0 0.0
  %1646 = vmatpush1.msra.mxu0 0.0
  %1647 = vmatprep.subr.mxu0 0.0
  %1648 = vmatpush1.msra.mxu0 0.0
  %1649 = vmatprep.subr.mxu0 0.0
  %1650 = vmatpush1.msra.mxu0 0.0
  %1651 = vmatprep.subr.mxu0 0.0
  %1652 = vmatpush1.msra.mxu0 0.0
  %1653 = vmatprep.subr.mxu0 0.0
  %1654 = vmatpush1.msra.mxu0 0.0
  %1655 = vmatprep.mubr.f32.mxu0 0.0
  %1656 = vmatmul.mubr.f32.gmra.mrb[0].mxu0 %v1525
  %v1657 = vpop.f32.mrb[0].mxu0
  %v1658 = vadd.f32 %v288, %v1657
  %v1659 = vpop.f32.mrb[0].mxu0
  %v1660 = vadd.f32 %v292, %v1659
  %1661 = vdwg.mxu0
  %1662 = vmatprep.subr.mxu0 %v1530
  %1663 = vmatpush1.msra.mxu0 %v1529
  %1664 = vmatprep.subr.mxu0 %v1534
  %1665 = vmatpush1.msra.mxu0 %v1533
  %1666 = vmatprep.subr.mxu0 %v1538
  %1667 = vmatpush1.msra.mxu0 %v1537
  %1668 = vmatprep.subr.mxu0 %v1542
  %1669 = vmatpush1.msra.mxu0 %v1541
  %1670 = vmatprep.subr.mxu0 %v1546
  %1671 = vmatpush1.msra.mxu0 %v1545
  %1672 = vmatprep.subr.mxu0 %v1550
  %1673 = vmatpush1.msra.mxu0 %v1549
  %1674 = vmatprep.subr.mxu0 %v1554
  %1675 = vmatpush1.msra.mxu0 %v1553
  %1676 = vmatprep.subr.mxu0 %v1558
  %1677 = vmatpush1.msra.mxu0 %v1557
  %1678 = vmatprep.subr.mxu0 %v1562
  %1679 = vmatpush1.msra.mxu0 %v1561
  %1680 = vmatprep.subr.mxu0 %v1566
  %1681 = vmatpush1.msra.mxu0 %v1565
  %1682 = vmatprep.subr.mxu0 %v1570
  %1683 = vmatpush1.msra.mxu0 %v1569
  %1684 = vmatprep.subr.mxu0 %v1574
  %1685 = vmatpush1.msra.mxu0 %v1573
  %1686 = vmatprep.subr.mxu0 %v1578
  %1687 = vmatpush1.msra.mxu0 %v1577
  %1688 = vmatprep.subr.mxu0 %v1582
  %1689 = vmatpush1.msra.mxu0 %v1581
  %1690 = vmatprep.subr.mxu0 %v1586
  %1691 = vmatpush1.msra.mxu0 %v1585
  %1692 = vmatprep.subr.mxu0 %v1590
  %1693 = vmatpush1.msra.mxu0 %v1589
  %1694 = vmatprep.subr.mxu0 0.0
  %1695 = vmatpush1.msra.mxu0 0.0
  %1696 = vmatprep.subr.mxu0 0.0
  %1697 = vmatpush1.msra.mxu0 0.0
  %1698 = vmatprep.subr.mxu0 0.0
  %1699 = vmatpush1.msra.mxu0 0.0
  %1700 = vmatprep.subr.mxu0 0.0
  %1701 = vmatpush1.msra.mxu0 0.0
  %1702 = vmatprep.subr.mxu0 0.0
  %1703 = vmatpush1.msra.mxu0 0.0
  %1704 = vmatprep.subr.mxu0 0.0
  %1705 = vmatpush1.msra.mxu0 0.0
  %1706 = vmatprep.subr.mxu0 0.0
  %1707 = vmatpush1.msra.mxu0 0.0
  %1708 = vmatprep.subr.mxu0 0.0
  %1709 = vmatpush1.msra.mxu0 0.0
  %1710 = vmatprep.subr.mxu0 0.0
  %1711 = vmatpush1.msra.mxu0 0.0
  %1712 = vmatprep.subr.mxu0 0.0
  %1713 = vmatpush1.msra.mxu0 0.0
  %1714 = vmatprep.subr.mxu0 0.0
  %1715 = vmatpush1.msra.mxu0 0.0
  %1716 = vmatprep.subr.mxu0 0.0
  %1717 = vmatpush1.msra.mxu0 0.0
  %1718 = vmatprep.subr.mxu0 0.0
  %1719 = vmatpush1.msra.mxu0 0.0
  %1720 = vmatprep.subr.mxu0 0.0
  %1721 = vmatpush1.msra.mxu0 0.0
  %1722 = vmatprep.subr.mxu0 0.0
  %1723 = vmatpush1.msra.mxu0 0.0
  %1724 = vmatprep.subr.mxu0 0.0
  %1725 = vmatpush1.msra.mxu0 0.0
  %1726 = vmatprep.mubr.f32.mxu0 0.0
  %1727 = vmatmul.mubr.f32.gmra.mrb[0].mxu0 %v1525
  %v1728 = vpop.f32.mrb[0].mxu0
  %v1729 = vadd.f32 %v296, %v1728
  %v1730 = vpop.f32.mrb[0].mxu0
  %v1731 = vadd.f32 %v300, %v1730
  %1732 = vdwg.mxu0
  %1733 = vmatprep.subr.mxu0 %v220
  %1734 = vmatpush1.msra.mxu0 %v219
  %1735 = vmatprep.subr.mxu0 %v224
  %1736 = vmatpush1.msra.mxu0 %v223
  %1737 = vmatprep.subr.mxu0 %v228
  %1738 = vmatpush1.msra.mxu0 %v227
  %1739 = vmatprep.subr.mxu0 %v232
  %1740 = vmatpush1.msra.mxu0 %v231
  %1741 = vmatprep.subr.mxu0 %v236
  %1742 = vmatpush1.msra.mxu0 %v235
  %1743 = vmatprep.subr.mxu0 %v240
  %1744 = vmatpush1.msra.mxu0 %v239
  %1745 = vmatprep.subr.mxu0 %v244
  %1746 = vmatpush1.msra.mxu0 %v243
  %1747 = vmatprep.subr.mxu0 %v248
  %1748 = vmatpush1.msra.mxu0 %v247
  %1749 = vmatprep.subr.mxu0 %v252
  %1750 = vmatpush1.msra.mxu0 %v251
  %1751 = vmatprep.subr.mxu0 %v256
  %1752 = vmatpush1.msra.mxu0 %v255
  %1753 = vmatprep.subr.mxu0 %v260
  %1754 = vmatpush1.msra.mxu0 %v259
  %1755 = vmatprep.subr.mxu0 %v264
  %1756 = vmatpush1.msra.mxu0 %v263
  %1757 = vmatprep.subr.mxu0 %v268
  %1758 = vmatpush1.msra.mxu0 %v267
  %1759 = vmatprep.subr.mxu0 %v272
  %1760 = vmatpush1.msra.mxu0 %v271
  %1761 = vmatprep.subr.mxu0 %v276
  %1762 = vmatpush1.msra.mxu0 %v275
  %1763 = vmatprep.subr.mxu0 %v280
  %1764 = vmatpush1.msra.mxu0 %v279
  %1765 = vmatprep.subr.mxu0 0.0
  %1766 = vmatpush1.msra.mxu0 0.0
  %1767 = vmatprep.subr.mxu0 0.0
  %1768 = vmatpush1.msra.mxu0 0.0
  %1769 = vmatprep.subr.mxu0 0.0
  %1770 = vmatpush1.msra.mxu0 0.0
  %1771 = vmatprep.subr.mxu0 0.0
  %1772 = vmatpush1.msra.mxu0 0.0
  %1773 = vmatprep.subr.mxu0 0.0
  %1774 = vmatpush1.msra.mxu0 0.0
  %1775 = vmatprep.subr.mxu0 0.0
  %1776 = vmatpush1.msra.mxu0 0.0
  %1777 = vmatprep.subr.mxu0 0.0
  %1778 = vmatpush1.msra.mxu0 0.0
  %1779 = vmatprep.subr.mxu0 0.0
  %1780 = vmatpush1.msra.mxu0 0.0
  %1781 = vmatprep.subr.mxu0 0.0
  %1782 = vmatpush1.msra.mxu0 0.0
  %1783 = vmatprep.subr.mxu0 0.0
  %1784 = vmatpush1.msra.mxu0 0.0
  %1785 = vmatprep.subr.mxu0 0.0
  %1786 = vmatpush1.msra.mxu0 0.0
  %1787 = vmatprep.subr.mxu0 0.0
  %1788 = vmatpush1.msra.mxu0 0.0
  %1789 = vmatprep.subr.mxu0 0.0
  %1790 = vmatpush1.msra.mxu0 0.0
  %1791 = vmatprep.subr.mxu0 0.0
  %1792 = vmatpush1.msra.mxu0 0.0
  %1793 = vmatprep.subr.mxu0 0.0
  %1794 = vmatpush1.msra.mxu0 0.0
  %1795 = vmatprep.subr.mxu0 0.0
  %1796 = vmatpush1.msra.mxu0 0.0
  %1797 = vmatprep.mubr.f32.mxu0 0.0
  %1798 = vmatmul.mubr.f32.gmra.mrb[0].mxu0 %v1291
  %v1799 = vpop.f32.mrb[0].mxu0
  %v1800 = vadd.f32 0.0, %v1799
  %v1801 = vpop.f32.mrb[0].mxu0
  %v1802 = vadd.f32 0.0, %v1801
  %1803 = vdwg.mxu0
  %1804 = vmatprep.subr.mxu0 %v222
  %1805 = vmatpush1.msra.mxu0 %v221
  %1806 = vmatprep.subr.mxu0 %v226
  %1807 = vmatpush1.msra.mxu0 %v225
  %1808 = vmatprep.subr.mxu0 %v230
  %1809 = vmatpush1.msra.mxu0 %v229
  %1810 = vmatprep.subr.mxu0 %v234
  %1811 = vmatpush1.msra.mxu0 %v233
  %1812 = vmatprep.subr.mxu0 %v238
  %1813 = vmatpush1.msra.mxu0 %v237
  %1814 = vmatprep.subr.mxu0 %v242
  %1815 = vmatpush1.msra.mxu0 %v241
  %1816 = vmatprep.subr.mxu0 %v246
  %1817 = vmatpush1.msra.mxu0 %v245
  %1818 = vmatprep.subr.mxu0 %v250
  %1819 = vmatpush1.msra.mxu0 %v249
  %1820 = vmatprep.subr.mxu0 %v254
  %1821 = vmatpush1.msra.mxu0 %v253
  %1822 = vmatprep.subr.mxu0 %v258
  %1823 = vmatpush1.msra.mxu0 %v257
  %1824 = vmatprep.subr.mxu0 %v262
  %1825 = vmatpush1.msra.mxu0 %v261
  %1826 = vmatprep.subr.mxu0 %v266
  %1827 = vmatpush1.msra.mxu0 %v265
  %1828 = vmatprep.subr.mxu0 %v270
  %1829 = vmatpush1.msra.mxu0 %v269
  %1830 = vmatprep.subr.mxu0 %v274
  %1831 = vmatpush1.msra.mxu0 %v273
  %1832 = vmatprep.subr.mxu0 %v278
  %1833 = vmatpush1.msra.mxu0 %v277
  %1834 = vmatprep.subr.mxu0 %v282
  %1835 = vmatpush1.msra.mxu0 %v281
  %1836 = vmatprep.subr.mxu0 0.0
  %1837 = vmatpush1.msra.mxu0 0.0
  %1838 = vmatprep.subr.mxu0 0.0
  %1839 = vmatpush1.msra.mxu0 0.0
  %1840 = vmatprep.subr.mxu0 0.0
  %1841 = vmatpush1.msra.mxu0 0.0
  %1842 = vmatprep.subr.mxu0 0.0
  %1843 = vmatpush1.msra.mxu0 0.0
  %1844 = vmatprep.subr.mxu0 0.0
  %1845 = vmatpush1.msra.mxu0 0.0
  %1846 = vmatprep.subr.mxu0 0.0
  %1847 = vmatpush1.msra.mxu0 0.0
  %1848 = vmatprep.subr.mxu0 0.0
  %1849 = vmatpush1.msra.mxu0 0.0
  %1850 = vmatprep.subr.mxu0 0.0
  %1851 = vmatpush1.msra.mxu0 0.0
  %1852 = vmatprep.subr.mxu0 0.0
  %1853 = vmatpush1.msra.mxu0 0.0
  %1854 = vmatprep.subr.mxu0 0.0
  %1855 = vmatpush1.msra.mxu0 0.0
  %1856 = vmatprep.subr.mxu0 0.0
  %1857 = vmatpush1.msra.mxu0 0.0
  %1858 = vmatprep.subr.mxu0 0.0
  %1859 = vmatpush1.msra.mxu0 0.0
  %1860 = vmatprep.subr.mxu0 0.0
  %1861 = vmatpush1.msra.mxu0 0.0
  %1862 = vmatprep.subr.mxu0 0.0
  %1863 = vmatpush1.msra.mxu0 0.0
  %1864 = vmatprep.subr.mxu0 0.0
  %1865 = vmatpush1.msra.mxu0 0.0
  %1866 = vmatprep.subr.mxu0 0.0
  %1867 = vmatpush1.msra.mxu0 0.0
  %1868 = vmatprep.mubr.f32.mxu0 0.0
  %1869 = vmatmul.mubr.f32.gmra.mrb[0].mxu0 %v1291
  %v1870 = vpop.f32.mrb[0].mxu0
  %v1871 = vadd.f32 0.0, %v1870
  %v1872 = vpop.f32.mrb[0].mxu0
  %v1873 = vadd.f32 0.0, %v1872
  %1874 = vdwg.mxu0
  %v1875 = vadd.f32 %v144, %v1800
  %v1876 = vadd.f32 %v146, %v1802
  %v1877 = vadd.f32 %v215, %v1871
  %v1878 = vadd.f32 %v217, %v1873
  %v1879 = vxor.u32 %v1875, 2147483648
  %v1880 = vxor.u32 %v1876, 2147483648
  %v1881 = vxor.u32 %v1877, 2147483648
  %v1882 = vmul.f32 %v1879, 1.442695
  %v1883 = vpow.pop %v1882
  %v1884 = vmul.f32 %v1880, 1.442695
  %v1885 = vpow.pop %v1884
  %v1886 = vmul.f32 %v1881, 1.442695
  %v1887 = vpow.pop %v1886
  %v1888 = vadd.f32 %v1883, 1.0
  %v1889 = vadd.f32 %v1885, 1.0
  %v1890 = vadd.f32 %v1887, 1.0
  %v1891 = vrcp.pop %v1888
  %v1892 = vmul.f32 1.0, %v1891
  %v1893 = vrcp.pop %v1889
  %v1894 = vmul.f32 1.0, %v1893
  %v1895 = vrcp.pop %v1890
  %v1896 = vmul.f32 1.0, %v1895
  %v1897 = vtanh.pop %v1878
  %v1898 = vmul.f32 %v1894, %v1289
  %v1899 = vmul.f32 %v1892, %v1897
  %v1900 = vadd.f32 %v1898, %v1899
  %v1901 = vtanh.pop %v1900
  %v1902 = vmul.f32 %v1896, %v1901
  %v1903 = vld [vmem:[%s4] sm:$0xff]
  %v1904 = vld [vmem:[%s4 + $0x8] sm:$0xff]
  %v1905 = vld [vmem:[%s4 + $0x10] sm:$0xff]
  %v1906 = vld [vmem:[%s4 + $0x18] sm:$0xff]
  %v1907 = vld [vmem:[%s4 + $0x20] sm:$0xff]
  %v1908 = vld [vmem:[%s4 + $0x28] sm:$0xff]
  %v1909 = vld [vmem:[%s4 + $0x30] sm:$0xff]
  %v1910 = vld [vmem:[%s4 + $0x38] sm:$0xff]
  %v1911 = vld [vmem:[%s4 + $0x40] sm:$0xff]
  %v1912 = vld [vmem:[%s4 + $0x48] sm:$0xff]
  %v1913 = vld [vmem:[%s4 + $0x50] sm:$0xff]
  %v1914 = vld [vmem:[%s4 + $0x58] sm:$0xff]
  %v1915 = vld [vmem:[%s4 + $0x60] sm:$0xff]
  %v1916 = vld [vmem:[%s4 + $0x68] sm:$0xff]
  %v1917 = vld [vmem:[%s4 + $0x70] sm:$0xff]
  %v1918 = vld [vmem:[%s4 + $0x78] sm:$0xff]
  %v1919 = vld [vmem:[%s4 + $0x80] sm:$0xff]
  %v1920 = vld [vmem:[%s4 + $0x88] sm:$0xff]
  %v1921 = vld [vmem:[%s4 + $0x90] sm:$0xff]
  %v1922 = vld [vmem:[%s4 + $0x98] sm:$0xff]
  %v1923 = vld [vmem:[%s4 + $0xa0] sm:$0xff]
  %v1924 = vld [vmem:[%s4 + $0xa8] sm:$0xff]
  %v1925 = vld [vmem:[%s4 + $0xb0] sm:$0xff]
  %v1926 = vld [vmem:[%s4 + $0xb8] sm:$0xff]
  %v1927 = vld [vmem:[%s4 + $0xc0] sm:$0xff]
  %v1928 = vld [vmem:[%s4 + $0xc8] sm:$0xff]
  %v1929 = vld [vmem:[%s4 + $0xd0] sm:$0xff]
  %v1930 = vld [vmem:[%s4 + $0xd8] sm:$0xff]
  %v1931 = vld [vmem:[%s4 + $0xe0] sm:$0xff]
  %v1932 = vld [vmem:[%s4 + $0xe8] sm:$0xff]
  %v1933 = vld [vmem:[%s4 + $0xf0] sm:$0xff]
  %v1934 = vld [vmem:[%s4 + $0xf8] sm:$0xff]
  %v1935 = vld [vmem:[%s4 + $0x100] sm:$0xff]
  %v1936 = vld [vmem:[%s4 + $0x108] sm:$0xff]
  %v1937 = vld [vmem:[%s4 + $0x110] sm:$0xff]
  %v1938 = vld [vmem:[%s4 + $0x118] sm:$0xff]
  %v1939 = vld [vmem:[%s4 + $0x120] sm:$0xff]
  %v1940 = vld [vmem:[%s4 + $0x128] sm:$0xff]
  %v1941 = vld [vmem:[%s4 + $0x130] sm:$0xff]
  %v1942 = vld [vmem:[%s4 + $0x138] sm:$0xff]
  %v1943 = vld [vmem:[%s4 + $0x140] sm:$0xff]
  %v1944 = vld [vmem:[%s4 + $0x148] sm:$0xff]
  %v1945 = vld [vmem:[%s4 + $0x150] sm:$0xff]
  %v1946 = vld [vmem:[%s4 + $0x158] sm:$0xff]
  %v1947 = vld [vmem:[%s4 + $0x160] sm:$0xff]
  %v1948 = vld [vmem:[%s4 + $0x168] sm:$0xff]
  %v1949 = vld [vmem:[%s4 + $0x170] sm:$0xff]
  %v1950 = vld [vmem:[%s4 + $0x178] sm:$0xff]
  %v1951 = vld [vmem:[%s4 + $0x180] sm:$0xff]
  %v1952 = vld [vmem:[%s4 + $0x188] sm:$0xff]
  %v1953 = vld [vmem:[%s4 + $0x190] sm:$0xff]
  %v1954 = vld [vmem:[%s4 + $0x198] sm:$0xff]
  %v1955 = vld [vmem:[%s4 + $0x1a0] sm:$0xff]
  %v1956 = vld [vmem:[%s4 + $0x1a8] sm:$0xff]
  %v1957 = vld [vmem:[%s4 + $0x1b0] sm:$0xff]
  %v1958 = vld [vmem:[%s4 + $0x1b8] sm:$0xff]
  %v1959 = vld [vmem:[%s4 + $0x1c0] sm:$0xff]
  %v1960 = vld [vmem:[%s4 + $0x1c8] sm:$0xff]
  %v1961 = vld [vmem:[%s4 + $0x1d0] sm:$0xff]
  %v1962 = vld [vmem:[%s4 + $0x1d8] sm:$0xff]
  %v1963 = vld [vmem:[%s4 + $0x1e0] sm:$0xff]
  %v1964 = vld [vmem:[%s4 + $0x1e8] sm:$0xff]
  %v1965 = vld [vmem:[%s4 + $0x1f0] sm:$0xff]
  %v1966 = vld [vmem:[%s4 + $0x1f8] sm:$0xff]
  %1967 = vmatprep.subr.mxu0 %v1904
  %1968 = vmatpush1.msra.mxu0 %v1903
  %1969 = vmatprep.subr.mxu0 %v1908
  %1970 = vmatpush1.msra.mxu0 %v1907
  %1971 = vmatprep.subr.mxu0 %v1912
  %1972 = vmatpush1.msra.mxu0 %v1911
  %1973 = vmatprep.subr.mxu0 %v1916
  %1974 = vmatpush1.msra.mxu0 %v1915
  %1975 = vmatprep.subr.mxu0 %v1920
  %1976 = vmatpush1.msra.mxu0 %v1919
  %1977 = vmatprep.subr.mxu0 %v1924
  %1978 = vmatpush1.msra.mxu0 %v1923
  %1979 = vmatprep.subr.mxu0 %v1928
  %1980 = vmatpush1.msra.mxu0 %v1927
  %1981 = vmatprep.subr.mxu0 %v1932
  %1982 = vmatpush1.msra.mxu0 %v1931
  %1983 = vmatprep.subr.mxu0 %v1936
  %1984 = vmatpush1.msra.mxu0 %v1935
  %1985 = vmatprep.subr.mxu0 %v1940
  %1986 = vmatpush1.msra.mxu0 %v1939
  %1987 = vmatprep.subr.mxu0 %v1944
  %1988 = vmatpush1.msra.mxu0 %v1943
  %1989 = vmatprep.subr.mxu0 %v1948
  %1990 = vmatpush1.msra.mxu0 %v1947
  %1991 = vmatprep.subr.mxu0 %v1952
  %1992 = vmatpush1.msra.mxu0 %v1951
  %1993 = vmatprep.subr.mxu0 %v1956
  %1994 = vmatpush1.msra.mxu0 %v1955
  %1995 = vmatprep.subr.mxu0 %v1960
  %1996 = vmatpush1.msra.mxu0 %v1959
  %1997 = vmatprep.subr.mxu0 %v1964
  %1998 = vmatpush1.msra.mxu0 %v1963
  %1999 = vmatprep.subr.mxu0 0.0
  %2000 = vmatpush1.msra.mxu0 0.0
  %2001 = vmatprep.subr.mxu0 0.0
  %2002 = vmatpush1.msra.mxu0 0.0
  %2003 = vmatprep.subr.mxu0 0.0
  %2004 = vmatpush1.msra.mxu0 0.0
  %2005 = vmatprep.subr.mxu0 0.0
  %2006 = vmatpush1.msra.mxu0 0.0
  %2007 = vmatprep.subr.mxu0 0.0
  %2008 = vmatpush1.msra.mxu0 0.0
  %2009 = vmatprep.subr.mxu0 0.0
  %2010 = vmatpush1.msra.mxu0 0.0
  %2011 = vmatprep.subr.mxu0 0.0
  %2012 = vmatpush1.msra.mxu0 0.0
  %2013 = vmatprep.subr.mxu0 0.0
  %2014 = vmatpush1.msra.mxu0 0.0
  %2015 = vmatprep.subr.mxu0 0.0
  %2016 = vmatpush1.msra.mxu0 0.0
  %2017 = vmatprep.subr.mxu0 0.0
  %2018 = vmatpush1.msra.mxu0 0.0
  %2019 = vmatprep.subr.mxu0 0.0
  %2020 = vmatpush1.msra.mxu0 0.0
  %2021 = vmatprep.subr.mxu0 0.0
  %2022 = vmatpush1.msra.mxu0 0.0
  %2023 = vmatprep.subr.mxu0 0.0
  %2024 = vmatpush1.msra.mxu0 0.0
  %2025 = vmatprep.subr.mxu0 0.0
  %2026 = vmatpush1.msra.mxu0 0.0
  %2027 = vmatprep.subr.mxu0 0.0
  %2028 = vmatpush1.msra.mxu0 0.0
  %2029 = vmatprep.subr.mxu0 0.0
  %2030 = vmatpush1.msra.mxu0 0.0
  %2031 = vmatprep.mubr.f32.mxu0 0.0
  %2032 = vmatmul.mubr.f32.gmra.mrb[0].mxu0 %v1902
  %v2033 = vpop.f32.mrb[0].mxu0
  %v2034 = vadd.f32 0.0, %v2033
  %v2035 = vpop.f32.mrb[0].mxu0
  %v2036 = vadd.f32 0.0, %v2035
  %2037 = vdwg.mxu0
  %2038 = vmatprep.subr.mxu0 %v1906
  %2039 = vmatpush1.msra.mxu0 %v1905
  %2040 = vmatprep.subr.mxu0 %v1910
  %2041 = vmatpush1.msra.mxu0 %v1909
  %2042 = vmatprep.subr.mxu0 %v1914
  %2043 = vmatpush1.msra.mxu0 %v1913
  %2044 = vmatprep.subr.mxu0 %v1918
  %2045 = vmatpush1.msra.mxu0 %v1917
  %2046 = vmatprep.subr.mxu0 %v1922
  %2047 = vmatpush1.msra.mxu0 %v1921
  %2048 = vmatprep.subr.mxu0 %v1926
  %2049 = vmatpush1.msra.mxu0 %v1925
  %2050 = vmatprep.subr.mxu0 %v1930
  %2051 = vmatpush1.msra.mxu0 %v1929
  %2052 = vmatprep.subr.mxu0 %v1934
  %2053 = vmatpush1.msra.mxu0 %v1933
  %2054 = vmatprep.subr.mxu0 %v1938
  %2055 = vmatpush1.msra.mxu0 %v1937
  %2056 = vmatprep.subr.mxu0 %v1942
  %2057 = vmatpush1.msra.mxu0 %v1941
  %2058 = vmatprep.subr.mxu0 %v1946
  %2059 = vmatpush1.msra.mxu0 %v1945
  %2060 = vmatprep.subr.mxu0 %v1950
  %2061 = vmatpush1.msra.mxu0 %v1949
  %2062 = vmatprep.subr.mxu0 %v1954
  %2063 = vmatpush1.msra.mxu0 %v1953
  %2064 = vmatprep.subr.mxu0 %v1958
  %2065 = vmatpush1.msra.mxu0 %v1957
  %2066 = vmatprep.subr.mxu0 %v1962
  %2067 = vmatpush1.msra.mxu0 %v1961
  %2068 = vmatprep.subr.mxu0 %v1966
  %2069 = vmatpush1.msra.mxu0 %v1965
  %2070 = vmatprep.subr.mxu0 0.0
  %2071 = vmatpush1.msra.mxu0 0.0
  %2072 = vmatprep.subr.mxu0 0.0
  %2073 = vmatpush1.msra.mxu0 0.0
  %2074 = vmatprep.subr.mxu0 0.0
  %2075 = vmatpush1.msra.mxu0 0.0
  %2076 = vmatprep.subr.mxu0 0.0
  %2077 = vmatpush1.msra.mxu0 0.0
  %2078 = vmatprep.subr.mxu0 0.0
  %2079 = vmatpush1.msra.mxu0 0.0
  %2080 = vmatprep.subr.mxu0 0.0
  %2081 = vmatpush1.msra.mxu0 0.0
  %2082 = vmatprep.subr.mxu0 0.0
  %2083 = vmatpush1.msra.mxu0 0.0
  %2084 = vmatprep.subr.mxu0 0.0
  %2085 = vmatpush1.msra.mxu0 0.0
  %2086 = vmatprep.subr.mxu0 0.0
  %2087 = vmatpush1.msra.mxu0 0.0
  %2088 = vmatprep.subr.mxu0 0.0
  %2089 = vmatpush1.msra.mxu0 0.0
  %2090 = vmatprep.subr.mxu0 0.0
  %2091 = vmatpush1.msra.mxu0 0.0
  %2092 = vmatprep.subr.mxu0 0.0
  %2093 = vmatpush1.msra.mxu0 0.0
  %2094 = vmatprep.subr.mxu0 0.0
  %2095 = vmatpush1.msra.mxu0 0.0
  %2096 = vmatprep.subr.mxu0 0.0
  %2097 = vmatpush1.msra.mxu0 0.0
  %2098 = vmatprep.subr.mxu0 0.0
  %2099 = vmatpush1.msra.mxu0 0.0
  %2100 = vmatprep.subr.mxu0 0.0
  %2101 = vmatpush1.msra.mxu0 0.0
  %2102 = vmatprep.mubr.f32.mxu0 0.0
  %2103 = vmatmul.mubr.f32.gmra.mrb[0].mxu0 %v1902
  %v2104 = vpop.f32.mrb[0].mxu0
  %v2105 = vadd.f32 0.0, %v2104
  %v2106 = vpop.f32.mrb[0].mxu0
  %v2107 = vadd.f32 0.0, %v2106
  %2108 = vdwg.mxu0
  %v2109 = vadd.f32 %v1658, %v2034
  %v2110 = vadd.f32 %v1660, %v2036
  %v2111 = vadd.f32 %v1729, %v2105
  %v2112 = vadd.f32 %v1731, %v2107
  %v2113 = vxor.u32 %v2109, 2147483648
  %v2114 = vxor.u32 %v2110, 2147483648
  %v2115 = vxor.u32 %v2111, 2147483648
  %v2116 = vmul.f32 %v2113, 1.442695
  %v2117 = vpow.pop %v2116
  %v2118 = vmul.f32 %v2114, 1.442695
  %v2119 = vpow.pop %v2118
  %v2120 = vmul.f32 %v2115, 1.442695
  %v2121 = vpow.pop %v2120
  %v2122 = vadd.f32 %v2117, 1.0
  %v2123 = vadd.f32 %v2119, 1.0
  %v2124 = vadd.f32 %v2121, 1.0
  %v2125 = vrcp.pop %v2122
  %v2126 = vmul.f32 1.0, %v2125
  %v2127 = vrcp.pop %v2123
  %v2128 = vmul.f32 1.0, %v2127
  %v2129 = vrcp.pop %v2124
  %v2130 = vmul.f32 1.0, %v2129
  %v2131 = vtanh.pop %v2112
  %v2132 = vmul.f32 %v2128, %v1523
  %v2133 = vmul.f32 %v2126, %v2131
  %v2134 = vadd.f32 %v2132, %v2133
  %v2135 = vtanh.pop %v2134
  %v2136 = vmul.f32 %v2130, %v2135
  %2137 = vst [vmem:[#allocation2 + $0x10] sm:$0xff] %v2136
  %v2138 = vld [vmem:[%s5] sm:$0xff]
  %v2139 = vld [vmem:[%s5 + $0x8] sm:$0xff]
  %v2140 = vld [vmem:[%s5 + $0x10] sm:$0xff]
  %v2141 = vld [vmem:[%s5 + $0x18] sm:$0xff]
  %v2142 = vld [vmem:[%s5 + $0x20] sm:$0xff]
  %v2143 = vld [vmem:[%s5 + $0x28] sm:$0xff]
  %v2144 = vld [vmem:[%s5 + $0x30] sm:$0xff]
  %v2145 = vld [vmem:[%s5 + $0x38] sm:$0xff]
  %v2146 = vld [vmem:[%s5 + $0x40] sm:$0xff]
  %v2147 = vld [vmem:[%s5 + $0x48] sm:$0xff]
  %v2148 = vld [vmem:[%s5 + $0x50] sm:$0xff]
  %v2149 = vld [vmem:[%s5 + $0x58] sm:$0xff]
  %v2150 = vld [vmem:[%s5 + $0x60] sm:$0xff]
  %v2151 = vld [vmem:[%s5 + $0x68] sm:$0xff]
  %v2152 = vld [vmem:[%s5 + $0x70] sm:$0xff]
  %v2153 = vld [vmem:[%s5 + $0x78] sm:$0xff]
  %v2154 = vld [vmem:[%s5 + $0x80] sm:$0xff]
  %v2155 = vld [vmem:[%s5 + $0x88] sm:$0xff]
  %v2156 = vld [vmem:[%s5 + $0x90] sm:$0xff]
  %v2157 = vld [vmem:[%s5 + $0x98] sm:$0xff]
  %v2158 = vld [vmem:[%s5 + $0xa0] sm:$0xff]
  %v2159 = vld [vmem:[%s5 + $0xa8] sm:$0xff]
  %v2160 = vld [vmem:[%s5 + $0xb0] sm:$0xff]
  %v2161 = vld [vmem:[%s5 + $0xb8] sm:$0xff]
  %v2162 = vld [vmem:[%s5 + $0xc0] sm:$0xff]
  %v2163 = vld [vmem:[%s5 + $0xc8] sm:$0xff]
  %v2164 = vld [vmem:[%s5 + $0xd0] sm:$0xff]
  %v2165 = vld [vmem:[%s5 + $0xd8] sm:$0xff]
  %v2166 = vld [vmem:[%s5 + $0xe0] sm:$0xff]
  %v2167 = vld [vmem:[%s5 + $0xe8] sm:$0xff]
  %v2168 = vld [vmem:[%s5 + $0xf0] sm:$0xff]
  %v2169 = vld [vmem:[%s5 + $0xf8] sm:$0xff]
  %v2170 = vld [vmem:[%s5 + $0x100] sm:$0xff]
  %v2171 = vld [vmem:[%s5 + $0x108] sm:$0xff]
  %v2172 = vld [vmem:[%s5 + $0x110] sm:$0xff]
  %v2173 = vld [vmem:[%s5 + $0x118] sm:$0xff]
  %v2174 = vld [vmem:[%s5 + $0x120] sm:$0xff]
  %v2175 = vld [vmem:[%s5 + $0x128] sm:$0xff]
  %v2176 = vld [vmem:[%s5 + $0x130] sm:$0xff]
  %v2177 = vld [vmem:[%s5 + $0x138] sm:$0xff]
  %v2178 = vld [vmem:[%s5 + $0x140] sm:$0xff]
  %v2179 = vld [vmem:[%s5 + $0x148] sm:$0xff]
  %v2180 = vld [vmem:[%s5 + $0x150] sm:$0xff]
  %v2181 = vld [vmem:[%s5 + $0x158] sm:$0xff]
  %v2182 = vld [vmem:[%s5 + $0x160] sm:$0xff]
  %v2183 = vld [vmem:[%s5 + $0x168] sm:$0xff]
  %v2184 = vld [vmem:[%s5 + $0x170] sm:$0xff]
  %v2185 = vld [vmem:[%s5 + $0x178] sm:$0xff]
  %v2186 = vld [vmem:[%s5 + $0x180] sm:$0xff]
  %v2187 = vld [vmem:[%s5 + $0x188] sm:$0xff]
  %v2188 = vld [vmem:[%s5 + $0x190] sm:$0xff]
  %v2189 = vld [vmem:[%s5 + $0x198] sm:$0xff]
  %v2190 = vld [vmem:[%s5 + $0x1a0] sm:$0xff]
  %v2191 = vld [vmem:[%s5 + $0x1a8] sm:$0xff]
  %v2192 = vld [vmem:[%s5 + $0x1b0] sm:$0xff]
  %v2193 = vld [vmem:[%s5 + $0x1b8] sm:$0xff]
  %v2194 = vld [vmem:[%s5 + $0x1c0] sm:$0xff]
  %v2195 = vld [vmem:[%s5 + $0x1c8] sm:$0xff]
  %v2196 = vld [vmem:[%s5 + $0x1d0] sm:$0xff]
  %v2197 = vld [vmem:[%s5 + $0x1d8] sm:$0xff]
  %v2198 = vld [vmem:[%s5 + $0x1e0] sm:$0xff]
  %v2199 = vld [vmem:[%s5 + $0x1e8] sm:$0xff]
  %v2200 = vld [vmem:[%s5 + $0x1f0] sm:$0xff]
  %v2201 = vld [vmem:[%s5 + $0x1f8] sm:$0xff]
  %2202 = vmatprep.subr.mxu0 %v2139
  %2203 = vmatpush1.msra.mxu0 %v2138
  %2204 = vmatprep.subr.mxu0 %v2143
  %2205 = vmatpush1.msra.mxu0 %v2142
  %2206 = vmatprep.subr.mxu0 %v2147
  %2207 = vmatpush1.msra.mxu0 %v2146
  %2208 = vmatprep.subr.mxu0 %v2151
  %2209 = vmatpush1.msra.mxu0 %v2150
  %2210 = vmatprep.subr.mxu0 %v2155
  %2211 = vmatpush1.msra.mxu0 %v2154
  %2212 = vmatprep.subr.mxu0 %v2159
  %2213 = vmatpush1.msra.mxu0 %v2158
  %2214 = vmatprep.subr.mxu0 %v2163
  %2215 = vmatpush1.msra.mxu0 %v2162
  %2216 = vmatprep.subr.mxu0 %v2167
  %2217 = vmatpush1.msra.mxu0 %v2166
  %2218 = vmatprep.subr.mxu0 %v2171
  %2219 = vmatpush1.msra.mxu0 %v2170
  %2220 = vmatprep.subr.mxu0 %v2175
  %2221 = vmatpush1.msra.mxu0 %v2174
  %2222 = vmatprep.subr.mxu0 %v2179
  %2223 = vmatpush1.msra.mxu0 %v2178
  %2224 = vmatprep.subr.mxu0 %v2183
  %2225 = vmatpush1.msra.mxu0 %v2182
  %2226 = vmatprep.subr.mxu0 %v2187
  %2227 = vmatpush1.msra.mxu0 %v2186
  %2228 = vmatprep.subr.mxu0 %v2191
  %2229 = vmatpush1.msra.mxu0 %v2190
  %2230 = vmatprep.subr.mxu0 %v2195
  %2231 = vmatpush1.msra.mxu0 %v2194
  %2232 = vmatprep.subr.mxu0 %v2199
  %2233 = vmatpush1.msra.mxu0 %v2198
  %2234 = vmatprep.subr.mxu0 0.0
  %2235 = vmatpush1.msra.mxu0 0.0
  %2236 = vmatprep.subr.mxu0 0.0
  %2237 = vmatpush1.msra.mxu0 0.0
  %2238 = vmatprep.subr.mxu0 0.0
  %2239 = vmatpush1.msra.mxu0 0.0
  %2240 = vmatprep.subr.mxu0 0.0
  %2241 = vmatpush1.msra.mxu0 0.0
  %2242 = vmatprep.subr.mxu0 0.0
  %2243 = vmatpush1.msra.mxu0 0.0
  %2244 = vmatprep.subr.mxu0 0.0
  %2245 = vmatpush1.msra.mxu0 0.0
  %2246 = vmatprep.subr.mxu0 0.0
  %2247 = vmatpush1.msra.mxu0 0.0
  %2248 = vmatprep.subr.mxu0 0.0
  %2249 = vmatpush1.msra.mxu0 0.0
  %2250 = vmatprep.subr.mxu0 0.0
  %2251 = vmatpush1.msra.mxu0 0.0
  %2252 = vmatprep.subr.mxu0 0.0
  %2253 = vmatpush1.msra.mxu0 0.0
  %2254 = vmatprep.subr.mxu0 0.0
  %2255 = vmatpush1.msra.mxu0 0.0
  %2256 = vmatprep.subr.mxu0 0.0
  %2257 = vmatpush1.msra.mxu0 0.0
  %2258 = vmatprep.subr.mxu0 0.0
  %2259 = vmatpush1.msra.mxu0 0.0
  %2260 = vmatprep.subr.mxu0 0.0
  %2261 = vmatpush1.msra.mxu0 0.0
  %2262 = vmatprep.subr.mxu0 0.0
  %2263 = vmatpush1.msra.mxu0 0.0
  %2264 = vmatprep.subr.mxu0 0.0
  %2265 = vmatpush1.msra.mxu0 0.0
  %2266 = vmatprep.mubr.f32.mxu0 0.0
  %2267 = vmatmul.mubr.f32.gmra.mrb[0].mxu0 %v2136
  %v2268 = vpop.f32.mrb[0].mxu0
  %v2269 = vadd.f32 %v288, %v2268
  %v2270 = vpop.f32.mrb[0].mxu0
  %v2271 = vadd.f32 %v292, %v2270
  %2272 = vdwg.mxu0
  %2273 = vmatprep.subr.mxu0 %v2141
  %2274 = vmatpush1.msra.mxu0 %v2140
  %2275 = vmatprep.subr.mxu0 %v2145
  %2276 = vmatpush1.msra.mxu0 %v2144
  %2277 = vmatprep.subr.mxu0 %v2149
  %2278 = vmatpush1.msra.mxu0 %v2148
  %2279 = vmatprep.subr.mxu0 %v2153
  %2280 = vmatpush1.msra.mxu0 %v2152
  %2281 = vmatprep.subr.mxu0 %v2157
  %2282 = vmatpush1.msra.mxu0 %v2156
  %2283 = vmatprep.subr.mxu0 %v2161
  %2284 = vmatpush1.msra.mxu0 %v2160
  %2285 = vmatprep.subr.mxu0 %v2165
  %2286 = vmatpush1.msra.mxu0 %v2164
  %2287 = vmatprep.subr.mxu0 %v2169
  %2288 = vmatpush1.msra.mxu0 %v2168
  %2289 = vmatprep.subr.mxu0 %v2173
  %2290 = vmatpush1.msra.mxu0 %v2172
  %2291 = vmatprep.subr.mxu0 %v2177
  %2292 = vmatpush1.msra.mxu0 %v2176
  %2293 = vmatprep.subr.mxu0 %v2181
  %2294 = vmatpush1.msra.mxu0 %v2180
  %2295 = vmatprep.subr.mxu0 %v2185
  %2296 = vmatpush1.msra.mxu0 %v2184
  %2297 = vmatprep.subr.mxu0 %v2189
  %2298 = vmatpush1.msra.mxu0 %v2188
  %2299 = vmatprep.subr.mxu0 %v2193
  %2300 = vmatpush1.msra.mxu0 %v2192
  %2301 = vmatprep.subr.mxu0 %v2197
  %2302 = vmatpush1.msra.mxu0 %v2196
  %2303 = vmatprep.subr.mxu0 %v2201
  %2304 = vmatpush1.msra.mxu0 %v2200
  %2305 = vmatprep.subr.mxu0 0.0
  %2306 = vmatpush1.msra.mxu0 0.0
  %2307 = vmatprep.subr.mxu0 0.0
  %2308 = vmatpush1.msra.mxu0 0.0
  %2309 = vmatprep.subr.mxu0 0.0
  %2310 = vmatpush1.msra.mxu0 0.0
  %2311 = vmatprep.subr.mxu0 0.0
  %2312 = vmatpush1.msra.mxu0 0.0
  %2313 = vmatprep.subr.mxu0 0.0
  %2314 = vmatpush1.msra.mxu0 0.0
  %2315 = vmatprep.subr.mxu0 0.0
  %2316 = vmatpush1.msra.mxu0 0.0
  %2317 = vmatprep.subr.mxu0 0.0
  %2318 = vmatpush1.msra.mxu0 0.0
  %2319 = vmatprep.subr.mxu0 0.0
  %2320 = vmatpush1.msra.mxu0 0.0
  %2321 = vmatprep.subr.mxu0 0.0
  %2322 = vmatpush1.msra.mxu0 0.0
  %2323 = vmatprep.subr.mxu0 0.0
  %2324 = vmatpush1.msra.mxu0 0.0
  %2325 = vmatprep.subr.mxu0 0.0
  %2326 = vmatpush1.msra.mxu0 0.0
  %2327 = vmatprep.subr.mxu0 0.0
  %2328 = vmatpush1.msra.mxu0 0.0
  %2329 = vmatprep.subr.mxu0 0.0
  %2330 = vmatpush1.msra.mxu0 0.0
  %2331 = vmatprep.subr.mxu0 0.0
  %2332 = vmatpush1.msra.mxu0 0.0
  %2333 = vmatprep.subr.mxu0 0.0
  %2334 = vmatpush1.msra.mxu0 0.0
  %2335 = vmatprep.subr.mxu0 0.0
  %2336 = vmatpush1.msra.mxu0 0.0
  %2337 = vmatprep.mubr.f32.mxu0 0.0
  %2338 = vmatmul.mubr.f32.gmra.mrb[0].mxu0 %v2136
  %v2339 = vpop.f32.mrb[0].mxu0
  %v2340 = vadd.f32 %v296, %v2339
  %v2341 = vpop.f32.mrb[0].mxu0
  %v2342 = vadd.f32 %v300, %v2341
  %2343 = vdwg.mxu0
  %2344 = vmatprep.subr.mxu0 %v220
  %2345 = vmatpush1.msra.mxu0 %v219
  %2346 = vmatprep.subr.mxu0 %v224
  %2347 = vmatpush1.msra.mxu0 %v223
  %2348 = vmatprep.subr.mxu0 %v228
  %2349 = vmatpush1.msra.mxu0 %v227
  %2350 = vmatprep.subr.mxu0 %v232
  %2351 = vmatpush1.msra.mxu0 %v231
  %2352 = vmatprep.subr.mxu0 %v236
  %2353 = vmatpush1.msra.mxu0 %v235
  %2354 = vmatprep.subr.mxu0 %v240
  %2355 = vmatpush1.msra.mxu0 %v239
  %2356 = vmatprep.subr.mxu0 %v244
  %2357 = vmatpush1.msra.mxu0 %v243
  %2358 = vmatprep.subr.mxu0 %v248
  %2359 = vmatpush1.msra.mxu0 %v247
  %2360 = vmatprep.subr.mxu0 %v252
  %2361 = vmatpush1.msra.mxu0 %v251
  %2362 = vmatprep.subr.mxu0 %v256
  %2363 = vmatpush1.msra.mxu0 %v255
  %2364 = vmatprep.subr.mxu0 %v260
  %2365 = vmatpush1.msra.mxu0 %v259
  %2366 = vmatprep.subr.mxu0 %v264
  %2367 = vmatpush1.msra.mxu0 %v263
  %2368 = vmatprep.subr.mxu0 %v268
  %2369 = vmatpush1.msra.mxu0 %v267
  %2370 = vmatprep.subr.mxu0 %v272
  %2371 = vmatpush1.msra.mxu0 %v271
  %2372 = vmatprep.subr.mxu0 %v276
  %2373 = vmatpush1.msra.mxu0 %v275
  %2374 = vmatprep.subr.mxu0 %v280
  %2375 = vmatpush1.msra.mxu0 %v279
  %2376 = vmatprep.subr.mxu0 0.0
  %2377 = vmatpush1.msra.mxu0 0.0
  %2378 = vmatprep.subr.mxu0 0.0
  %2379 = vmatpush1.msra.mxu0 0.0
  %2380 = vmatprep.subr.mxu0 0.0
  %2381 = vmatpush1.msra.mxu0 0.0
  %2382 = vmatprep.subr.mxu0 0.0
  %2383 = vmatpush1.msra.mxu0 0.0
  %2384 = vmatprep.subr.mxu0 0.0
  %2385 = vmatpush1.msra.mxu0 0.0
  %2386 = vmatprep.subr.mxu0 0.0
  %2387 = vmatpush1.msra.mxu0 0.0
  %2388 = vmatprep.subr.mxu0 0.0
  %2389 = vmatpush1.msra.mxu0 0.0
  %2390 = vmatprep.subr.mxu0 0.0
  %2391 = vmatpush1.msra.mxu0 0.0
  %2392 = vmatprep.subr.mxu0 0.0
  %2393 = vmatpush1.msra.mxu0 0.0
  %2394 = vmatprep.subr.mxu0 0.0
  %2395 = vmatpush1.msra.mxu0 0.0
  %2396 = vmatprep.subr.mxu0 0.0
  %2397 = vmatpush1.msra.mxu0 0.0
  %2398 = vmatprep.subr.mxu0 0.0
  %2399 = vmatpush1.msra.mxu0 0.0
  %2400 = vmatprep.subr.mxu0 0.0
  %2401 = vmatpush1.msra.mxu0 0.0
  %2402 = vmatprep.subr.mxu0 0.0
  %2403 = vmatpush1.msra.mxu0 0.0
  %2404 = vmatprep.subr.mxu0 0.0
  %2405 = vmatpush1.msra.mxu0 0.0
  %2406 = vmatprep.subr.mxu0 0.0
  %2407 = vmatpush1.msra.mxu0 0.0
  %2408 = vmatprep.mubr.f32.mxu0 0.0
  %2409 = vmatmul.mubr.f32.gmra.mrb[0].mxu0 %v1902
  %v2410 = vpop.f32.mrb[0].mxu0
  %v2411 = vadd.f32 0.0, %v2410
  %v2412 = vpop.f32.mrb[0].mxu0
  %v2413 = vadd.f32 0.0, %v2412
  %2414 = vdwg.mxu0
  %2415 = vmatprep.subr.mxu0 %v222
  %2416 = vmatpush1.msra.mxu0 %v221
  %2417 = vmatprep.subr.mxu0 %v226
  %2418 = vmatpush1.msra.mxu0 %v225
  %2419 = vmatprep.subr.mxu0 %v230
  %2420 = vmatpush1.msra.mxu0 %v229
  %2421 = vmatprep.subr.mxu0 %v234
  %2422 = vmatpush1.msra.mxu0 %v233
  %2423 = vmatprep.subr.mxu0 %v238
  %2424 = vmatpush1.msra.mxu0 %v237
  %2425 = vmatprep.subr.mxu0 %v242
  %2426 = vmatpush1.msra.mxu0 %v241
  %2427 = vmatprep.subr.mxu0 %v246
  %2428 = vmatpush1.msra.mxu0 %v245
  %2429 = vmatprep.subr.mxu0 %v250
  %2430 = vmatpush1.msra.mxu0 %v249
  %2431 = vmatprep.subr.mxu0 %v254
  %2432 = vmatpush1.msra.mxu0 %v253
  %2433 = vmatprep.subr.mxu0 %v258
  %2434 = vmatpush1.msra.mxu0 %v257
  %2435 = vmatprep.subr.mxu0 %v262
  %2436 = vmatpush1.msra.mxu0 %v261
  %2437 = vmatprep.subr.mxu0 %v266
  %2438 = vmatpush1.msra.mxu0 %v265
  %2439 = vmatprep.subr.mxu0 %v270
  %2440 = vmatpush1.msra.mxu0 %v269
  %2441 = vmatprep.subr.mxu0 %v274
  %2442 = vmatpush1.msra.mxu0 %v273
  %2443 = vmatprep.subr.mxu0 %v278
  %2444 = vmatpush1.msra.mxu0 %v277
  %2445 = vmatprep.subr.mxu0 %v282
  %2446 = vmatpush1.msra.mxu0 %v281
  %2447 = vmatprep.subr.mxu0 0.0
  %2448 = vmatpush1.msra.mxu0 0.0
  %2449 = vmatprep.subr.mxu0 0.0
  %2450 = vmatpush1.msra.mxu0 0.0
  %2451 = vmatprep.subr.mxu0 0.0
  %2452 = vmatpush1.msra.mxu0 0.0
  %2453 = vmatprep.subr.mxu0 0.0
  %2454 = vmatpush1.msra.mxu0 0.0
  %2455 = vmatprep.subr.mxu0 0.0
  %2456 = vmatpush1.msra.mxu0 0.0
  %2457 = vmatprep.subr.mxu0 0.0
  %2458 = vmatpush1.msra.mxu0 0.0
  %2459 = vmatprep.subr.mxu0 0.0
  %2460 = vmatpush1.msra.mxu0 0.0
  %2461 = vmatprep.subr.mxu0 0.0
  %2462 = vmatpush1.msra.mxu0 0.0
  %2463 = vmatprep.subr.mxu0 0.0
  %2464 = vmatpush1.msra.mxu0 0.0
  %2465 = vmatprep.subr.mxu0 0.0
  %2466 = vmatpush1.msra.mxu0 0.0
  %2467 = vmatprep.subr.mxu0 0.0
  %2468 = vmatpush1.msra.mxu0 0.0
  %2469 = vmatprep.subr.mxu0 0.0
  %2470 = vmatpush1.msra.mxu0 0.0
  %2471 = vmatprep.subr.mxu0 0.0
  %2472 = vmatpush1.msra.mxu0 0.0
  %2473 = vmatprep.subr.mxu0 0.0
  %2474 = vmatpush1.msra.mxu0 0.0
  %2475 = vmatprep.subr.mxu0 0.0
  %2476 = vmatpush1.msra.mxu0 0.0
  %2477 = vmatprep.subr.mxu0 0.0
  %2478 = vmatpush1.msra.mxu0 0.0
  %2479 = vmatprep.mubr.f32.mxu0 0.0
  %2480 = vmatmul.mubr.f32.gmra.mrb[0].mxu0 %v1902
  %v2481 = vpop.f32.mrb[0].mxu0
  %v2482 = vadd.f32 0.0, %v2481
  %v2483 = vpop.f32.mrb[0].mxu0
  %v2484 = vadd.f32 0.0, %v2483
  %2485 = vdwg.mxu0
  %v2486 = vadd.f32 %v144, %v2411
  %v2487 = vadd.f32 %v146, %v2413
  %v2488 = vadd.f32 %v215, %v2482
  %v2489 = vadd.f32 %v217, %v2484
  %v2490 = vxor.u32 %v2486, 2147483648
  %v2491 = vxor.u32 %v2487, 2147483648
  %v2492 = vxor.u32 %v2488, 2147483648
  %v2493 = vmul.f32 %v2490, 1.442695
  %v2494 = vpow.pop %v2493
  %v2495 = vmul.f32 %v2491, 1.442695
  %v2496 = vpow.pop %v2495
  %v2497 = vmul.f32 %v2492, 1.442695
  %v2498 = vpow.pop %v2497
  %v2499 = vadd.f32 %v2494, 1.0
  %v2500 = vadd.f32 %v2496, 1.0
  %v2501 = vadd.f32 %v2498, 1.0
  %v2502 = vrcp.pop %v2499
  %v2503 = vmul.f32 1.0, %v2502
  %v2504 = vrcp.pop %v2500
  %v2505 = vmul.f32 1.0, %v2504
  %v2506 = vrcp.pop %v2501
  %v2507 = vmul.f32 1.0, %v2506
  %v2508 = vtanh.pop %v2489
  %v2509 = vmul.f32 %v2505, %v1900
  %v2510 = vmul.f32 %v2503, %v2508
  %v2511 = vadd.f32 %v2509, %v2510
  %v2512 = vtanh.pop %v2511
  %v2513 = vmul.f32 %v2507, %v2512
  %v2514 = vld [vmem:[%s4] sm:$0xff]
  %v2515 = vld [vmem:[%s4 + $0x8] sm:$0xff]
  %v2516 = vld [vmem:[%s4 + $0x10] sm:$0xff]
  %v2517 = vld [vmem:[%s4 + $0x18] sm:$0xff]
  %v2518 = vld [vmem:[%s4 + $0x20] sm:$0xff]
  %v2519 = vld [vmem:[%s4 + $0x28] sm:$0xff]
  %v2520 = vld [vmem:[%s4 + $0x30] sm:$0xff]
  %v2521 = vld [vmem:[%s4 + $0x38] sm:$0xff]
  %v2522 = vld [vmem:[%s4 + $0x40] sm:$0xff]
  %v2523 = vld [vmem:[%s4 + $0x48] sm:$0xff]
  %v2524 = vld [vmem:[%s4 + $0x50] sm:$0xff]
  %v2525 = vld [vmem:[%s4 + $0x58] sm:$0xff]
  %v2526 = vld [vmem:[%s4 + $0x60] sm:$0xff]
  %v2527 = vld [vmem:[%s4 + $0x68] sm:$0xff]
  %v2528 = vld [vmem:[%s4 + $0x70] sm:$0xff]
  %v2529 = vld [vmem:[%s4 + $0x78] sm:$0xff]
  %v2530 = vld [vmem:[%s4 + $0x80] sm:$0xff]
  %v2531 = vld [vmem:[%s4 + $0x88] sm:$0xff]
  %v2532 = vld [vmem:[%s4 + $0x90] sm:$0xff]
  %v2533 = vld [vmem:[%s4 + $0x98] sm:$0xff]
  %v2534 = vld [vmem:[%s4 + $0xa0] sm:$0xff]
  %v2535 = vld [vmem:[%s4 + $0xa8] sm:$0xff]
  %v2536 = vld [vmem:[%s4 + $0xb0] sm:$0xff]
  %v2537 = vld [vmem:[%s4 + $0xb8] sm:$0xff]
  %v2538 = vld [vmem:[%s4 + $0xc0] sm:$0xff]
  %v2539 = vld [vmem:[%s4 + $0xc8] sm:$0xff]
  %v2540 = vld [vmem:[%s4 + $0xd0] sm:$0xff]
  %v2541 = vld [vmem:[%s4 + $0xd8] sm:$0xff]
  %v2542 = vld [vmem:[%s4 + $0xe0] sm:$0xff]
  %v2543 = vld [vmem:[%s4 + $0xe8] sm:$0xff]
  %v2544 = vld [vmem:[%s4 + $0xf0] sm:$0xff]
  %v2545 = vld [vmem:[%s4 + $0xf8] sm:$0xff]
  %v2546 = vld [vmem:[%s4 + $0x100] sm:$0xff]
  %v2547 = vld [vmem:[%s4 + $0x108] sm:$0xff]
  %v2548 = vld [vmem:[%s4 + $0x110] sm:$0xff]
  %v2549 = vld [vmem:[%s4 + $0x118] sm:$0xff]
  %v2550 = vld [vmem:[%s4 + $0x120] sm:$0xff]
  %v2551 = vld [vmem:[%s4 + $0x128] sm:$0xff]
  %v2552 = vld [vmem:[%s4 + $0x130] sm:$0xff]
  %v2553 = vld [vmem:[%s4 + $0x138] sm:$0xff]
  %v2554 = vld [vmem:[%s4 + $0x140] sm:$0xff]
  %v2555 = vld [vmem:[%s4 + $0x148] sm:$0xff]
  %v2556 = vld [vmem:[%s4 + $0x150] sm:$0xff]
  %v2557 = vld [vmem:[%s4 + $0x158] sm:$0xff]
  %v2558 = vld [vmem:[%s4 + $0x160] sm:$0xff]
  %v2559 = vld [vmem:[%s4 + $0x168] sm:$0xff]
  %v2560 = vld [vmem:[%s4 + $0x170] sm:$0xff]
  %v2561 = vld [vmem:[%s4 + $0x178] sm:$0xff]
  %v2562 = vld [vmem:[%s4 + $0x180] sm:$0xff]
  %v2563 = vld [vmem:[%s4 + $0x188] sm:$0xff]
  %v2564 = vld [vmem:[%s4 + $0x190] sm:$0xff]
  %v2565 = vld [vmem:[%s4 + $0x198] sm:$0xff]
  %v2566 = vld [vmem:[%s4 + $0x1a0] sm:$0xff]
  %v2567 = vld [vmem:[%s4 + $0x1a8] sm:$0xff]
  %v2568 = vld [vmem:[%s4 + $0x1b0] sm:$0xff]
  %v2569 = vld [vmem:[%s4 + $0x1b8] sm:$0xff]
  %v2570 = vld [vmem:[%s4 + $0x1c0] sm:$0xff]
  %v2571 = vld [vmem:[%s4 + $0x1c8] sm:$0xff]
  %v2572 = vld [vmem:[%s4 + $0x1d0] sm:$0xff]
  %v2573 = vld [vmem:[%s4 + $0x1d8] sm:$0xff]
  %v2574 = vld [vmem:[%s4 + $0x1e0] sm:$0xff]
  %v2575 = vld [vmem:[%s4 + $0x1e8] sm:$0xff]
  %v2576 = vld [vmem:[%s4 + $0x1f0] sm:$0xff]
  %v2577 = vld [vmem:[%s4 + $0x1f8] sm:$0xff]
  %2578 = vmatprep.subr.mxu0 %v2515
  %2579 = vmatpush1.msra.mxu0 %v2514
  %2580 = vmatprep.subr.mxu0 %v2519
  %2581 = vmatpush1.msra.mxu0 %v2518
  %2582 = vmatprep.subr.mxu0 %v2523
  %2583 = vmatpush1.msra.mxu0 %v2522
  %2584 = vmatprep.subr.mxu0 %v2527
  %2585 = vmatpush1.msra.mxu0 %v2526
  %2586 = vmatprep.subr.mxu0 %v2531
  %2587 = vmatpush1.msra.mxu0 %v2530
  %2588 = vmatprep.subr.mxu0 %v2535
  %2589 = vmatpush1.msra.mxu0 %v2534
  %2590 = vmatprep.subr.mxu0 %v2539
  %2591 = vmatpush1.msra.mxu0 %v2538
  %2592 = vmatprep.subr.mxu0 %v2543
  %2593 = vmatpush1.msra.mxu0 %v2542
  %2594 = vmatprep.subr.mxu0 %v2547
  %2595 = vmatpush1.msra.mxu0 %v2546
  %2596 = vmatprep.subr.mxu0 %v2551
  %2597 = vmatpush1.msra.mxu0 %v2550
  %2598 = vmatprep.subr.mxu0 %v2555
  %2599 = vmatpush1.msra.mxu0 %v2554
  %2600 = vmatprep.subr.mxu0 %v2559
  %2601 = vmatpush1.msra.mxu0 %v2558
  %2602 = vmatprep.subr.mxu0 %v2563
  %2603 = vmatpush1.msra.mxu0 %v2562
  %2604 = vmatprep.subr.mxu0 %v2567
  %2605 = vmatpush1.msra.mxu0 %v2566
  %2606 = vmatprep.subr.mxu0 %v2571
  %2607 = vmatpush1.msra.mxu0 %v2570
  %2608 = vmatprep.subr.mxu0 %v2575
  %2609 = vmatpush1.msra.mxu0 %v2574
  %2610 = vmatprep.subr.mxu0 0.0
  %2611 = vmatpush1.msra.mxu0 0.0
  %2612 = vmatprep.subr.mxu0 0.0
  %2613 = vmatpush1.msra.mxu0 0.0
  %2614 = vmatprep.subr.mxu0 0.0
  %2615 = vmatpush1.msra.mxu0 0.0
  %2616 = vmatprep.subr.mxu0 0.0
  %2617 = vmatpush1.msra.mxu0 0.0
  %2618 = vmatprep.subr.mxu0 0.0
  %2619 = vmatpush1.msra.mxu0 0.0
  %2620 = vmatprep.subr.mxu0 0.0
  %2621 = vmatpush1.msra.mxu0 0.0
  %2622 = vmatprep.subr.mxu0 0.0
  %2623 = vmatpush1.msra.mxu0 0.0
  %2624 = vmatprep.subr.mxu0 0.0
  %2625 = vmatpush1.msra.mxu0 0.0
  %2626 = vmatprep.subr.mxu0 0.0
  %2627 = vmatpush1.msra.mxu0 0.0
  %2628 = vmatprep.subr.mxu0 0.0
  %2629 = vmatpush1.msra.mxu0 0.0
  %2630 = vmatprep.subr.mxu0 0.0
  %2631 = vmatpush1.msra.mxu0 0.0
  %2632 = vmatprep.subr.mxu0 0.0
  %2633 = vmatpush1.msra.mxu0 0.0
  %2634 = vmatprep.subr.mxu0 0.0
  %2635 = vmatpush1.msra.mxu0 0.0
  %2636 = vmatprep.subr.mxu0 0.0
  %2637 = vmatpush1.msra.mxu0 0.0
  %2638 = vmatprep.subr.mxu0 0.0
  %2639 = vmatpush1.msra.mxu0 0.0
  %2640 = vmatprep.subr.mxu0 0.0
  %2641 = vmatpush1.msra.mxu0 0.0
  %2642 = vmatprep.mubr.f32.mxu0 0.0
  %2643 = vmatmul.mubr.f32.gmra.mrb[0].mxu0 %v2513
  %v2644 = vpop.f32.mrb[0].mxu0
  %v2645 = vadd.f32 0.0, %v2644
  %v2646 = vpop.f32.mrb[0].mxu0
  %v2647 = vadd.f32 0.0, %v2646
  %2648 = vdwg.mxu0
  %2649 = vmatprep.subr.mxu0 %v2517
  %2650 = vmatpush1.msra.mxu0 %v2516
  %2651 = vmatprep.subr.mxu0 %v2521
  %2652 = vmatpush1.msra.mxu0 %v2520
  %2653 = vmatprep.subr.mxu0 %v2525
  %2654 = vmatpush1.msra.mxu0 %v2524
  %2655 = vmatprep.subr.mxu0 %v2529
  %2656 = vmatpush1.msra.mxu0 %v2528
  %2657 = vmatprep.subr.mxu0 %v2533
  %2658 = vmatpush1.msra.mxu0 %v2532
  %2659 = vmatprep.subr.mxu0 %v2537
  %2660 = vmatpush1.msra.mxu0 %v2536
  %2661 = vmatprep.subr.mxu0 %v2541
  %2662 = vmatpush1.msra.mxu0 %v2540
  %2663 = vmatprep.subr.mxu0 %v2545
  %2664 = vmatpush1.msra.mxu0 %v2544
  %2665 = vmatprep.subr.mxu0 %v2549
  %2666 = vmatpush1.msra.mxu0 %v2548
  %2667 = vmatprep.subr.mxu0 %v2553
  %2668 = vmatpush1.msra.mxu0 %v2552
  %2669 = vmatprep.subr.mxu0 %v2557
  %2670 = vmatpush1.msra.mxu0 %v2556
  %2671 = vmatprep.subr.mxu0 %v2561
  %2672 = vmatpush1.msra.mxu0 %v2560
  %2673 = vmatprep.subr.mxu0 %v2565
  %2674 = vmatpush1.msra.mxu0 %v2564
  %2675 = vmatprep.subr.mxu0 %v2569
  %2676 = vmatpush1.msra.mxu0 %v2568
  %2677 = vmatprep.subr.mxu0 %v2573
  %2678 = vmatpush1.msra.mxu0 %v2572
  %2679 = vmatprep.subr.mxu0 %v2577
  %2680 = vmatpush1.msra.mxu0 %v2576
  %2681 = vmatprep.subr.mxu0 0.0
  %2682 = vmatpush1.msra.mxu0 0.0
  %2683 = vmatprep.subr.mxu0 0.0
  %2684 = vmatpush1.msra.mxu0 0.0
  %2685 = vmatprep.subr.mxu0 0.0
  %2686 = vmatpush1.msra.mxu0 0.0
  %2687 = vmatprep.subr.mxu0 0.0
  %2688 = vmatpush1.msra.mxu0 0.0
  %2689 = vmatprep.subr.mxu0 0.0
  %2690 = vmatpush1.msra.mxu0 0.0
  %2691 = vmatprep.subr.mxu0 0.0
  %2692 = vmatpush1.msra.mxu0 0.0
  %2693 = vmatprep.subr.mxu0 0.0
  %2694 = vmatpush1.msra.mxu0 0.0
  %2695 = vmatprep.subr.mxu0 0.0
  %2696 = vmatpush1.msra.mxu0 0.0
  %2697 = vmatprep.subr.mxu0 0.0
  %2698 = vmatpush1.msra.mxu0 0.0
  %2699 = vmatprep.subr.mxu0 0.0
  %2700 = vmatpush1.msra.mxu0 0.0
  %2701 = vmatprep.subr.mxu0 0.0
  %2702 = vmatpush1.msra.mxu0 0.0
  %2703 = vmatprep.subr.mxu0 0.0
  %2704 = vmatpush1.msra.mxu0 0.0
  %2705 = vmatprep.subr.mxu0 0.0
  %2706 = vmatpush1.msra.mxu0 0.0
  %2707 = vmatprep.subr.mxu0 0.0
  %2708 = vmatpush1.msra.mxu0 0.0
  %2709 = vmatprep.subr.mxu0 0.0
  %2710 = vmatpush1.msra.mxu0 0.0
  %2711 = vmatprep.subr.mxu0 0.0
  %2712 = vmatpush1.msra.mxu0 0.0
  %2713 = vmatprep.mubr.f32.mxu0 0.0
  %2714 = vmatmul.mubr.f32.gmra.mrb[0].mxu0 %v2513
  %v2715 = vpop.f32.mrb[0].mxu0
  %v2716 = vadd.f32 0.0, %v2715
  %v2717 = vpop.f32.mrb[0].mxu0
  %v2718 = vadd.f32 0.0, %v2717
  %2719 = vdwg.mxu0
  %v2720 = vadd.f32 %v2269, %v2645
  %v2721 = vadd.f32 %v2271, %v2647
  %v2722 = vadd.f32 %v2340, %v2716
  %v2723 = vadd.f32 %v2342, %v2718
  %v2724 = vxor.u32 %v2720, 2147483648
  %v2725 = vxor.u32 %v2721, 2147483648
  %v2726 = vxor.u32 %v2722, 2147483648
  %v2727 = vmul.f32 %v2724, 1.442695
  %v2728 = vpow.pop %v2727
  %v2729 = vmul.f32 %v2725, 1.442695
  %v2730 = vpow.pop %v2729
  %v2731 = vmul.f32 %v2726, 1.442695
  %v2732 = vpow.pop %v2731
  %v2733 = vadd.f32 %v2728, 1.0
  %v2734 = vadd.f32 %v2730, 1.0
  %v2735 = vadd.f32 %v2732, 1.0
  %v2736 = vrcp.pop %v2733
  %v2737 = vmul.f32 1.0, %v2736
  %v2738 = vrcp.pop %v2734
  %v2739 = vmul.f32 1.0, %v2738
  %v2740 = vrcp.pop %v2735
  %v2741 = vmul.f32 1.0, %v2740
  %v2742 = vtanh.pop %v2723
  %v2743 = vmul.f32 %v2739, %v2134
  %v2744 = vmul.f32 %v2737, %v2742
  %v2745 = vadd.f32 %v2743, %v2744
  %v2746 = vtanh.pop %v2745
  %v2747 = vmul.f32 %v2741, %v2746
  %2748 = vst [vmem:[#allocation2 + $0x18] sm:$0xff] %v2747
  %v2749 = vld [vmem:[%s5] sm:$0xff]
  %v2750 = vld [vmem:[%s5 + $0x8] sm:$0xff]
  %v2751 = vld [vmem:[%s5 + $0x10] sm:$0xff]
  %v2752 = vld [vmem:[%s5 + $0x18] sm:$0xff]
  %v2753 = vld [vmem:[%s5 + $0x20] sm:$0xff]
  %v2754 = vld [vmem:[%s5 + $0x28] sm:$0xff]
  %v2755 = vld [vmem:[%s5 + $0x30] sm:$0xff]
  %v2756 = vld [vmem:[%s5 + $0x38] sm:$0xff]
  %v2757 = vld [vmem:[%s5 + $0x40] sm:$0xff]
  %v2758 = vld [vmem:[%s5 + $0x48] sm:$0xff]
  %v2759 = vld [vmem:[%s5 + $0x50] sm:$0xff]
  %v2760 = vld [vmem:[%s5 + $0x58] sm:$0xff]
  %v2761 = vld [vmem:[%s5 + $0x60] sm:$0xff]
  %v2762 = vld [vmem:[%s5 + $0x68] sm:$0xff]
  %v2763 = vld [vmem:[%s5 + $0x70] sm:$0xff]
  %v2764 = vld [vmem:[%s5 + $0x78] sm:$0xff]
  %v2765 = vld [vmem:[%s5 + $0x80] sm:$0xff]
  %v2766 = vld [vmem:[%s5 + $0x88] sm:$0xff]
  %v2767 = vld [vmem:[%s5 + $0x90] sm:$0xff]
  %v2768 = vld [vmem:[%s5 + $0x98] sm:$0xff]
  %v2769 = vld [vmem:[%s5 + $0xa0] sm:$0xff]
  %v2770 = vld [vmem:[%s5 + $0xa8] sm:$0xff]
  %v2771 = vld [vmem:[%s5 + $0xb0] sm:$0xff]
  %v2772 = vld [vmem:[%s5 + $0xb8] sm:$0xff]
  %v2773 = vld [vmem:[%s5 + $0xc0] sm:$0xff]
  %v2774 = vld [vmem:[%s5 + $0xc8] sm:$0xff]
  %v2775 = vld [vmem:[%s5 + $0xd0] sm:$0xff]
  %v2776 = vld [vmem:[%s5 + $0xd8] sm:$0xff]
  %v2777 = vld [vmem:[%s5 + $0xe0] sm:$0xff]
  %v2778 = vld [vmem:[%s5 + $0xe8] sm:$0xff]
  %v2779 = vld [vmem:[%s5 + $0xf0] sm:$0xff]
  %v2780 = vld [vmem:[%s5 + $0xf8] sm:$0xff]
  %v2781 = vld [vmem:[%s5 + $0x100] sm:$0xff]
  %v2782 = vld [vmem:[%s5 + $0x108] sm:$0xff]
  %v2783 = vld [vmem:[%s5 + $0x110] sm:$0xff]
  %v2784 = vld [vmem:[%s5 + $0x118] sm:$0xff]
  %v2785 = vld [vmem:[%s5 + $0x120] sm:$0xff]
  %v2786 = vld [vmem:[%s5 + $0x128] sm:$0xff]
  %v2787 = vld [vmem:[%s5 + $0x130] sm:$0xff]
  %v2788 = vld [vmem:[%s5 + $0x138] sm:$0xff]
  %v2789 = vld [vmem:[%s5 + $0x140] sm:$0xff]
  %v2790 = vld [vmem:[%s5 + $0x148] sm:$0xff]
  %v2791 = vld [vmem:[%s5 + $0x150] sm:$0xff]
  %v2792 = vld [vmem:[%s5 + $0x158] sm:$0xff]
  %v2793 = vld [vmem:[%s5 + $0x160] sm:$0xff]
  %v2794 = vld [vmem:[%s5 + $0x168] sm:$0xff]
  %v2795 = vld [vmem:[%s5 + $0x170] sm:$0xff]
  %v2796 = vld [vmem:[%s5 + $0x178] sm:$0xff]
  %v2797 = vld [vmem:[%s5 + $0x180] sm:$0xff]
  %v2798 = vld [vmem:[%s5 + $0x188] sm:$0xff]
  %v2799 = vld [vmem:[%s5 + $0x190] sm:$0xff]
  %v2800 = vld [vmem:[%s5 + $0x198] sm:$0xff]
  %v2801 = vld [vmem:[%s5 + $0x1a0] sm:$0xff]
  %v2802 = vld [vmem:[%s5 + $0x1a8] sm:$0xff]
  %v2803 = vld [vmem:[%s5 + $0x1b0] sm:$0xff]
  %v2804 = vld [vmem:[%s5 + $0x1b8] sm:$0xff]
  %v2805 = vld [vmem:[%s5 + $0x1c0] sm:$0xff]
  %v2806 = vld [vmem:[%s5 + $0x1c8] sm:$0xff]
  %v2807 = vld [vmem:[%s5 + $0x1d0] sm:$0xff]
  %v2808 = vld [vmem:[%s5 + $0x1d8] sm:$0xff]
  %v2809 = vld [vmem:[%s5 + $0x1e0] sm:$0xff]
  %v2810 = vld [vmem:[%s5 + $0x1e8] sm:$0xff]
  %v2811 = vld [vmem:[%s5 + $0x1f0] sm:$0xff]
  %v2812 = vld [vmem:[%s5 + $0x1f8] sm:$0xff]
  %2813 = vmatprep.subr.mxu0 %v2750
  %2814 = vmatpush1.msra.mxu0 %v2749
  %2815 = vmatprep.subr.mxu0 %v2754
  %2816 = vmatpush1.msra.mxu0 %v2753
  %2817 = vmatprep.subr.mxu0 %v2758
  %2818 = vmatpush1.msra.mxu0 %v2757
  %2819 = vmatprep.subr.mxu0 %v2762
  %2820 = vmatpush1.msra.mxu0 %v2761
  %2821 = vmatprep.subr.mxu0 %v2766
  %2822 = vmatpush1.msra.mxu0 %v2765
  %2823 = vmatprep.subr.mxu0 %v2770
  %2824 = vmatpush1.msra.mxu0 %v2769
  %2825 = vmatprep.subr.mxu0 %v2774
  %2826 = vmatpush1.msra.mxu0 %v2773
  %2827 = vmatprep.subr.mxu0 %v2778
  %2828 = vmatpush1.msra.mxu0 %v2777
  %2829 = vmatprep.subr.mxu0 %v2782
  %2830 = vmatpush1.msra.mxu0 %v2781
  %2831 = vmatprep.subr.mxu0 %v2786
  %2832 = vmatpush1.msra.mxu0 %v2785
  %2833 = vmatprep.subr.mxu0 %v2790
  %2834 = vmatpush1.msra.mxu0 %v2789
  %2835 = vmatprep.subr.mxu0 %v2794
  %2836 = vmatpush1.msra.mxu0 %v2793
  %2837 = vmatprep.subr.mxu0 %v2798
  %2838 = vmatpush1.msra.mxu0 %v2797
  %2839 = vmatprep.subr.mxu0 %v2802
  %2840 = vmatpush1.msra.mxu0 %v2801
  %2841 = vmatprep.subr.mxu0 %v2806
  %2842 = vmatpush1.msra.mxu0 %v2805
  %2843 = vmatprep.subr.mxu0 %v2810
  %2844 = vmatpush1.msra.mxu0 %v2809
  %2845 = vmatprep.subr.mxu0 0.0
  %2846 = vmatpush1.msra.mxu0 0.0
  %2847 = vmatprep.subr.mxu0 0.0
  %2848 = vmatpush1.msra.mxu0 0.0
  %2849 = vmatprep.subr.mxu0 0.0
  %2850 = vmatpush1.msra.mxu0 0.0
  %2851 = vmatprep.subr.mxu0 0.0
  %2852 = vmatpush1.msra.mxu0 0.0
  %2853 = vmatprep.subr.mxu0 0.0
  %2854 = vmatpush1.msra.mxu0 0.0
  %2855 = vmatprep.subr.mxu0 0.0
  %2856 = vmatpush1.msra.mxu0 0.0
  %2857 = vmatprep.subr.mxu0 0.0
  %2858 = vmatpush1.msra.mxu0 0.0
  %2859 = vmatprep.subr.mxu0 0.0
  %2860 = vmatpush1.msra.mxu0 0.0
  %2861 = vmatprep.subr.mxu0 0.0
  %2862 = vmatpush1.msra.mxu0 0.0
  %2863 = vmatprep.subr.mxu0 0.0
  %2864 = vmatpush1.msra.mxu0 0.0
  %2865 = vmatprep.subr.mxu0 0.0
  %2866 = vmatpush1.msra.mxu0 0.0
  %2867 = vmatprep.subr.mxu0 0.0
  %2868 = vmatpush1.msra.mxu0 0.0
  %2869 = vmatprep.subr.mxu0 0.0
  %2870 = vmatpush1.msra.mxu0 0.0
  %2871 = vmatprep.subr.mxu0 0.0
  %2872 = vmatpush1.msra.mxu0 0.0
  %2873 = vmatprep.subr.mxu0 0.0
  %2874 = vmatpush1.msra.mxu0 0.0
  %2875 = vmatprep.subr.mxu0 0.0
  %2876 = vmatpush1.msra.mxu0 0.0
  %2877 = vmatprep.mubr.f32.mxu0 0.0
  %2878 = vmatmul.mubr.f32.gmra.mrb[0].mxu0 %v2747
  %v2879 = vpop.f32.mrb[0].mxu0
  %v2880 = vadd.f32 %v288, %v2879
  %v2881 = vpop.f32.mrb[0].mxu0
  %v2882 = vadd.f32 %v292, %v2881
  %2883 = vdwg.mxu0
  %2884 = vmatprep.subr.mxu0 %v2752
  %2885 = vmatpush1.msra.mxu0 %v2751
  %2886 = vmatprep.subr.mxu0 %v2756
  %2887 = vmatpush1.msra.mxu0 %v2755
  %2888 = vmatprep.subr.mxu0 %v2760
  %2889 = vmatpush1.msra.mxu0 %v2759
  %2890 = vmatprep.subr.mxu0 %v2764
  %2891 = vmatpush1.msra.mxu0 %v2763
  %2892 = vmatprep.subr.mxu0 %v2768
  %2893 = vmatpush1.msra.mxu0 %v2767
  %2894 = vmatprep.subr.mxu0 %v2772
  %2895 = vmatpush1.msra.mxu0 %v2771
  %2896 = vmatprep.subr.mxu0 %v2776
  %2897 = vmatpush1.msra.mxu0 %v2775
  %2898 = vmatprep.subr.mxu0 %v2780
  %2899 = vmatpush1.msra.mxu0 %v2779
  %2900 = vmatprep.subr.mxu0 %v2784
  %2901 = vmatpush1.msra.mxu0 %v2783
  %2902 = vmatprep.subr.mxu0 %v2788
  %2903 = vmatpush1.msra.mxu0 %v2787
  %2904 = vmatprep.subr.mxu0 %v2792
  %2905 = vmatpush1.msra.mxu0 %v2791
  %2906 = vmatprep.subr.mxu0 %v2796
  %2907 = vmatpush1.msra.mxu0 %v2795
  %2908 = vmatprep.subr.mxu0 %v2800
  %2909 = vmatpush1.msra.mxu0 %v2799
  %2910 = vmatprep.subr.mxu0 %v2804
  %2911 = vmatpush1.msra.mxu0 %v2803
  %2912 = vmatprep.subr.mxu0 %v2808
  %2913 = vmatpush1.msra.mxu0 %v2807
  %2914 = vmatprep.subr.mxu0 %v2812
  %2915 = vmatpush1.msra.mxu0 %v2811
  %2916 = vmatprep.subr.mxu0 0.0
  %2917 = vmatpush1.msra.mxu0 0.0
  %2918 = vmatprep.subr.mxu0 0.0
  %2919 = vmatpush1.msra.mxu0 0.0
  %2920 = vmatprep.subr.mxu0 0.0
  %2921 = vmatpush1.msra.mxu0 0.0
  %2922 = vmatprep.subr.mxu0 0.0
  %2923 = vmatpush1.msra.mxu0 0.0
  %2924 = vmatprep.subr.mxu0 0.0
  %2925 = vmatpush1.msra.mxu0 0.0
  %2926 = vmatprep.subr.mxu0 0.0
  %2927 = vmatpush1.msra.mxu0 0.0
  %2928 = vmatprep.subr.mxu0 0.0
  %2929 = vmatpush1.msra.mxu0 0.0
  %2930 = vmatprep.subr.mxu0 0.0
  %2931 = vmatpush1.msra.mxu0 0.0
  %2932 = vmatprep.subr.mxu0 0.0
  %2933 = vmatpush1.msra.mxu0 0.0
  %2934 = vmatprep.subr.mxu0 0.0
  %2935 = vmatpush1.msra.mxu0 0.0
  %2936 = vmatprep.subr.mxu0 0.0
  %2937 = vmatpush1.msra.mxu0 0.0
  %2938 = vmatprep.subr.mxu0 0.0
  %2939 = vmatpush1.msra.mxu0 0.0
  %2940 = vmatprep.subr.mxu0 0.0
  %2941 = vmatpush1.msra.mxu0 0.0
  %2942 = vmatprep.subr.mxu0 0.0
  %2943 = vmatpush1.msra.mxu0 0.0
  %2944 = vmatprep.subr.mxu0 0.0
  %2945 = vmatpush1.msra.mxu0 0.0
  %2946 = vmatprep.subr.mxu0 0.0
  %2947 = vmatpush1.msra.mxu0 0.0
  %2948 = vmatprep.mubr.f32.mxu0 0.0
  %2949 = vmatmul.mubr.f32.gmra.mrb[0].mxu0 %v2747
  %v2950 = vpop.f32.mrb[0].mxu0
  %v2951 = vadd.f32 %v296, %v2950
  %v2952 = vpop.f32.mrb[0].mxu0
  %v2953 = vadd.f32 %v300, %v2952
  %2954 = vdwg.mxu0
  %2955 = vmatprep.subr.mxu0 %v220
  %2956 = vmatpush1.msra.mxu0 %v219
  %2957 = vmatprep.subr.mxu0 %v224
  %2958 = vmatpush1.msra.mxu0 %v223
  %2959 = vmatprep.subr.mxu0 %v228
  %2960 = vmatpush1.msra.mxu0 %v227
  %2961 = vmatprep.subr.mxu0 %v232
  %2962 = vmatpush1.msra.mxu0 %v231
  %2963 = vmatprep.subr.mxu0 %v236
  %2964 = vmatpush1.msra.mxu0 %v235
  %2965 = vmatprep.subr.mxu0 %v240
  %2966 = vmatpush1.msra.mxu0 %v239
  %2967 = vmatprep.subr.mxu0 %v244
  %2968 = vmatpush1.msra.mxu0 %v243
  %2969 = vmatprep.subr.mxu0 %v248
  %2970 = vmatpush1.msra.mxu0 %v247
  %2971 = vmatprep.subr.mxu0 %v252
  %2972 = vmatpush1.msra.mxu0 %v251
  %2973 = vmatprep.subr.mxu0 %v256
  %2974 = vmatpush1.msra.mxu0 %v255
  %2975 = vmatprep.subr.mxu0 %v260
  %2976 = vmatpush1.msra.mxu0 %v259
  %2977 = vmatprep.subr.mxu0 %v264
  %2978 = vmatpush1.msra.mxu0 %v263
  %2979 = vmatprep.subr.mxu0 %v268
  %2980 = vmatpush1.msra.mxu0 %v267
  %2981 = vmatprep.subr.mxu0 %v272
  %2982 = vmatpush1.msra.mxu0 %v271
  %2983 = vmatprep.subr.mxu0 %v276
  %2984 = vmatpush1.msra.mxu0 %v275
  %2985 = vmatprep.subr.mxu0 %v280
  %2986 = vmatpush1.msra.mxu0 %v279
  %2987 = vmatprep.subr.mxu0 0.0
  %2988 = vmatpush1.msra.mxu0 0.0
  %2989 = vmatprep.subr.mxu0 0.0
  %2990 = vmatpush1.msra.mxu0 0.0
  %2991 = vmatprep.subr.mxu0 0.0
  %2992 = vmatpush1.msra.mxu0 0.0
  %2993 = vmatprep.subr.mxu0 0.0
  %2994 = vmatpush1.msra.mxu0 0.0
  %2995 = vmatprep.subr.mxu0 0.0
  %2996 = vmatpush1.msra.mxu0 0.0
  %2997 = vmatprep.subr.mxu0 0.0
  %2998 = vmatpush1.msra.mxu0 0.0
  %2999 = vmatprep.subr.mxu0 0.0
  %3000 = vmatpush1.msra.mxu0 0.0
  %3001 = vmatprep.subr.mxu0 0.0
  %3002 = vmatpush1.msra.mxu0 0.0
  %3003 = vmatprep.subr.mxu0 0.0
  %3004 = vmatpush1.msra.mxu0 0.0
  %3005 = vmatprep.subr.mxu0 0.0
  %3006 = vmatpush1.msra.mxu0 0.0
  %3007 = vmatprep.subr.mxu0 0.0
  %3008 = vmatpush1.msra.mxu0 0.0
  %3009 = vmatprep.subr.mxu0 0.0
  %3010 = vmatpush1.msra.mxu0 0.0
  %3011 = vmatprep.subr.mxu0 0.0
  %3012 = vmatpush1.msra.mxu0 0.0
  %3013 = vmatprep.subr.mxu0 0.0
  %3014 = vmatpush1.msra.mxu0 0.0
  %3015 = vmatprep.subr.mxu0 0.0
  %3016 = vmatpush1.msra.mxu0 0.0
  %3017 = vmatprep.subr.mxu0 0.0
  %3018 = vmatpush1.msra.mxu0 0.0
  %3019 = vmatprep.mubr.f32.mxu0 0.0
  %3020 = vmatmul.mubr.f32.gmra.mrb[0].mxu0 %v2513
  %v3021 = vpop.f32.mrb[0].mxu0
  %v3022 = vadd.f32 0.0, %v3021
  %v3023 = vpop.f32.mrb[0].mxu0
  %v3024 = vadd.f32 0.0, %v3023
  %3025 = vdwg.mxu0
  %3026 = vmatprep.subr.mxu0 %v222
  %3027 = vmatpush1.msra.mxu0 %v221
  %3028 = vmatprep.subr.mxu0 %v226
  %3029 = vmatpush1.msra.mxu0 %v225
  %3030 = vmatprep.subr.mxu0 %v230
  %3031 = vmatpush1.msra.mxu0 %v229
  %3032 = vmatprep.subr.mxu0 %v234
  %3033 = vmatpush1.msra.mxu0 %v233
  %3034 = vmatprep.subr.mxu0 %v238
  %3035 = vmatpush1.msra.mxu0 %v237
  %3036 = vmatprep.subr.mxu0 %v242
  %3037 = vmatpush1.msra.mxu0 %v241
  %3038 = vmatprep.subr.mxu0 %v246
  %3039 = vmatpush1.msra.mxu0 %v245
  %3040 = vmatprep.subr.mxu0 %v250
  %3041 = vmatpush1.msra.mxu0 %v249
  %3042 = vmatprep.subr.mxu0 %v254
  %3043 = vmatpush1.msra.mxu0 %v253
  %3044 = vmatprep.subr.mxu0 %v258
  %3045 = vmatpush1.msra.mxu0 %v257
  %3046 = vmatprep.subr.mxu0 %v262
  %3047 = vmatpush1.msra.mxu0 %v261
  %3048 = vmatprep.subr.mxu0 %v266
  %3049 = vmatpush1.msra.mxu0 %v265
  %3050 = vmatprep.subr.mxu0 %v270
  %3051 = vmatpush1.msra.mxu0 %v269
  %3052 = vmatprep.subr.mxu0 %v274
  %3053 = vmatpush1.msra.mxu0 %v273
  %3054 = vmatprep.subr.mxu0 %v278
  %3055 = vmatpush1.msra.mxu0 %v277
  %3056 = vmatprep.subr.mxu0 %v282
  %3057 = vmatpush1.msra.mxu0 %v281
  %3058 = vmatprep.subr.mxu0 0.0
  %3059 = vmatpush1.msra.mxu0 0.0
  %3060 = vmatprep.subr.mxu0 0.0
  %3061 = vmatpush1.msra.mxu0 0.0
  %3062 = vmatprep.subr.mxu0 0.0
  %3063 = vmatpush1.msra.mxu0 0.0
  %3064 = vmatprep.subr.mxu0 0.0
  %3065 = vmatpush1.msra.mxu0 0.0
  %3066 = vmatprep.subr.mxu0 0.0
  %3067 = vmatpush1.msra.mxu0 0.0
  %3068 = vmatprep.subr.mxu0 0.0
  %3069 = vmatpush1.msra.mxu0 0.0
  %3070 = vmatprep.subr.mxu0 0.0
  %3071 = vmatpush1.msra.mxu0 0.0
  %3072 = vmatprep.subr.mxu0 0.0
  %3073 = vmatpush1.msra.mxu0 0.0
  %3074 = vmatprep.subr.mxu0 0.0
  %3075 = vmatpush1.msra.mxu0 0.0
  %3076 = vmatprep.subr.mxu0 0.0
  %3077 = vmatpush1.msra.mxu0 0.0
  %3078 = vmatprep.subr.mxu0 0.0
  %3079 = vmatpush1.msra.mxu0 0.0
  %3080 = vmatprep.subr.mxu0 0.0
  %3081 = vmatpush1.msra.mxu0 0.0
  %3082 = vmatprep.subr.mxu0 0.0
  %3083 = vmatpush1.msra.mxu0 0.0
  %3084 = vmatprep.subr.mxu0 0.0
  %3085 = vmatpush1.msra.mxu0 0.0
  %3086 = vmatprep.subr.mxu0 0.0
  %3087 = vmatpush1.msra.mxu0 0.0
  %3088 = vmatprep.subr.mxu0 0.0
  %3089 = vmatpush1.msra.mxu0 0.0
  %3090 = vmatprep.mubr.f32.mxu0 0.0
  %3091 = vmatmul.mubr.f32.gmra.mrb[0].mxu0 %v2513
  %v3092 = vpop.f32.mrb[0].mxu0
  %v3093 = vadd.f32 0.0, %v3092
  %v3094 = vpop.f32.mrb[0].mxu0
  %v3095 = vadd.f32 0.0, %v3094
  %3096 = vdwg.mxu0
  %v3097 = vadd.f32 %v144, %v3022
  %v3098 = vadd.f32 %v146, %v3024
  %v3099 = vadd.f32 %v215, %v3093
  %v3100 = vadd.f32 %v217, %v3095
  %v3101 = vxor.u32 %v3097, 2147483648
  %v3102 = vxor.u32 %v3098, 2147483648
  %v3103 = vxor.u32 %v3099, 2147483648
  %v3104 = vmul.f32 %v3101, 1.442695
  %v3105 = vpow.pop %v3104
  %v3106 = vmul.f32 %v3102, 1.442695
  %v3107 = vpow.pop %v3106
  %v3108 = vmul.f32 %v3103, 1.442695
  %v3109 = vpow.pop %v3108
  %v3110 = vadd.f32 %v3105, 1.0
  %v3111 = vadd.f32 %v3107, 1.0
  %v3112 = vadd.f32 %v3109, 1.0
  %v3113 = vrcp.pop %v3110
  %v3114 = vmul.f32 1.0, %v3113
  %v3115 = vrcp.pop %v3111
  %v3116 = vmul.f32 1.0, %v3115
  %v3117 = vrcp.pop %v3112
  %v3118 = vmul.f32 1.0, %v3117
  %v3119 = vtanh.pop %v3100
  %v3120 = vmul.f32 %v3116, %v2511
  %v3121 = vmul.f32 %v3114, %v3119
  %v3122 = vadd.f32 %v3120, %v3121
  %v3123 = vtanh.pop %v3122
  %v3124 = vmul.f32 %v3118, %v3123
  %v3125 = vld [vmem:[%s4] sm:$0xff]
  %v3126 = vld [vmem:[%s4 + $0x8] sm:$0xff]
  %v3127 = vld [vmem:[%s4 + $0x10] sm:$0xff]
  %v3128 = vld [vmem:[%s4 + $0x18] sm:$0xff]
  %v3129 = vld [vmem:[%s4 + $0x20] sm:$0xff]
  %v3130 = vld [vmem:[%s4 + $0x28] sm:$0xff]
  %v3131 = vld [vmem:[%s4 + $0x30] sm:$0xff]
  %v3132 = vld [vmem:[%s4 + $0x38] sm:$0xff]
  %v3133 = vld [vmem:[%s4 + $0x40] sm:$0xff]
  %v3134 = vld [vmem:[%s4 + $0x48] sm:$0xff]
  %v3135 = vld [vmem:[%s4 + $0x50] sm:$0xff]
  %v3136 = vld [vmem:[%s4 + $0x58] sm:$0xff]
  %v3137 = vld [vmem:[%s4 + $0x60] sm:$0xff]
  %v3138 = vld [vmem:[%s4 + $0x68] sm:$0xff]
  %v3139 = vld [vmem:[%s4 + $0x70] sm:$0xff]
  %v3140 = vld [vmem:[%s4 + $0x78] sm:$0xff]
  %v3141 = vld [vmem:[%s4 + $0x80] sm:$0xff]
  %v3142 = vld [vmem:[%s4 + $0x88] sm:$0xff]
  %v3143 = vld [vmem:[%s4 + $0x90] sm:$0xff]
  %v3144 = vld [vmem:[%s4 + $0x98] sm:$0xff]
  %v3145 = vld [vmem:[%s4 + $0xa0] sm:$0xff]
  %v3146 = vld [vmem:[%s4 + $0xa8] sm:$0xff]
  %v3147 = vld [vmem:[%s4 + $0xb0] sm:$0xff]
  %v3148 = vld [vmem:[%s4 + $0xb8] sm:$0xff]
  %v3149 = vld [vmem:[%s4 + $0xc0] sm:$0xff]
  %v3150 = vld [vmem:[%s4 + $0xc8] sm:$0xff]
  %v3151 = vld [vmem:[%s4 + $0xd0] sm:$0xff]
  %v3152 = vld [vmem:[%s4 + $0xd8] sm:$0xff]
  %v3153 = vld [vmem:[%s4 + $0xe0] sm:$0xff]
  %v3154 = vld [vmem:[%s4 + $0xe8] sm:$0xff]
  %v3155 = vld [vmem:[%s4 + $0xf0] sm:$0xff]
  %v3156 = vld [vmem:[%s4 + $0xf8] sm:$0xff]
  %v3157 = vld [vmem:[%s4 + $0x100] sm:$0xff]
  %v3158 = vld [vmem:[%s4 + $0x108] sm:$0xff]
  %v3159 = vld [vmem:[%s4 + $0x110] sm:$0xff]
  %v3160 = vld [vmem:[%s4 + $0x118] sm:$0xff]
  %v3161 = vld [vmem:[%s4 + $0x120] sm:$0xff]
  %v3162 = vld [vmem:[%s4 + $0x128] sm:$0xff]
  %v3163 = vld [vmem:[%s4 + $0x130] sm:$0xff]
  %v3164 = vld [vmem:[%s4 + $0x138] sm:$0xff]
  %v3165 = vld [vmem:[%s4 + $0x140] sm:$0xff]
  %v3166 = vld [vmem:[%s4 + $0x148] sm:$0xff]
  %v3167 = vld [vmem:[%s4 + $0x150] sm:$0xff]
  %v3168 = vld [vmem:[%s4 + $0x158] sm:$0xff]
  %v3169 = vld [vmem:[%s4 + $0x160] sm:$0xff]
  %v3170 = vld [vmem:[%s4 + $0x168] sm:$0xff]
  %v3171 = vld [vmem:[%s4 + $0x170] sm:$0xff]
  %v3172 = vld [vmem:[%s4 + $0x178] sm:$0xff]
  %v3173 = vld [vmem:[%s4 + $0x180] sm:$0xff]
  %v3174 = vld [vmem:[%s4 + $0x188] sm:$0xff]
  %v3175 = vld [vmem:[%s4 + $0x190] sm:$0xff]
  %v3176 = vld [vmem:[%s4 + $0x198] sm:$0xff]
  %v3177 = vld [vmem:[%s4 + $0x1a0] sm:$0xff]
  %v3178 = vld [vmem:[%s4 + $0x1a8] sm:$0xff]
  %v3179 = vld [vmem:[%s4 + $0x1b0] sm:$0xff]
  %v3180 = vld [vmem:[%s4 + $0x1b8] sm:$0xff]
  %v3181 = vld [vmem:[%s4 + $0x1c0] sm:$0xff]
  %v3182 = vld [vmem:[%s4 + $0x1c8] sm:$0xff]
  %v3183 = vld [vmem:[%s4 + $0x1d0] sm:$0xff]
  %v3184 = vld [vmem:[%s4 + $0x1d8] sm:$0xff]
  %v3185 = vld [vmem:[%s4 + $0x1e0] sm:$0xff]
  %v3186 = vld [vmem:[%s4 + $0x1e8] sm:$0xff]
  %v3187 = vld [vmem:[%s4 + $0x1f0] sm:$0xff]
  %v3188 = vld [vmem:[%s4 + $0x1f8] sm:$0xff]
  %3189 = vmatprep.subr.mxu0 %v3126
  %3190 = vmatpush1.msra.mxu0 %v3125
  %3191 = vmatprep.subr.mxu0 %v3130
  %3192 = vmatpush1.msra.mxu0 %v3129
  %3193 = vmatprep.subr.mxu0 %v3134
  %3194 = vmatpush1.msra.mxu0 %v3133
  %3195 = vmatprep.subr.mxu0 %v3138
  %3196 = vmatpush1.msra.mxu0 %v3137
  %3197 = vmatprep.subr.mxu0 %v3142
  %3198 = vmatpush1.msra.mxu0 %v3141
  %3199 = vmatprep.subr.mxu0 %v3146
  %3200 = vmatpush1.msra.mxu0 %v3145
  %3201 = vmatprep.subr.mxu0 %v3150
  %3202 = vmatpush1.msra.mxu0 %v3149
  %3203 = vmatprep.subr.mxu0 %v3154
  %3204 = vmatpush1.msra.mxu0 %v3153
  %3205 = vmatprep.subr.mxu0 %v3158
  %3206 = vmatpush1.msra.mxu0 %v3157
  %3207 = vmatprep.subr.mxu0 %v3162
  %3208 = vmatpush1.msra.mxu0 %v3161
  %3209 = vmatprep.subr.mxu0 %v3166
  %3210 = vmatpush1.msra.mxu0 %v3165
  %3211 = vmatprep.subr.mxu0 %v3170
  %3212 = vmatpush1.msra.mxu0 %v3169
  %3213 = vmatprep.subr.mxu0 %v3174
  %3214 = vmatpush1.msra.mxu0 %v3173
  %3215 = vmatprep.subr.mxu0 %v3178
  %3216 = vmatpush1.msra.mxu0 %v3177
  %3217 = vmatprep.subr.mxu0 %v3182
  %3218 = vmatpush1.msra.mxu0 %v3181
  %3219 = vmatprep.subr.mxu0 %v3186
  %3220 = vmatpush1.msra.mxu0 %v3185
  %3221 = vmatprep.subr.mxu0 0.0
  %3222 = vmatpush1.msra.mxu0 0.0
  %3223 = vmatprep.subr.mxu0 0.0
  %3224 = vmatpush1.msra.mxu0 0.0
  %3225 = vmatprep.subr.mxu0 0.0
  %3226 = vmatpush1.msra.mxu0 0.0
  %3227 = vmatprep.subr.mxu0 0.0
  %3228 = vmatpush1.msra.mxu0 0.0
  %3229 = vmatprep.subr.mxu0 0.0
  %3230 = vmatpush1.msra.mxu0 0.0
  %3231 = vmatprep.subr.mxu0 0.0
  %3232 = vmatpush1.msra.mxu0 0.0
  %3233 = vmatprep.subr.mxu0 0.0
  %3234 = vmatpush1.msra.mxu0 0.0
  %3235 = vmatprep.subr.mxu0 0.0
  %3236 = vmatpush1.msra.mxu0 0.0
  %3237 = vmatprep.subr.mxu0 0.0
  %3238 = vmatpush1.msra.mxu0 0.0
  %3239 = vmatprep.subr.mxu0 0.0
  %3240 = vmatpush1.msra.mxu0 0.0
  %3241 = vmatprep.subr.mxu0 0.0
  %3242 = vmatpush1.msra.mxu0 0.0
  %3243 = vmatprep.subr.mxu0 0.0
  %3244 = vmatpush1.msra.mxu0 0.0
  %3245 = vmatprep.subr.mxu0 0.0
  %3246 = vmatpush1.msra.mxu0 0.0
  %3247 = vmatprep.subr.mxu0 0.0
  %3248 = vmatpush1.msra.mxu0 0.0
  %3249 = vmatprep.subr.mxu0 0.0
  %3250 = vmatpush1.msra.mxu0 0.0
  %3251 = vmatprep.subr.mxu0 0.0
  %3252 = vmatpush1.msra.mxu0 0.0
  %3253 = vmatprep.mubr.f32.mxu0 0.0
  %3254 = vmatmul.mubr.f32.gmra.mrb[0].mxu0 %v3124
  %v3255 = vpop.f32.mrb[0].mxu0
  %v3256 = vadd.f32 0.0, %v3255
  %v3257 = vpop.f32.mrb[0].mxu0
  %v3258 = vadd.f32 0.0, %v3257
  %3259 = vdwg.mxu0
  %3260 = vmatprep.subr.mxu0 %v3128
  %3261 = vmatpush1.msra.mxu0 %v3127
  %3262 = vmatprep.subr.mxu0 %v3132
  %3263 = vmatpush1.msra.mxu0 %v3131
  %3264 = vmatprep.subr.mxu0 %v3136
  %3265 = vmatpush1.msra.mxu0 %v3135
  %3266 = vmatprep.subr.mxu0 %v3140
  %3267 = vmatpush1.msra.mxu0 %v3139
  %3268 = vmatprep.subr.mxu0 %v3144
  %3269 = vmatpush1.msra.mxu0 %v3143
  %3270 = vmatprep.subr.mxu0 %v3148
  %3271 = vmatpush1.msra.mxu0 %v3147
  %3272 = vmatprep.subr.mxu0 %v3152
  %3273 = vmatpush1.msra.mxu0 %v3151
  %3274 = vmatprep.subr.mxu0 %v3156
  %3275 = vmatpush1.msra.mxu0 %v3155
  %3276 = vmatprep.subr.mxu0 %v3160
  %3277 = vmatpush1.msra.mxu0 %v3159
  %3278 = vmatprep.subr.mxu0 %v3164
  %3279 = vmatpush1.msra.mxu0 %v3163
  %3280 = vmatprep.subr.mxu0 %v3168
  %3281 = vmatpush1.msra.mxu0 %v3167
  %3282 = vmatprep.subr.mxu0 %v3172
  %3283 = vmatpush1.msra.mxu0 %v3171
  %3284 = vmatprep.subr.mxu0 %v3176
  %3285 = vmatpush1.msra.mxu0 %v3175
  %3286 = vmatprep.subr.mxu0 %v3180
  %3287 = vmatpush1.msra.mxu0 %v3179
  %3288 = vmatprep.subr.mxu0 %v3184
  %3289 = vmatpush1.msra.mxu0 %v3183
  %3290 = vmatprep.subr.mxu0 %v3188
  %3291 = vmatpush1.msra.mxu0 %v3187
  %3292 = vmatprep.subr.mxu0 0.0
  %3293 = vmatpush1.msra.mxu0 0.0
  %3294 = vmatprep.subr.mxu0 0.0
  %3295 = vmatpush1.msra.mxu0 0.0
  %3296 = vmatprep.subr.mxu0 0.0
  %3297 = vmatpush1.msra.mxu0 0.0
  %3298 = vmatprep.subr.mxu0 0.0
  %3299 = vmatpush1.msra.mxu0 0.0
  %3300 = vmatprep.subr.mxu0 0.0
  %3301 = vmatpush1.msra.mxu0 0.0
  %3302 = vmatprep.subr.mxu0 0.0
  %3303 = vmatpush1.msra.mxu0 0.0
  %3304 = vmatprep.subr.mxu0 0.0
  %3305 = vmatpush1.msra.mxu0 0.0
  %3306 = vmatprep.subr.mxu0 0.0
  %3307 = vmatpush1.msra.mxu0 0.0
  %3308 = vmatprep.subr.mxu0 0.0
  %3309 = vmatpush1.msra.mxu0 0.0
  %3310 = vmatprep.subr.mxu0 0.0
  %3311 = vmatpush1.msra.mxu0 0.0
  %3312 = vmatprep.subr.mxu0 0.0
  %3313 = vmatpush1.msra.mxu0 0.0
  %3314 = vmatprep.subr.mxu0 0.0
  %3315 = vmatpush1.msra.mxu0 0.0
  %3316 = vmatprep.subr.mxu0 0.0
  %3317 = vmatpush1.msra.mxu0 0.0
  %3318 = vmatprep.subr.mxu0 0.0
  %3319 = vmatpush1.msra.mxu0 0.0
  %3320 = vmatprep.subr.mxu0 0.0
  %3321 = vmatpush1.msra.mxu0 0.0
  %3322 = vmatprep.subr.mxu0 0.0
  %3323 = vmatpush1.msra.mxu0 0.0
  %3324 = vmatprep.mubr.f32.mxu0 0.0
  %3325 = vmatmul.mubr.f32.gmra.mrb[0].mxu0 %v3124
  %v3326 = vpop.f32.mrb[0].mxu0
  %v3327 = vadd.f32 0.0, %v3326
  %v3328 = vpop.f32.mrb[0].mxu0
  %v3329 = vadd.f32 0.0, %v3328
  %3330 = vdwg.mxu0
  %v3331 = vadd.f32 %v2880, %v3256
  %v3332 = vadd.f32 %v2882, %v3258
  %v3333 = vadd.f32 %v2951, %v3327
  %v3334 = vadd.f32 %v2953, %v3329
  %v3335 = vxor.u32 %v3331, 2147483648
  %v3336 = vxor.u32 %v3332, 2147483648
  %v3337 = vxor.u32 %v3333, 2147483648
  %v3338 = vmul.f32 %v3335, 1.442695
  %v3339 = vpow.pop %v3338
  %v3340 = vmul.f32 %v3336, 1.442695
  %v3341 = vpow.pop %v3340
  %v3342 = vmul.f32 %v3337, 1.442695
  %v3343 = vpow.pop %v3342
  %v3344 = vadd.f32 %v3339, 1.0
  %v3345 = vadd.f32 %v3341, 1.0
  %v3346 = vadd.f32 %v3343, 1.0
  %v3347 = vrcp.pop %v3344
  %v3348 = vmul.f32 1.0, %v3347
  %v3349 = vrcp.pop %v3345
  %v3350 = vmul.f32 1.0, %v3349
  %v3351 = vrcp.pop %v3346
  %v3352 = vmul.f32 1.0, %v3351
  %v3353 = vtanh.pop %v3334
  %v3354 = vmul.f32 %v3350, %v2745
  %v3355 = vmul.f32 %v3348, %v3353
  %v3356 = vadd.f32 %v3354, %v3355
  %v3357 = vtanh.pop %v3356
  %v3358 = vmul.f32 %v3352, %v3357
  %3359 = vst [vmem:[#allocation2 + $0x20] sm:$0xff] %v3358
  %v3360 = vld [vmem:[%s5] sm:$0xff]
  %v3361 = vld [vmem:[%s5 + $0x8] sm:$0xff]
  %v3362 = vld [vmem:[%s5 + $0x10] sm:$0xff]
  %v3363 = vld [vmem:[%s5 + $0x18] sm:$0xff]
  %v3364 = vld [vmem:[%s5 + $0x20] sm:$0xff]
  %v3365 = vld [vmem:[%s5 + $0x28] sm:$0xff]
  %v3366 = vld [vmem:[%s5 + $0x30] sm:$0xff]
  %v3367 = vld [vmem:[%s5 + $0x38] sm:$0xff]
  %v3368 = vld [vmem:[%s5 + $0x40] sm:$0xff]
  %v3369 = vld [vmem:[%s5 + $0x48] sm:$0xff]
  %v3370 = vld [vmem:[%s5 + $0x50] sm:$0xff]
  %v3371 = vld [vmem:[%s5 + $0x58] sm:$0xff]
  %v3372 = vld [vmem:[%s5 + $0x60] sm:$0xff]
  %v3373 = vld [vmem:[%s5 + $0x68] sm:$0xff]
  %v3374 = vld [vmem:[%s5 + $0x70] sm:$0xff]
  %v3375 = vld [vmem:[%s5 + $0x78] sm:$0xff]
  %v3376 = vld [vmem:[%s5 + $0x80] sm:$0xff]
  %v3377 = vld [vmem:[%s5 + $0x88] sm:$0xff]
  %v3378 = vld [vmem:[%s5 + $0x90] sm:$0xff]
  %v3379 = vld [vmem:[%s5 + $0x98] sm:$0xff]
  %v3380 = vld [vmem:[%s5 + $0xa0] sm:$0xff]
  %v3381 = vld [vmem:[%s5 + $0xa8] sm:$0xff]
  %v3382 = vld [vmem:[%s5 + $0xb0] sm:$0xff]
  %v3383 = vld [vmem:[%s5 + $0xb8] sm:$0xff]
  %v3384 = vld [vmem:[%s5 + $0xc0] sm:$0xff]
  %v3385 = vld [vmem:[%s5 + $0xc8] sm:$0xff]
  %v3386 = vld [vmem:[%s5 + $0xd0] sm:$0xff]
  %v3387 = vld [vmem:[%s5 + $0xd8] sm:$0xff]
  %v3388 = vld [vmem:[%s5 + $0xe0] sm:$0xff]
  %v3389 = vld [vmem:[%s5 + $0xe8] sm:$0xff]
  %v3390 = vld [vmem:[%s5 + $0xf0] sm:$0xff]
  %v3391 = vld [vmem:[%s5 + $0xf8] sm:$0xff]
  %v3392 = vld [vmem:[%s5 + $0x100] sm:$0xff]
  %v3393 = vld [vmem:[%s5 + $0x108] sm:$0xff]
  %v3394 = vld [vmem:[%s5 + $0x110] sm:$0xff]
  %v3395 = vld [vmem:[%s5 + $0x118] sm:$0xff]
  %v3396 = vld [vmem:[%s5 + $0x120] sm:$0xff]
  %v3397 = vld [vmem:[%s5 + $0x128] sm:$0xff]
  %v3398 = vld [vmem:[%s5 + $0x130] sm:$0xff]
  %v3399 = vld [vmem:[%s5 + $0x138] sm:$0xff]
  %v3400 = vld [vmem:[%s5 + $0x140] sm:$0xff]
  %v3401 = vld [vmem:[%s5 + $0x148] sm:$0xff]
  %v3402 = vld [vmem:[%s5 + $0x150] sm:$0xff]
  %v3403 = vld [vmem:[%s5 + $0x158] sm:$0xff]
  %v3404 = vld [vmem:[%s5 + $0x160] sm:$0xff]
  %v3405 = vld [vmem:[%s5 + $0x168] sm:$0xff]
  %v3406 = vld [vmem:[%s5 + $0x170] sm:$0xff]
  %v3407 = vld [vmem:[%s5 + $0x178] sm:$0xff]
  %v3408 = vld [vmem:[%s5 + $0x180] sm:$0xff]
  %v3409 = vld [vmem:[%s5 + $0x188] sm:$0xff]
  %v3410 = vld [vmem:[%s5 + $0x190] sm:$0xff]
  %v3411 = vld [vmem:[%s5 + $0x198] sm:$0xff]
  %v3412 = vld [vmem:[%s5 + $0x1a0] sm:$0xff]
  %v3413 = vld [vmem:[%s5 + $0x1a8] sm:$0xff]
  %v3414 = vld [vmem:[%s5 + $0x1b0] sm:$0xff]
  %v3415 = vld [vmem:[%s5 + $0x1b8] sm:$0xff]
  %v3416 = vld [vmem:[%s5 + $0x1c0] sm:$0xff]
  %v3417 = vld [vmem:[%s5 + $0x1c8] sm:$0xff]
  %v3418 = vld [vmem:[%s5 + $0x1d0] sm:$0xff]
  %v3419 = vld [vmem:[%s5 + $0x1d8] sm:$0xff]
  %v3420 = vld [vmem:[%s5 + $0x1e0] sm:$0xff]
  %v3421 = vld [vmem:[%s5 + $0x1e8] sm:$0xff]
  %v3422 = vld [vmem:[%s5 + $0x1f0] sm:$0xff]
  %v3423 = vld [vmem:[%s5 + $0x1f8] sm:$0xff]
  %3424 = vmatprep.subr.mxu0 %v3361
  %3425 = vmatpush1.msra.mxu0 %v3360
  %3426 = vmatprep.subr.mxu0 %v3365
  %3427 = vmatpush1.msra.mxu0 %v3364
  %3428 = vmatprep.subr.mxu0 %v3369
  %3429 = vmatpush1.msra.mxu0 %v3368
  %3430 = vmatprep.subr.mxu0 %v3373
  %3431 = vmatpush1.msra.mxu0 %v3372
  %3432 = vmatprep.subr.mxu0 %v3377
  %3433 = vmatpush1.msra.mxu0 %v3376
  %3434 = vmatprep.subr.mxu0 %v3381
  %3435 = vmatpush1.msra.mxu0 %v3380
  %3436 = vmatprep.subr.mxu0 %v3385
  %3437 = vmatpush1.msra.mxu0 %v3384
  %3438 = vmatprep.subr.mxu0 %v3389
  %3439 = vmatpush1.msra.mxu0 %v3388
  %3440 = vmatprep.subr.mxu0 %v3393
  %3441 = vmatpush1.msra.mxu0 %v3392
  %3442 = vmatprep.subr.mxu0 %v3397
  %3443 = vmatpush1.msra.mxu0 %v3396
  %3444 = vmatprep.subr.mxu0 %v3401
  %3445 = vmatpush1.msra.mxu0 %v3400
  %3446 = vmatprep.subr.mxu0 %v3405
  %3447 = vmatpush1.msra.mxu0 %v3404
  %3448 = vmatprep.subr.mxu0 %v3409
  %3449 = vmatpush1.msra.mxu0 %v3408
  %3450 = vmatprep.subr.mxu0 %v3413
  %3451 = vmatpush1.msra.mxu0 %v3412
  %3452 = vmatprep.subr.mxu0 %v3417
  %3453 = vmatpush1.msra.mxu0 %v3416
  %3454 = vmatprep.subr.mxu0 %v3421
  %3455 = vmatpush1.msra.mxu0 %v3420
  %3456 = vmatprep.subr.mxu0 0.0
  %3457 = vmatpush1.msra.mxu0 0.0
  %3458 = vmatprep.subr.mxu0 0.0
  %3459 = vmatpush1.msra.mxu0 0.0
  %3460 = vmatprep.subr.mxu0 0.0
  %3461 = vmatpush1.msra.mxu0 0.0
  %3462 = vmatprep.subr.mxu0 0.0
  %3463 = vmatpush1.msra.mxu0 0.0
  %3464 = vmatprep.subr.mxu0 0.0
  %3465 = vmatpush1.msra.mxu0 0.0
  %3466 = vmatprep.subr.mxu0 0.0
  %3467 = vmatpush1.msra.mxu0 0.0
  %3468 = vmatprep.subr.mxu0 0.0
  %3469 = vmatpush1.msra.mxu0 0.0
  %3470 = vmatprep.subr.mxu0 0.0
  %3471 = vmatpush1.msra.mxu0 0.0
  %3472 = vmatprep.subr.mxu0 0.0
  %3473 = vmatpush1.msra.mxu0 0.0
  %3474 = vmatprep.subr.mxu0 0.0
  %3475 = vmatpush1.msra.mxu0 0.0
  %3476 = vmatprep.subr.mxu0 0.0
  %3477 = vmatpush1.msra.mxu0 0.0
  %3478 = vmatprep.subr.mxu0 0.0
  %3479 = vmatpush1.msra.mxu0 0.0
  %3480 = vmatprep.subr.mxu0 0.0
  %3481 = vmatpush1.msra.mxu0 0.0
  %3482 = vmatprep.subr.mxu0 0.0
  %3483 = vmatpush1.msra.mxu0 0.0
  %3484 = vmatprep.subr.mxu0 0.0
  %3485 = vmatpush1.msra.mxu0 0.0
  %3486 = vmatprep.subr.mxu0 0.0
  %3487 = vmatpush1.msra.mxu0 0.0
  %3488 = vmatprep.mubr.f32.mxu0 0.0
  %3489 = vmatmul.mubr.f32.gmra.mrb[0].mxu0 %v3358
  %v3490 = vpop.f32.mrb[0].mxu0
  %v3491 = vadd.f32 %v288, %v3490
  %v3492 = vpop.f32.mrb[0].mxu0
  %v3493 = vadd.f32 %v292, %v3492
  %3494 = vdwg.mxu0
  %3495 = vmatprep.subr.mxu0 %v3363
  %3496 = vmatpush1.msra.mxu0 %v3362
  %3497 = vmatprep.subr.mxu0 %v3367
  %3498 = vmatpush1.msra.mxu0 %v3366
  %3499 = vmatprep.subr.mxu0 %v3371
  %3500 = vmatpush1.msra.mxu0 %v3370
  %3501 = vmatprep.subr.mxu0 %v3375
  %3502 = vmatpush1.msra.mxu0 %v3374
  %3503 = vmatprep.subr.mxu0 %v3379
  %3504 = vmatpush1.msra.mxu0 %v3378
  %3505 = vmatprep.subr.mxu0 %v3383
  %3506 = vmatpush1.msra.mxu0 %v3382
  %3507 = vmatprep.subr.mxu0 %v3387
  %3508 = vmatpush1.msra.mxu0 %v3386
  %3509 = vmatprep.subr.mxu0 %v3391
  %3510 = vmatpush1.msra.mxu0 %v3390
  %3511 = vmatprep.subr.mxu0 %v3395
  %3512 = vmatpush1.msra.mxu0 %v3394
  %3513 = vmatprep.subr.mxu0 %v3399
  %3514 = vmatpush1.msra.mxu0 %v3398
  %3515 = vmatprep.subr.mxu0 %v3403
  %3516 = vmatpush1.msra.mxu0 %v3402
  %3517 = vmatprep.subr.mxu0 %v3407
  %3518 = vmatpush1.msra.mxu0 %v3406
  %3519 = vmatprep.subr.mxu0 %v3411
  %3520 = vmatpush1.msra.mxu0 %v3410
  %3521 = vmatprep.subr.mxu0 %v3415
  %3522 = vmatpush1.msra.mxu0 %v3414
  %3523 = vmatprep.subr.mxu0 %v3419
  %3524 = vmatpush1.msra.mxu0 %v3418
  %3525 = vmatprep.subr.mxu0 %v3423
  %3526 = vmatpush1.msra.mxu0 %v3422
  %3527 = vmatprep.subr.mxu0 0.0
  %3528 = vmatpush1.msra.mxu0 0.0
  %3529 = vmatprep.subr.mxu0 0.0
  %3530 = vmatpush1.msra.mxu0 0.0
  %3531 = vmatprep.subr.mxu0 0.0
  %3532 = vmatpush1.msra.mxu0 0.0
  %3533 = vmatprep.subr.mxu0 0.0
  %3534 = vmatpush1.msra.mxu0 0.0
  %3535 = vmatprep.subr.mxu0 0.0
  %3536 = vmatpush1.msra.mxu0 0.0
  %3537 = vmatprep.subr.mxu0 0.0
  %3538 = vmatpush1.msra.mxu0 0.0
  %3539 = vmatprep.subr.mxu0 0.0
  %3540 = vmatpush1.msra.mxu0 0.0
  %3541 = vmatprep.subr.mxu0 0.0
  %3542 = vmatpush1.msra.mxu0 0.0
  %3543 = vmatprep.subr.mxu0 0.0
  %3544 = vmatpush1.msra.mxu0 0.0
  %3545 = vmatprep.subr.mxu0 0.0
  %3546 = vmatpush1.msra.mxu0 0.0
  %3547 = vmatprep.subr.mxu0 0.0
  %3548 = vmatpush1.msra.mxu0 0.0
  %3549 = vmatprep.subr.mxu0 0.0
  %3550 = vmatpush1.msra.mxu0 0.0
  %3551 = vmatprep.subr.mxu0 0.0
  %3552 = vmatpush1.msra.mxu0 0.0
  %3553 = vmatprep.subr.mxu0 0.0
  %3554 = vmatpush1.msra.mxu0 0.0
  %3555 = vmatprep.subr.mxu0 0.0
  %3556 = vmatpush1.msra.mxu0 0.0
  %3557 = vmatprep.subr.mxu0 0.0
  %3558 = vmatpush1.msra.mxu0 0.0
  %3559 = vmatprep.mubr.f32.mxu0 0.0
  %3560 = vmatmul.mubr.f32.gmra.mrb[0].mxu0 %v3358
  %v3561 = vpop.f32.mrb[0].mxu0
  %v3562 = vadd.f32 %v296, %v3561
  %v3563 = vpop.f32.mrb[0].mxu0
  %v3564 = vadd.f32 %v300, %v3563
  %3565 = vdwg.mxu0
  %3566 = vmatprep.subr.mxu0 %v220
  %3567 = vmatpush1.msra.mxu0 %v219
  %3568 = vmatprep.subr.mxu0 %v224
  %3569 = vmatpush1.msra.mxu0 %v223
  %3570 = vmatprep.subr.mxu0 %v228
  %3571 = vmatpush1.msra.mxu0 %v227
  %3572 = vmatprep.subr.mxu0 %v232
  %3573 = vmatpush1.msra.mxu0 %v231
  %3574 = vmatprep.subr.mxu0 %v236
  %3575 = vmatpush1.msra.mxu0 %v235
  %3576 = vmatprep.subr.mxu0 %v240
  %3577 = vmatpush1.msra.mxu0 %v239
  %3578 = vmatprep.subr.mxu0 %v244
  %3579 = vmatpush1.msra.mxu0 %v243
  %3580 = vmatprep.subr.mxu0 %v248
  %3581 = vmatpush1.msra.mxu0 %v247
  %3582 = vmatprep.subr.mxu0 %v252
  %3583 = vmatpush1.msra.mxu0 %v251
  %3584 = vmatprep.subr.mxu0 %v256
  %3585 = vmatpush1.msra.mxu0 %v255
  %3586 = vmatprep.subr.mxu0 %v260
  %3587 = vmatpush1.msra.mxu0 %v259
  %3588 = vmatprep.subr.mxu0 %v264
  %3589 = vmatpush1.msra.mxu0 %v263
  %3590 = vmatprep.subr.mxu0 %v268
  %3591 = vmatpush1.msra.mxu0 %v267
  %3592 = vmatprep.subr.mxu0 %v272
  %3593 = vmatpush1.msra.mxu0 %v271
  %3594 = vmatprep.subr.mxu0 %v276
  %3595 = vmatpush1.msra.mxu0 %v275
  %3596 = vmatprep.subr.mxu0 %v280
  %3597 = vmatpush1.msra.mxu0 %v279
  %3598 = vmatprep.subr.mxu0 0.0
  %3599 = vmatpush1.msra.mxu0 0.0
  %3600 = vmatprep.subr.mxu0 0.0
  %3601 = vmatpush1.msra.mxu0 0.0
  %3602 = vmatprep.subr.mxu0 0.0
  %3603 = vmatpush1.msra.mxu0 0.0
  %3604 = vmatprep.subr.mxu0 0.0
  %3605 = vmatpush1.msra.mxu0 0.0
  %3606 = vmatprep.subr.mxu0 0.0
  %3607 = vmatpush1.msra.mxu0 0.0
  %3608 = vmatprep.subr.mxu0 0.0
  %3609 = vmatpush1.msra.mxu0 0.0
  %3610 = vmatprep.subr.mxu0 0.0
  %3611 = vmatpush1.msra.mxu0 0.0
  %3612 = vmatprep.subr.mxu0 0.0
  %3613 = vmatpush1.msra.mxu0 0.0
  %3614 = vmatprep.subr.mxu0 0.0
  %3615 = vmatpush1.msra.mxu0 0.0
  %3616 = vmatprep.subr.mxu0 0.0
  %3617 = vmatpush1.msra.mxu0 0.0
  %3618 = vmatprep.subr.mxu0 0.0
  %3619 = vmatpush1.msra.mxu0 0.0
  %3620 = vmatprep.subr.mxu0 0.0
  %3621 = vmatpush1.msra.mxu0 0.0
  %3622 = vmatprep.subr.mxu0 0.0
  %3623 = vmatpush1.msra.mxu0 0.0
  %3624 = vmatprep.subr.mxu0 0.0
  %3625 = vmatpush1.msra.mxu0 0.0
  %3626 = vmatprep.subr.mxu0 0.0
  %3627 = vmatpush1.msra.mxu0 0.0
  %3628 = vmatprep.subr.mxu0 0.0
  %3629 = vmatpush1.msra.mxu0 0.0
  %3630 = vmatprep.mubr.f32.mxu0 0.0
  %3631 = vmatmul.mubr.f32.gmra.mrb[0].mxu0 %v3124
  %v3632 = vpop.f32.mrb[0].mxu0
  %v3633 = vadd.f32 0.0, %v3632
  %v3634 = vpop.f32.mrb[0].mxu0
  %v3635 = vadd.f32 0.0, %v3634
  %3636 = vdwg.mxu0
  %3637 = vmatprep.subr.mxu0 %v222
  %3638 = vmatpush1.msra.mxu0 %v221
  %3639 = vmatprep.subr.mxu0 %v226
  %3640 = vmatpush1.msra.mxu0 %v225
  %3641 = vmatprep.subr.mxu0 %v230
  %3642 = vmatpush1.msra.mxu0 %v229
  %3643 = vmatprep.subr.mxu0 %v234
  %3644 = vmatpush1.msra.mxu0 %v233
  %3645 = vmatprep.subr.mxu0 %v238
  %3646 = vmatpush1.msra.mxu0 %v237
  %3647 = vmatprep.subr.mxu0 %v242
  %3648 = vmatpush1.msra.mxu0 %v241
  %3649 = vmatprep.subr.mxu0 %v246
  %3650 = vmatpush1.msra.mxu0 %v245
  %3651 = vmatprep.subr.mxu0 %v250
  %3652 = vmatpush1.msra.mxu0 %v249
  %3653 = vmatprep.subr.mxu0 %v254
  %3654 = vmatpush1.msra.mxu0 %v253
  %3655 = vmatprep.subr.mxu0 %v258
  %3656 = vmatpush1.msra.mxu0 %v257
  %3657 = vmatprep.subr.mxu0 %v262
  %3658 = vmatpush1.msra.mxu0 %v261
  %3659 = vmatprep.subr.mxu0 %v266
  %3660 = vmatpush1.msra.mxu0 %v265
  %3661 = vmatprep.subr.mxu0 %v270
  %3662 = vmatpush1.msra.mxu0 %v269
  %3663 = vmatprep.subr.mxu0 %v274
  %3664 = vmatpush1.msra.mxu0 %v273
  %3665 = vmatprep.subr.mxu0 %v278
  %3666 = vmatpush1.msra.mxu0 %v277
  %3667 = vmatprep.subr.mxu0 %v282
  %3668 = vmatpush1.msra.mxu0 %v281
  %3669 = vmatprep.subr.mxu0 0.0
  %3670 = vmatpush1.msra.mxu0 0.0
  %3671 = vmatprep.subr.mxu0 0.0
  %3672 = vmatpush1.msra.mxu0 0.0
  %3673 = vmatprep.subr.mxu0 0.0
  %3674 = vmatpush1.msra.mxu0 0.0
  %3675 = vmatprep.subr.mxu0 0.0
  %3676 = vmatpush1.msra.mxu0 0.0
  %3677 = vmatprep.subr.mxu0 0.0
  %3678 = vmatpush1.msra.mxu0 0.0
  %3679 = vmatprep.subr.mxu0 0.0
  %3680 = vmatpush1.msra.mxu0 0.0
  %3681 = vmatprep.subr.mxu0 0.0
  %3682 = vmatpush1.msra.mxu0 0.0
  %3683 = vmatprep.subr.mxu0 0.0
  %3684 = vmatpush1.msra.mxu0 0.0
  %3685 = vmatprep.subr.mxu0 0.0
  %3686 = vmatpush1.msra.mxu0 0.0
  %3687 = vmatprep.subr.mxu0 0.0
  %3688 = vmatpush1.msra.mxu0 0.0
  %3689 = vmatprep.subr.mxu0 0.0
  %3690 = vmatpush1.msra.mxu0 0.0
  %3691 = vmatprep.subr.mxu0 0.0
  %3692 = vmatpush1.msra.mxu0 0.0
  %3693 = vmatprep.subr.mxu0 0.0
  %3694 = vmatpush1.msra.mxu0 0.0
  %3695 = vmatprep.subr.mxu0 0.0
  %3696 = vmatpush1.msra.mxu0 0.0
  %3697 = vmatprep.subr.mxu0 0.0
  %3698 = vmatpush1.msra.mxu0 0.0
  %3699 = vmatprep.subr.mxu0 0.0
  %3700 = vmatpush1.msra.mxu0 0.0
  %3701 = vmatprep.mubr.f32.mxu0 0.0
  %3702 = vmatmul.mubr.f32.gmra.mrb[0].mxu0 %v3124
  %v3703 = vpop.f32.mrb[0].mxu0
  %v3704 = vadd.f32 0.0, %v3703
  %v3705 = vpop.f32.mrb[0].mxu0
  %v3706 = vadd.f32 0.0, %v3705
  %3707 = vdwg.mxu0
  %v3708 = vadd.f32 %v144, %v3633
  %v3709 = vadd.f32 %v146, %v3635
  %v3710 = vadd.f32 %v215, %v3704
  %v3711 = vadd.f32 %v217, %v3706
  %v3712 = vxor.u32 %v3708, 2147483648
  %v3713 = vxor.u32 %v3709, 2147483648
  %v3714 = vxor.u32 %v3710, 2147483648
  %v3715 = vmul.f32 %v3712, 1.442695
  %v3716 = vpow.pop %v3715
  %v3717 = vmul.f32 %v3713, 1.442695
  %v3718 = vpow.pop %v3717
  %v3719 = vmul.f32 %v3714, 1.442695
  %v3720 = vpow.pop %v3719
  %v3721 = vadd.f32 %v3716, 1.0
  %v3722 = vadd.f32 %v3718, 1.0
  %v3723 = vadd.f32 %v3720, 1.0
  %v3724 = vrcp.pop %v3721
  %v3725 = vmul.f32 1.0, %v3724
  %v3726 = vrcp.pop %v3722
  %v3727 = vmul.f32 1.0, %v3726
  %v3728 = vrcp.pop %v3723
  %v3729 = vmul.f32 1.0, %v3728
  %v3730 = vtanh.pop %v3711
  %v3731 = vmul.f32 %v3727, %v3122
  %v3732 = vmul.f32 %v3725, %v3730
  %v3733 = vadd.f32 %v3731, %v3732
  %v3734 = vtanh.pop %v3733
  %v3735 = vmul.f32 %v3729, %v3734
  %v3736 = vld [vmem:[%s4] sm:$0xff]
  %v3737 = vld [vmem:[%s4 + $0x8] sm:$0xff]
  %v3738 = vld [vmem:[%s4 + $0x10] sm:$0xff]
  %v3739 = vld [vmem:[%s4 + $0x18] sm:$0xff]
  %v3740 = vld [vmem:[%s4 + $0x20] sm:$0xff]
  %v3741 = vld [vmem:[%s4 + $0x28] sm:$0xff]
  %v3742 = vld [vmem:[%s4 + $0x30] sm:$0xff]
  %v3743 = vld [vmem:[%s4 + $0x38] sm:$0xff]
  %v3744 = vld [vmem:[%s4 + $0x40] sm:$0xff]
  %v3745 = vld [vmem:[%s4 + $0x48] sm:$0xff]
  %v3746 = vld [vmem:[%s4 + $0x50] sm:$0xff]
  %v3747 = vld [vmem:[%s4 + $0x58] sm:$0xff]
  %v3748 = vld [vmem:[%s4 + $0x60] sm:$0xff]
  %v3749 = vld [vmem:[%s4 + $0x68] sm:$0xff]
  %v3750 = vld [vmem:[%s4 + $0x70] sm:$0xff]
  %v3751 = vld [vmem:[%s4 + $0x78] sm:$0xff]
  %v3752 = vld [vmem:[%s4 + $0x80] sm:$0xff]
  %v3753 = vld [vmem:[%s4 + $0x88] sm:$0xff]
  %v3754 = vld [vmem:[%s4 + $0x90] sm:$0xff]
  %v3755 = vld [vmem:[%s4 + $0x98] sm:$0xff]
  %v3756 = vld [vmem:[%s4 + $0xa0] sm:$0xff]
  %v3757 = vld [vmem:[%s4 + $0xa8] sm:$0xff]
  %v3758 = vld [vmem:[%s4 + $0xb0] sm:$0xff]
  %v3759 = vld [vmem:[%s4 + $0xb8] sm:$0xff]
  %v3760 = vld [vmem:[%s4 + $0xc0] sm:$0xff]
  %v3761 = vld [vmem:[%s4 + $0xc8] sm:$0xff]
  %v3762 = vld [vmem:[%s4 + $0xd0] sm:$0xff]
  %v3763 = vld [vmem:[%s4 + $0xd8] sm:$0xff]
  %v3764 = vld [vmem:[%s4 + $0xe0] sm:$0xff]
  %v3765 = vld [vmem:[%s4 + $0xe8] sm:$0xff]
  %v3766 = vld [vmem:[%s4 + $0xf0] sm:$0xff]
  %v3767 = vld [vmem:[%s4 + $0xf8] sm:$0xff]
  %v3768 = vld [vmem:[%s4 + $0x100] sm:$0xff]
  %v3769 = vld [vmem:[%s4 + $0x108] sm:$0xff]
  %v3770 = vld [vmem:[%s4 + $0x110] sm:$0xff]
  %v3771 = vld [vmem:[%s4 + $0x118] sm:$0xff]
  %v3772 = vld [vmem:[%s4 + $0x120] sm:$0xff]
  %v3773 = vld [vmem:[%s4 + $0x128] sm:$0xff]
  %v3774 = vld [vmem:[%s4 + $0x130] sm:$0xff]
  %v3775 = vld [vmem:[%s4 + $0x138] sm:$0xff]
  %v3776 = vld [vmem:[%s4 + $0x140] sm:$0xff]
  %v3777 = vld [vmem:[%s4 + $0x148] sm:$0xff]
  %v3778 = vld [vmem:[%s4 + $0x150] sm:$0xff]
  %v3779 = vld [vmem:[%s4 + $0x158] sm:$0xff]
  %v3780 = vld [vmem:[%s4 + $0x160] sm:$0xff]
  %v3781 = vld [vmem:[%s4 + $0x168] sm:$0xff]
  %v3782 = vld [vmem:[%s4 + $0x170] sm:$0xff]
  %v3783 = vld [vmem:[%s4 + $0x178] sm:$0xff]
  %v3784 = vld [vmem:[%s4 + $0x180] sm:$0xff]
  %v3785 = vld [vmem:[%s4 + $0x188] sm:$0xff]
  %v3786 = vld [vmem:[%s4 + $0x190] sm:$0xff]
  %v3787 = vld [vmem:[%s4 + $0x198] sm:$0xff]
  %v3788 = vld [vmem:[%s4 + $0x1a0] sm:$0xff]
  %v3789 = vld [vmem:[%s4 + $0x1a8] sm:$0xff]
  %v3790 = vld [vmem:[%s4 + $0x1b0] sm:$0xff]
  %v3791 = vld [vmem:[%s4 + $0x1b8] sm:$0xff]
  %v3792 = vld [vmem:[%s4 + $0x1c0] sm:$0xff]
  %v3793 = vld [vmem:[%s4 + $0x1c8] sm:$0xff]
  %v3794 = vld [vmem:[%s4 + $0x1d0] sm:$0xff]
  %v3795 = vld [vmem:[%s4 + $0x1d8] sm:$0xff]
  %v3796 = vld [vmem:[%s4 + $0x1e0] sm:$0xff]
  %v3797 = vld [vmem:[%s4 + $0x1e8] sm:$0xff]
  %v3798 = vld [vmem:[%s4 + $0x1f0] sm:$0xff]
  %v3799 = vld [vmem:[%s4 + $0x1f8] sm:$0xff]
  %3800 = vmatprep.subr.mxu0 %v3737
  %3801 = vmatpush1.msra.mxu0 %v3736
  %3802 = vmatprep.subr.mxu0 %v3741
  %3803 = vmatpush1.msra.mxu0 %v3740
  %3804 = vmatprep.subr.mxu0 %v3745
  %3805 = vmatpush1.msra.mxu0 %v3744
  %3806 = vmatprep.subr.mxu0 %v3749
  %3807 = vmatpush1.msra.mxu0 %v3748
  %3808 = vmatprep.subr.mxu0 %v3753
  %3809 = vmatpush1.msra.mxu0 %v3752
  %3810 = vmatprep.subr.mxu0 %v3757
  %3811 = vmatpush1.msra.mxu0 %v3756
  %3812 = vmatprep.subr.mxu0 %v3761
  %3813 = vmatpush1.msra.mxu0 %v3760
  %3814 = vmatprep.subr.mxu0 %v3765
  %3815 = vmatpush1.msra.mxu0 %v3764
  %3816 = vmatprep.subr.mxu0 %v3769
  %3817 = vmatpush1.msra.mxu0 %v3768
  %3818 = vmatprep.subr.mxu0 %v3773
  %3819 = vmatpush1.msra.mxu0 %v3772
  %3820 = vmatprep.subr.mxu0 %v3777
  %3821 = vmatpush1.msra.mxu0 %v3776
  %3822 = vmatprep.subr.mxu0 %v3781
  %3823 = vmatpush1.msra.mxu0 %v3780
  %3824 = vmatprep.subr.mxu0 %v3785
  %3825 = vmatpush1.msra.mxu0 %v3784
  %3826 = vmatprep.subr.mxu0 %v3789
  %3827 = vmatpush1.msra.mxu0 %v3788
  %3828 = vmatprep.subr.mxu0 %v3793
  %3829 = vmatpush1.msra.mxu0 %v3792
  %3830 = vmatprep.subr.mxu0 %v3797
  %3831 = vmatpush1.msra.mxu0 %v3796
  %3832 = vmatprep.subr.mxu0 0.0
  %3833 = vmatpush1.msra.mxu0 0.0
  %3834 = vmatprep.subr.mxu0 0.0
  %3835 = vmatpush1.msra.mxu0 0.0
  %3836 = vmatprep.subr.mxu0 0.0
  %3837 = vmatpush1.msra.mxu0 0.0
  %3838 = vmatprep.subr.mxu0 0.0
  %3839 = vmatpush1.msra.mxu0 0.0
  %3840 = vmatprep.subr.mxu0 0.0
  %3841 = vmatpush1.msra.mxu0 0.0
  %3842 = vmatprep.subr.mxu0 0.0
  %3843 = vmatpush1.msra.mxu0 0.0
  %3844 = vmatprep.subr.mxu0 0.0
  %3845 = vmatpush1.msra.mxu0 0.0
  %3846 = vmatprep.subr.mxu0 0.0
  %3847 = vmatpush1.msra.mxu0 0.0
  %3848 = vmatprep.subr.mxu0 0.0
  %3849 = vmatpush1.msra.mxu0 0.0
  %3850 = vmatprep.subr.mxu0 0.0
  %3851 = vmatpush1.msra.mxu0 0.0
  %3852 = vmatprep.subr.mxu0 0.0
  %3853 = vmatpush1.msra.mxu0 0.0
  %3854 = vmatprep.subr.mxu0 0.0
  %3855 = vmatpush1.msra.mxu0 0.0
  %3856 = vmatprep.subr.mxu0 0.0
  %3857 = vmatpush1.msra.mxu0 0.0
  %3858 = vmatprep.subr.mxu0 0.0
  %3859 = vmatpush1.msra.mxu0 0.0
  %3860 = vmatprep.subr.mxu0 0.0
  %3861 = vmatpush1.msra.mxu0 0.0
  %3862 = vmatprep.subr.mxu0 0.0
  %3863 = vmatpush1.msra.mxu0 0.0
  %3864 = vmatprep.mubr.f32.mxu0 0.0
  %3865 = vmatmul.mubr.f32.gmra.mrb[0].mxu0 %v3735
  %v3866 = vpop.f32.mrb[0].mxu0
  %v3867 = vadd.f32 0.0, %v3866
  %v3868 = vpop.f32.mrb[0].mxu0
  %v3869 = vadd.f32 0.0, %v3868
  %3870 = vdwg.mxu0
  %3871 = vmatprep.subr.mxu0 %v3739
  %3872 = vmatpush1.msra.mxu0 %v3738
  %3873 = vmatprep.subr.mxu0 %v3743
  %3874 = vmatpush1.msra.mxu0 %v3742
  %3875 = vmatprep.subr.mxu0 %v3747
  %3876 = vmatpush1.msra.mxu0 %v3746
  %3877 = vmatprep.subr.mxu0 %v3751
  %3878 = vmatpush1.msra.mxu0 %v3750
  %3879 = vmatprep.subr.mxu0 %v3755
  %3880 = vmatpush1.msra.mxu0 %v3754
  %3881 = vmatprep.subr.mxu0 %v3759
  %3882 = vmatpush1.msra.mxu0 %v3758
  %3883 = vmatprep.subr.mxu0 %v3763
  %3884 = vmatpush1.msra.mxu0 %v3762
  %3885 = vmatprep.subr.mxu0 %v3767
  %3886 = vmatpush1.msra.mxu0 %v3766
  %3887 = vmatprep.subr.mxu0 %v3771
  %3888 = vmatpush1.msra.mxu0 %v3770
  %3889 = vmatprep.subr.mxu0 %v3775
  %3890 = vmatpush1.msra.mxu0 %v3774
  %3891 = vmatprep.subr.mxu0 %v3779
  %3892 = vmatpush1.msra.mxu0 %v3778
  %3893 = vmatprep.subr.mxu0 %v3783
  %3894 = vmatpush1.msra.mxu0 %v3782
  %3895 = vmatprep.subr.mxu0 %v3787
  %3896 = vmatpush1.msra.mxu0 %v3786
  %3897 = vmatprep.subr.mxu0 %v3791
  %3898 = vmatpush1.msra.mxu0 %v3790
  %3899 = vmatprep.subr.mxu0 %v3795
  %3900 = vmatpush1.msra.mxu0 %v3794
  %3901 = vmatprep.subr.mxu0 %v3799
  %3902 = vmatpush1.msra.mxu0 %v3798
  %3903 = vmatprep.subr.mxu0 0.0
  %3904 = vmatpush1.msra.mxu0 0.0
  %3905 = vmatprep.subr.mxu0 0.0
  %3906 = vmatpush1.msra.mxu0 0.0
  %3907 = vmatprep.subr.mxu0 0.0
  %3908 = vmatpush1.msra.mxu0 0.0
  %3909 = vmatprep.subr.mxu0 0.0
  %3910 = vmatpush1.msra.mxu0 0.0
  %3911 = vmatprep.subr.mxu0 0.0
  %3912 = vmatpush1.msra.mxu0 0.0
  %3913 = vmatprep.subr.mxu0 0.0
  %3914 = vmatpush1.msra.mxu0 0.0
  %3915 = vmatprep.subr.mxu0 0.0
  %3916 = vmatpush1.msra.mxu0 0.0
  %3917 = vmatprep.subr.mxu0 0.0
  %3918 = vmatpush1.msra.mxu0 0.0
  %3919 = vmatprep.subr.mxu0 0.0
  %3920 = vmatpush1.msra.mxu0 0.0
  %3921 = vmatprep.subr.mxu0 0.0
  %3922 = vmatpush1.msra.mxu0 0.0
  %3923 = vmatprep.subr.mxu0 0.0
  %3924 = vmatpush1.msra.mxu0 0.0
  %3925 = vmatprep.subr.mxu0 0.0
  %3926 = vmatpush1.msra.mxu0 0.0
  %3927 = vmatprep.subr.mxu0 0.0
  %3928 = vmatpush1.msra.mxu0 0.0
  %3929 = vmatprep.subr.mxu0 0.0
  %3930 = vmatpush1.msra.mxu0 0.0
  %3931 = vmatprep.subr.mxu0 0.0
  %3932 = vmatpush1.msra.mxu0 0.0
  %3933 = vmatprep.subr.mxu0 0.0
  %3934 = vmatpush1.msra.mxu0 0.0
  %3935 = vmatprep.mubr.f32.mxu0 0.0
  %3936 = vmatmul.mubr.f32.gmra.mrb[0].mxu0 %v3735
  %v3937 = vpop.f32.mrb[0].mxu0
  %v3938 = vadd.f32 0.0, %v3937
  %v3939 = vpop.f32.mrb[0].mxu0
  %v3940 = vadd.f32 0.0, %v3939
  %3941 = vdwg.mxu0
  %v3942 = vadd.f32 %v3491, %v3867
  %v3943 = vadd.f32 %v3493, %v3869
  %v3944 = vadd.f32 %v3562, %v3938
  %v3945 = vadd.f32 %v3564, %v3940
  %v3946 = vxor.u32 %v3942, 2147483648
  %v3947 = vxor.u32 %v3943, 2147483648
  %v3948 = vxor.u32 %v3944, 2147483648
  %v3949 = vmul.f32 %v3946, 1.442695
  %v3950 = vpow.pop %v3949
  %v3951 = vmul.f32 %v3947, 1.442695
  %v3952 = vpow.pop %v3951
  %v3953 = vmul.f32 %v3948, 1.442695
  %v3954 = vpow.pop %v3953
  %v3955 = vadd.f32 %v3950, 1.0
  %v3956 = vadd.f32 %v3952, 1.0
  %v3957 = vadd.f32 %v3954, 1.0
  %v3958 = vrcp.pop %v3955
  %v3959 = vmul.f32 1.0, %v3958
  %v3960 = vrcp.pop %v3956
  %v3961 = vmul.f32 1.0, %v3960
  %v3962 = vrcp.pop %v3957
  %v3963 = vmul.f32 1.0, %v3962
  %v3964 = vtanh.pop %v3945
  %v3965 = vmul.f32 %v3961, %v3356
  %v3966 = vmul.f32 %v3959, %v3964
  %v3967 = vadd.f32 %v3965, %v3966
  %v3968 = vtanh.pop %v3967
  %v3969 = vmul.f32 %v3963, %v3968
  %3970 = vst [vmem:[#allocation2 + $0x28] sm:$0xff] %v3969
  %v3971 = vld [vmem:[%s5] sm:$0xff]
  %v3972 = vld [vmem:[%s5 + $0x8] sm:$0xff]
  %v3973 = vld [vmem:[%s5 + $0x10] sm:$0xff]
  %v3974 = vld [vmem:[%s5 + $0x18] sm:$0xff]
  %v3975 = vld [vmem:[%s5 + $0x20] sm:$0xff]
  %v3976 = vld [vmem:[%s5 + $0x28] sm:$0xff]
  %v3977 = vld [vmem:[%s5 + $0x30] sm:$0xff]
  %v3978 = vld [vmem:[%s5 + $0x38] sm:$0xff]
  %v3979 = vld [vmem:[%s5 + $0x40] sm:$0xff]
  %v3980 = vld [vmem:[%s5 + $0x48] sm:$0xff]
  %v3981 = vld [vmem:[%s5 + $0x50] sm:$0xff]
  %v3982 = vld [vmem:[%s5 + $0x58] sm:$0xff]
  %v3983 = vld [vmem:[%s5 + $0x60] sm:$0xff]
  %v3984 = vld [vmem:[%s5 + $0x68] sm:$0xff]
  %v3985 = vld [vmem:[%s5 + $0x70] sm:$0xff]
  %v3986 = vld [vmem:[%s5 + $0x78] sm:$0xff]
  %v3987 = vld [vmem:[%s5 + $0x80] sm:$0xff]
  %v3988 = vld [vmem:[%s5 + $0x88] sm:$0xff]
  %v3989 = vld [vmem:[%s5 + $0x90] sm:$0xff]
  %v3990 = vld [vmem:[%s5 + $0x98] sm:$0xff]
  %v3991 = vld [vmem:[%s5 + $0xa0] sm:$0xff]
  %v3992 = vld [vmem:[%s5 + $0xa8] sm:$0xff]
  %v3993 = vld [vmem:[%s5 + $0xb0] sm:$0xff]
  %v3994 = vld [vmem:[%s5 + $0xb8] sm:$0xff]
  %v3995 = vld [vmem:[%s5 + $0xc0] sm:$0xff]
  %v3996 = vld [vmem:[%s5 + $0xc8] sm:$0xff]
  %v3997 = vld [vmem:[%s5 + $0xd0] sm:$0xff]
  %v3998 = vld [vmem:[%s5 + $0xd8] sm:$0xff]
  %v3999 = vld [vmem:[%s5 + $0xe0] sm:$0xff]
  %v4000 = vld [vmem:[%s5 + $0xe8] sm:$0xff]
  %v4001 = vld [vmem:[%s5 + $0xf0] sm:$0xff]
  %v4002 = vld [vmem:[%s5 + $0xf8] sm:$0xff]
  %v4003 = vld [vmem:[%s5 + $0x100] sm:$0xff]
  %v4004 = vld [vmem:[%s5 + $0x108] sm:$0xff]
  %v4005 = vld [vmem:[%s5 + $0x110] sm:$0xff]
  %v4006 = vld [vmem:[%s5 + $0x118] sm:$0xff]
  %v4007 = vld [vmem:[%s5 + $0x120] sm:$0xff]
  %v4008 = vld [vmem:[%s5 + $0x128] sm:$0xff]
  %v4009 = vld [vmem:[%s5 + $0x130] sm:$0xff]
  %v4010 = vld [vmem:[%s5 + $0x138] sm:$0xff]
  %v4011 = vld [vmem:[%s5 + $0x140] sm:$0xff]
  %v4012 = vld [vmem:[%s5 + $0x148] sm:$0xff]
  %v4013 = vld [vmem:[%s5 + $0x150] sm:$0xff]
  %v4014 = vld [vmem:[%s5 + $0x158] sm:$0xff]
  %v4015 = vld [vmem:[%s5 + $0x160] sm:$0xff]
  %v4016 = vld [vmem:[%s5 + $0x168] sm:$0xff]
  %v4017 = vld [vmem:[%s5 + $0x170] sm:$0xff]
  %v4018 = vld [vmem:[%s5 + $0x178] sm:$0xff]
  %v4019 = vld [vmem:[%s5 + $0x180] sm:$0xff]
  %v4020 = vld [vmem:[%s5 + $0x188] sm:$0xff]
  %v4021 = vld [vmem:[%s5 + $0x190] sm:$0xff]
  %v4022 = vld [vmem:[%s5 + $0x198] sm:$0xff]
  %v4023 = vld [vmem:[%s5 + $0x1a0] sm:$0xff]
  %v4024 = vld [vmem:[%s5 + $0x1a8] sm:$0xff]
  %v4025 = vld [vmem:[%s5 + $0x1b0] sm:$0xff]
  %v4026 = vld [vmem:[%s5 + $0x1b8] sm:$0xff]
  %v4027 = vld [vmem:[%s5 + $0x1c0] sm:$0xff]
  %v4028 = vld [vmem:[%s5 + $0x1c8] sm:$0xff]
  %v4029 = vld [vmem:[%s5 + $0x1d0] sm:$0xff]
  %v4030 = vld [vmem:[%s5 + $0x1d8] sm:$0xff]
  %v4031 = vld [vmem:[%s5 + $0x1e0] sm:$0xff]
  %v4032 = vld [vmem:[%s5 + $0x1e8] sm:$0xff]
  %v4033 = vld [vmem:[%s5 + $0x1f0] sm:$0xff]
  %v4034 = vld [vmem:[%s5 + $0x1f8] sm:$0xff]
  %4035 = vmatprep.subr.mxu0 %v3972
  %4036 = vmatpush1.msra.mxu0 %v3971
  %4037 = vmatprep.subr.mxu0 %v3976
  %4038 = vmatpush1.msra.mxu0 %v3975
  %4039 = vmatprep.subr.mxu0 %v3980
  %4040 = vmatpush1.msra.mxu0 %v3979
  %4041 = vmatprep.subr.mxu0 %v3984
  %4042 = vmatpush1.msra.mxu0 %v3983
  %4043 = vmatprep.subr.mxu0 %v3988
  %4044 = vmatpush1.msra.mxu0 %v3987
  %4045 = vmatprep.subr.mxu0 %v3992
  %4046 = vmatpush1.msra.mxu0 %v3991
  %4047 = vmatprep.subr.mxu0 %v3996
  %4048 = vmatpush1.msra.mxu0 %v3995
  %4049 = vmatprep.subr.mxu0 %v4000
  %4050 = vmatpush1.msra.mxu0 %v3999
  %4051 = vmatprep.subr.mxu0 %v4004
  %4052 = vmatpush1.msra.mxu0 %v4003
  %4053 = vmatprep.subr.mxu0 %v4008
  %4054 = vmatpush1.msra.mxu0 %v4007
  %4055 = vmatprep.subr.mxu0 %v4012
  %4056 = vmatpush1.msra.mxu0 %v4011
  %4057 = vmatprep.subr.mxu0 %v4016
  %4058 = vmatpush1.msra.mxu0 %v4015
  %4059 = vmatprep.subr.mxu0 %v4020
  %4060 = vmatpush1.msra.mxu0 %v4019
  %4061 = vmatprep.subr.mxu0 %v4024
  %4062 = vmatpush1.msra.mxu0 %v4023
  %4063 = vmatprep.subr.mxu0 %v4028
  %4064 = vmatpush1.msra.mxu0 %v4027
  %4065 = vmatprep.subr.mxu0 %v4032
  %4066 = vmatpush1.msra.mxu0 %v4031
  %4067 = vmatprep.subr.mxu0 0.0
  %4068 = vmatpush1.msra.mxu0 0.0
  %4069 = vmatprep.subr.mxu0 0.0
  %4070 = vmatpush1.msra.mxu0 0.0
  %4071 = vmatprep.subr.mxu0 0.0
  %4072 = vmatpush1.msra.mxu0 0.0
  %4073 = vmatprep.subr.mxu0 0.0
  %4074 = vmatpush1.msra.mxu0 0.0
  %4075 = vmatprep.subr.mxu0 0.0
  %4076 = vmatpush1.msra.mxu0 0.0
  %4077 = vmatprep.subr.mxu0 0.0
  %4078 = vmatpush1.msra.mxu0 0.0
  %4079 = vmatprep.subr.mxu0 0.0
  %4080 = vmatpush1.msra.mxu0 0.0
  %4081 = vmatprep.subr.mxu0 0.0
  %4082 = vmatpush1.msra.mxu0 0.0
  %4083 = vmatprep.subr.mxu0 0.0
  %4084 = vmatpush1.msra.mxu0 0.0
  %4085 = vmatprep.subr.mxu0 0.0
  %4086 = vmatpush1.msra.mxu0 0.0
  %4087 = vmatprep.subr.mxu0 0.0
  %4088 = vmatpush1.msra.mxu0 0.0
  %4089 = vmatprep.subr.mxu0 0.0
  %4090 = vmatpush1.msra.mxu0 0.0
  %4091 = vmatprep.subr.mxu0 0.0
  %4092 = vmatpush1.msra.mxu0 0.0
  %4093 = vmatprep.subr.mxu0 0.0
  %4094 = vmatpush1.msra.mxu0 0.0
  %4095 = vmatprep.subr.mxu0 0.0
  %4096 = vmatpush1.msra.mxu0 0.0
  %4097 = vmatprep.subr.mxu0 0.0
  %4098 = vmatpush1.msra.mxu0 0.0
  %4099 = vmatprep.mubr.f32.mxu0 0.0
  %4100 = vmatmul.mubr.f32.gmra.mrb[0].mxu0 %v3969
  %v4101 = vpop.f32.mrb[0].mxu0
  %v4102 = vadd.f32 %v288, %v4101
  %v4103 = vpop.f32.mrb[0].mxu0
  %v4104 = vadd.f32 %v292, %v4103
  %4105 = vdwg.mxu0
  %4106 = vmatprep.subr.mxu0 %v3974
  %4107 = vmatpush1.msra.mxu0 %v3973
  %4108 = vmatprep.subr.mxu0 %v3978
  %4109 = vmatpush1.msra.mxu0 %v3977
  %4110 = vmatprep.subr.mxu0 %v3982
  %4111 = vmatpush1.msra.mxu0 %v3981
  %4112 = vmatprep.subr.mxu0 %v3986
  %4113 = vmatpush1.msra.mxu0 %v3985
  %4114 = vmatprep.subr.mxu0 %v3990
  %4115 = vmatpush1.msra.mxu0 %v3989
  %4116 = vmatprep.subr.mxu0 %v3994
  %4117 = vmatpush1.msra.mxu0 %v3993
  %4118 = vmatprep.subr.mxu0 %v3998
  %4119 = vmatpush1.msra.mxu0 %v3997
  %4120 = vmatprep.subr.mxu0 %v4002
  %4121 = vmatpush1.msra.mxu0 %v4001
  %4122 = vmatprep.subr.mxu0 %v4006
  %4123 = vmatpush1.msra.mxu0 %v4005
  %4124 = vmatprep.subr.mxu0 %v4010
  %4125 = vmatpush1.msra.mxu0 %v4009
  %4126 = vmatprep.subr.mxu0 %v4014
  %4127 = vmatpush1.msra.mxu0 %v4013
  %4128 = vmatprep.subr.mxu0 %v4018
  %4129 = vmatpush1.msra.mxu0 %v4017
  %4130 = vmatprep.subr.mxu0 %v4022
  %4131 = vmatpush1.msra.mxu0 %v4021
  %4132 = vmatprep.subr.mxu0 %v4026
  %4133 = vmatpush1.msra.mxu0 %v4025
  %4134 = vmatprep.subr.mxu0 %v4030
  %4135 = vmatpush1.msra.mxu0 %v4029
  %4136 = vmatprep.subr.mxu0 %v4034
  %4137 = vmatpush1.msra.mxu0 %v4033
  %4138 = vmatprep.subr.mxu0 0.0
  %4139 = vmatpush1.msra.mxu0 0.0
  %4140 = vmatprep.subr.mxu0 0.0
  %4141 = vmatpush1.msra.mxu0 0.0
  %4142 = vmatprep.subr.mxu0 0.0
  %4143 = vmatpush1.msra.mxu0 0.0
  %4144 = vmatprep.subr.mxu0 0.0
  %4145 = vmatpush1.msra.mxu0 0.0
  %4146 = vmatprep.subr.mxu0 0.0
  %4147 = vmatpush1.msra.mxu0 0.0
  %4148 = vmatprep.subr.mxu0 0.0
  %4149 = vmatpush1.msra.mxu0 0.0
  %4150 = vmatprep.subr.mxu0 0.0
  %4151 = vmatpush1.msra.mxu0 0.0
  %4152 = vmatprep.subr.mxu0 0.0
  %4153 = vmatpush1.msra.mxu0 0.0
  %4154 = vmatprep.subr.mxu0 0.0
  %4155 = vmatpush1.msra.mxu0 0.0
  %4156 = vmatprep.subr.mxu0 0.0
  %4157 = vmatpush1.msra.mxu0 0.0
  %4158 = vmatprep.subr.mxu0 0.0
  %4159 = vmatpush1.msra.mxu0 0.0
  %4160 = vmatprep.subr.mxu0 0.0
  %4161 = vmatpush1.msra.mxu0 0.0
  %4162 = vmatprep.subr.mxu0 0.0
  %4163 = vmatpush1.msra.mxu0 0.0
  %4164 = vmatprep.subr.mxu0 0.0
  %4165 = vmatpush1.msra.mxu0 0.0
  %4166 = vmatprep.subr.mxu0 0.0
  %4167 = vmatpush1.msra.mxu0 0.0
  %4168 = vmatprep.subr.mxu0 0.0
  %4169 = vmatpush1.msra.mxu0 0.0
  %4170 = vmatprep.mubr.f32.mxu0 0.0
  %4171 = vmatmul.mubr.f32.gmra.mrb[0].mxu0 %v3969
  %v4172 = vpop.f32.mrb[0].mxu0
  %v4173 = vadd.f32 %v296, %v4172
  %v4174 = vpop.f32.mrb[0].mxu0
  %v4175 = vadd.f32 %v300, %v4174
  %4176 = vdwg.mxu0
  %4177 = vmatprep.subr.mxu0 %v220
  %4178 = vmatpush1.msra.mxu0 %v219
  %4179 = vmatprep.subr.mxu0 %v224
  %4180 = vmatpush1.msra.mxu0 %v223
  %4181 = vmatprep.subr.mxu0 %v228
  %4182 = vmatpush1.msra.mxu0 %v227
  %4183 = vmatprep.subr.mxu0 %v232
  %4184 = vmatpush1.msra.mxu0 %v231
  %4185 = vmatprep.subr.mxu0 %v236
  %4186 = vmatpush1.msra.mxu0 %v235
  %4187 = vmatprep.subr.mxu0 %v240
  %4188 = vmatpush1.msra.mxu0 %v239
  %4189 = vmatprep.subr.mxu0 %v244
  %4190 = vmatpush1.msra.mxu0 %v243
  %4191 = vmatprep.subr.mxu0 %v248
  %4192 = vmatpush1.msra.mxu0 %v247
  %4193 = vmatprep.subr.mxu0 %v252
  %4194 = vmatpush1.msra.mxu0 %v251
  %4195 = vmatprep.subr.mxu0 %v256
  %4196 = vmatpush1.msra.mxu0 %v255
  %4197 = vmatprep.subr.mxu0 %v260
  %4198 = vmatpush1.msra.mxu0 %v259
  %4199 = vmatprep.subr.mxu0 %v264
  %4200 = vmatpush1.msra.mxu0 %v263
  %4201 = vmatprep.subr.mxu0 %v268
  %4202 = vmatpush1.msra.mxu0 %v267
  %4203 = vmatprep.subr.mxu0 %v272
  %4204 = vmatpush1.msra.mxu0 %v271
  %4205 = vmatprep.subr.mxu0 %v276
  %4206 = vmatpush1.msra.mxu0 %v275
  %4207 = vmatprep.subr.mxu0 %v280
  %4208 = vmatpush1.msra.mxu0 %v279
  %4209 = vmatprep.subr.mxu0 0.0
  %4210 = vmatpush1.msra.mxu0 0.0
  %4211 = vmatprep.subr.mxu0 0.0
  %4212 = vmatpush1.msra.mxu0 0.0
  %4213 = vmatprep.subr.mxu0 0.0
  %4214 = vmatpush1.msra.mxu0 0.0
  %4215 = vmatprep.subr.mxu0 0.0
  %4216 = vmatpush1.msra.mxu0 0.0
  %4217 = vmatprep.subr.mxu0 0.0
  %4218 = vmatpush1.msra.mxu0 0.0
  %4219 = vmatprep.subr.mxu0 0.0
  %4220 = vmatpush1.msra.mxu0 0.0
  %4221 = vmatprep.subr.mxu0 0.0
  %4222 = vmatpush1.msra.mxu0 0.0
  %4223 = vmatprep.subr.mxu0 0.0
  %4224 = vmatpush1.msra.mxu0 0.0
  %4225 = vmatprep.subr.mxu0 0.0
  %4226 = vmatpush1.msra.mxu0 0.0
  %4227 = vmatprep.subr.mxu0 0.0
  %4228 = vmatpush1.msra.mxu0 0.0
  %4229 = vmatprep.subr.mxu0 0.0
  %4230 = vmatpush1.msra.mxu0 0.0
  %4231 = vmatprep.subr.mxu0 0.0
  %4232 = vmatpush1.msra.mxu0 0.0
  %4233 = vmatprep.subr.mxu0 0.0
  %4234 = vmatpush1.msra.mxu0 0.0
  %4235 = vmatprep.subr.mxu0 0.0
  %4236 = vmatpush1.msra.mxu0 0.0
  %4237 = vmatprep.subr.mxu0 0.0
  %4238 = vmatpush1.msra.mxu0 0.0
  %4239 = vmatprep.subr.mxu0 0.0
  %4240 = vmatpush1.msra.mxu0 0.0
  %4241 = vmatprep.mubr.f32.mxu0 0.0
  %4242 = vmatmul.mubr.f32.gmra.mrb[0].mxu0 %v3735
  %v4243 = vpop.f32.mrb[0].mxu0
  %v4244 = vadd.f32 0.0, %v4243
  %v4245 = vpop.f32.mrb[0].mxu0
  %v4246 = vadd.f32 0.0, %v4245
  %4247 = vdwg.mxu0
  %4248 = vmatprep.subr.mxu0 %v222
  %4249 = vmatpush1.msra.mxu0 %v221
  %4250 = vmatprep.subr.mxu0 %v226
  %4251 = vmatpush1.msra.mxu0 %v225
  %4252 = vmatprep.subr.mxu0 %v230
  %4253 = vmatpush1.msra.mxu0 %v229
  %4254 = vmatprep.subr.mxu0 %v234
  %4255 = vmatpush1.msra.mxu0 %v233
  %4256 = vmatprep.subr.mxu0 %v238
  %4257 = vmatpush1.msra.mxu0 %v237
  %4258 = vmatprep.subr.mxu0 %v242
  %4259 = vmatpush1.msra.mxu0 %v241
  %4260 = vmatprep.subr.mxu0 %v246
  %4261 = vmatpush1.msra.mxu0 %v245
  %4262 = vmatprep.subr.mxu0 %v250
  %4263 = vmatpush1.msra.mxu0 %v249
  %4264 = vmatprep.subr.mxu0 %v254
  %4265 = vmatpush1.msra.mxu0 %v253
  %4266 = vmatprep.subr.mxu0 %v258
  %4267 = vmatpush1.msra.mxu0 %v257
  %4268 = vmatprep.subr.mxu0 %v262
  %4269 = vmatpush1.msra.mxu0 %v261
  %4270 = vmatprep.subr.mxu0 %v266
  %4271 = vmatpush1.msra.mxu0 %v265
  %4272 = vmatprep.subr.mxu0 %v270
  %4273 = vmatpush1.msra.mxu0 %v269
  %4274 = vmatprep.subr.mxu0 %v274
  %4275 = vmatpush1.msra.mxu0 %v273
  %4276 = vmatprep.subr.mxu0 %v278
  %4277 = vmatpush1.msra.mxu0 %v277
  %4278 = vmatprep.subr.mxu0 %v282
  %4279 = vmatpush1.msra.mxu0 %v281
  %4280 = vmatprep.subr.mxu0 0.0
  %4281 = vmatpush1.msra.mxu0 0.0
  %4282 = vmatprep.subr.mxu0 0.0
  %4283 = vmatpush1.msra.mxu0 0.0
  %4284 = vmatprep.subr.mxu0 0.0
  %4285 = vmatpush1.msra.mxu0 0.0
  %4286 = vmatprep.subr.mxu0 0.0
  %4287 = vmatpush1.msra.mxu0 0.0
  %4288 = vmatprep.subr.mxu0 0.0
  %4289 = vmatpush1.msra.mxu0 0.0
  %4290 = vmatprep.subr.mxu0 0.0
  %4291 = vmatpush1.msra.mxu0 0.0
  %4292 = vmatprep.subr.mxu0 0.0
  %4293 = vmatpush1.msra.mxu0 0.0
  %4294 = vmatprep.subr.mxu0 0.0
  %4295 = vmatpush1.msra.mxu0 0.0
  %4296 = vmatprep.subr.mxu0 0.0
  %4297 = vmatpush1.msra.mxu0 0.0
  %4298 = vmatprep.subr.mxu0 0.0
  %4299 = vmatpush1.msra.mxu0 0.0
  %4300 = vmatprep.subr.mxu0 0.0
  %4301 = vmatpush1.msra.mxu0 0.0
  %4302 = vmatprep.subr.mxu0 0.0
  %4303 = vmatpush1.msra.mxu0 0.0
  %4304 = vmatprep.subr.mxu0 0.0
  %4305 = vmatpush1.msra.mxu0 0.0
  %4306 = vmatprep.subr.mxu0 0.0
  %4307 = vmatpush1.msra.mxu0 0.0
  %4308 = vmatprep.subr.mxu0 0.0
  %4309 = vmatpush1.msra.mxu0 0.0
  %4310 = vmatprep.subr.mxu0 0.0
  %4311 = vmatpush1.msra.mxu0 0.0
  %4312 = vmatprep.mubr.f32.mxu0 0.0
  %4313 = vmatmul.mubr.f32.gmra.mrb[0].mxu0 %v3735
  %v4314 = vpop.f32.mrb[0].mxu0
  %v4315 = vadd.f32 0.0, %v4314
  %v4316 = vpop.f32.mrb[0].mxu0
  %v4317 = vadd.f32 0.0, %v4316
  %4318 = vdwg.mxu0
  %v4319 = vadd.f32 %v144, %v4244
  %v4320 = vadd.f32 %v146, %v4246
  %v4321 = vadd.f32 %v215, %v4315
  %v4322 = vadd.f32 %v217, %v4317
  %v4323 = vxor.u32 %v4319, 2147483648
  %v4324 = vxor.u32 %v4320, 2147483648
  %v4325 = vxor.u32 %v4321, 2147483648
  %v4326 = vmul.f32 %v4323, 1.442695
  %v4327 = vpow.pop %v4326
  %v4328 = vmul.f32 %v4324, 1.442695
  %v4329 = vpow.pop %v4328
  %v4330 = vmul.f32 %v4325, 1.442695
  %v4331 = vpow.pop %v4330
  %v4332 = vadd.f32 %v4327, 1.0
  %v4333 = vadd.f32 %v4329, 1.0
  %v4334 = vadd.f32 %v4331, 1.0
  %v4335 = vrcp.pop %v4332
  %v4336 = vmul.f32 1.0, %v4335
  %v4337 = vrcp.pop %v4333
  %v4338 = vmul.f32 1.0, %v4337
  %v4339 = vrcp.pop %v4334
  %v4340 = vmul.f32 1.0, %v4339
  %v4341 = vtanh.pop %v4322
  %v4342 = vmul.f32 %v4338, %v3733
  %v4343 = vmul.f32 %v4336, %v4341
  %v4344 = vadd.f32 %v4342, %v4343
  %v4345 = vtanh.pop %v4344
  %v4346 = vmul.f32 %v4340, %v4345
  %v4347 = vld [vmem:[%s4] sm:$0xff]
  %v4348 = vld [vmem:[%s4 + $0x8] sm:$0xff]
  %v4349 = vld [vmem:[%s4 + $0x10] sm:$0xff]
  %v4350 = vld [vmem:[%s4 + $0x18] sm:$0xff]
  %v4351 = vld [vmem:[%s4 + $0x20] sm:$0xff]
  %v4352 = vld [vmem:[%s4 + $0x28] sm:$0xff]
  %v4353 = vld [vmem:[%s4 + $0x30] sm:$0xff]
  %v4354 = vld [vmem:[%s4 + $0x38] sm:$0xff]
  %v4355 = vld [vmem:[%s4 + $0x40] sm:$0xff]
  %v4356 = vld [vmem:[%s4 + $0x48] sm:$0xff]
  %v4357 = vld [vmem:[%s4 + $0x50] sm:$0xff]
  %v4358 = vld [vmem:[%s4 + $0x58] sm:$0xff]
  %v4359 = vld [vmem:[%s4 + $0x60] sm:$0xff]
  %v4360 = vld [vmem:[%s4 + $0x68] sm:$0xff]
  %v4361 = vld [vmem:[%s4 + $0x70] sm:$0xff]
  %v4362 = vld [vmem:[%s4 + $0x78] sm:$0xff]
  %v4363 = vld [vmem:[%s4 + $0x80] sm:$0xff]
  %v4364 = vld [vmem:[%s4 + $0x88] sm:$0xff]
  %v4365 = vld [vmem:[%s4 + $0x90] sm:$0xff]
  %v4366 = vld [vmem:[%s4 + $0x98] sm:$0xff]
  %v4367 = vld [vmem:[%s4 + $0xa0] sm:$0xff]
  %v4368 = vld [vmem:[%s4 + $0xa8] sm:$0xff]
  %v4369 = vld [vmem:[%s4 + $0xb0] sm:$0xff]
  %v4370 = vld [vmem:[%s4 + $0xb8] sm:$0xff]
  %v4371 = vld [vmem:[%s4 + $0xc0] sm:$0xff]
  %v4372 = vld [vmem:[%s4 + $0xc8] sm:$0xff]
  %v4373 = vld [vmem:[%s4 + $0xd0] sm:$0xff]
  %v4374 = vld [vmem:[%s4 + $0xd8] sm:$0xff]
  %v4375 = vld [vmem:[%s4 + $0xe0] sm:$0xff]
  %v4376 = vld [vmem:[%s4 + $0xe8] sm:$0xff]
  %v4377 = vld [vmem:[%s4 + $0xf0] sm:$0xff]
  %v4378 = vld [vmem:[%s4 + $0xf8] sm:$0xff]
  %v4379 = vld [vmem:[%s4 + $0x100] sm:$0xff]
  %v4380 = vld [vmem:[%s4 + $0x108] sm:$0xff]
  %v4381 = vld [vmem:[%s4 + $0x110] sm:$0xff]
  %v4382 = vld [vmem:[%s4 + $0x118] sm:$0xff]
  %v4383 = vld [vmem:[%s4 + $0x120] sm:$0xff]
  %v4384 = vld [vmem:[%s4 + $0x128] sm:$0xff]
  %v4385 = vld [vmem:[%s4 + $0x130] sm:$0xff]
  %v4386 = vld [vmem:[%s4 + $0x138] sm:$0xff]
  %v4387 = vld [vmem:[%s4 + $0x140] sm:$0xff]
  %v4388 = vld [vmem:[%s4 + $0x148] sm:$0xff]
  %v4389 = vld [vmem:[%s4 + $0x150] sm:$0xff]
  %v4390 = vld [vmem:[%s4 + $0x158] sm:$0xff]
  %v4391 = vld [vmem:[%s4 + $0x160] sm:$0xff]
  %v4392 = vld [vmem:[%s4 + $0x168] sm:$0xff]
  %v4393 = vld [vmem:[%s4 + $0x170] sm:$0xff]
  %v4394 = vld [vmem:[%s4 + $0x178] sm:$0xff]
  %v4395 = vld [vmem:[%s4 + $0x180] sm:$0xff]
  %v4396 = vld [vmem:[%s4 + $0x188] sm:$0xff]
  %v4397 = vld [vmem:[%s4 + $0x190] sm:$0xff]
  %v4398 = vld [vmem:[%s4 + $0x198] sm:$0xff]
  %v4399 = vld [vmem:[%s4 + $0x1a0] sm:$0xff]
  %v4400 = vld [vmem:[%s4 + $0x1a8] sm:$0xff]
  %v4401 = vld [vmem:[%s4 + $0x1b0] sm:$0xff]
  %v4402 = vld [vmem:[%s4 + $0x1b8] sm:$0xff]
  %v4403 = vld [vmem:[%s4 + $0x1c0] sm:$0xff]
  %v4404 = vld [vmem:[%s4 + $0x1c8] sm:$0xff]
  %v4405 = vld [vmem:[%s4 + $0x1d0] sm:$0xff]
  %v4406 = vld [vmem:[%s4 + $0x1d8] sm:$0xff]
  %v4407 = vld [vmem:[%s4 + $0x1e0] sm:$0xff]
  %v4408 = vld [vmem:[%s4 + $0x1e8] sm:$0xff]
  %v4409 = vld [vmem:[%s4 + $0x1f0] sm:$0xff]
  %v4410 = vld [vmem:[%s4 + $0x1f8] sm:$0xff]
  %4411 = vmatprep.subr.mxu0 %v4348
  %4412 = vmatpush1.msra.mxu0 %v4347
  %4413 = vmatprep.subr.mxu0 %v4352
  %4414 = vmatpush1.msra.mxu0 %v4351
  %4415 = vmatprep.subr.mxu0 %v4356
  %4416 = vmatpush1.msra.mxu0 %v4355
  %4417 = vmatprep.subr.mxu0 %v4360
  %4418 = vmatpush1.msra.mxu0 %v4359
  %4419 = vmatprep.subr.mxu0 %v4364
  %4420 = vmatpush1.msra.mxu0 %v4363
  %4421 = vmatprep.subr.mxu0 %v4368
  %4422 = vmatpush1.msra.mxu0 %v4367
  %4423 = vmatprep.subr.mxu0 %v4372
  %4424 = vmatpush1.msra.mxu0 %v4371
  %4425 = vmatprep.subr.mxu0 %v4376
  %4426 = vmatpush1.msra.mxu0 %v4375
  %4427 = vmatprep.subr.mxu0 %v4380
  %4428 = vmatpush1.msra.mxu0 %v4379
  %4429 = vmatprep.subr.mxu0 %v4384
  %4430 = vmatpush1.msra.mxu0 %v4383
  %4431 = vmatprep.subr.mxu0 %v4388
  %4432 = vmatpush1.msra.mxu0 %v4387
  %4433 = vmatprep.subr.mxu0 %v4392
  %4434 = vmatpush1.msra.mxu0 %v4391
  %4435 = vmatprep.subr.mxu0 %v4396
  %4436 = vmatpush1.msra.mxu0 %v4395
  %4437 = vmatprep.subr.mxu0 %v4400
  %4438 = vmatpush1.msra.mxu0 %v4399
  %4439 = vmatprep.subr.mxu0 %v4404
  %4440 = vmatpush1.msra.mxu0 %v4403
  %4441 = vmatprep.subr.mxu0 %v4408
  %4442 = vmatpush1.msra.mxu0 %v4407
  %4443 = vmatprep.subr.mxu0 0.0
  %4444 = vmatpush1.msra.mxu0 0.0
  %4445 = vmatprep.subr.mxu0 0.0
  %4446 = vmatpush1.msra.mxu0 0.0
  %4447 = vmatprep.subr.mxu0 0.0
  %4448 = vmatpush1.msra.mxu0 0.0
  %4449 = vmatprep.subr.mxu0 0.0
  %4450 = vmatpush1.msra.mxu0 0.0
  %4451 = vmatprep.subr.mxu0 0.0
  %4452 = vmatpush1.msra.mxu0 0.0
  %4453 = vmatprep.subr.mxu0 0.0
  %4454 = vmatpush1.msra.mxu0 0.0
  %4455 = vmatprep.subr.mxu0 0.0
  %4456 = vmatpush1.msra.mxu0 0.0
  %4457 = vmatprep.subr.mxu0 0.0
  %4458 = vmatpush1.msra.mxu0 0.0
  %4459 = vmatprep.subr.mxu0 0.0
  %4460 = vmatpush1.msra.mxu0 0.0
  %4461 = vmatprep.subr.mxu0 0.0
  %4462 = vmatpush1.msra.mxu0 0.0
  %4463 = vmatprep.subr.mxu0 0.0
  %4464 = vmatpush1.msra.mxu0 0.0
  %4465 = vmatprep.subr.mxu0 0.0
  %4466 = vmatpush1.msra.mxu0 0.0
  %4467 = vmatprep.subr.mxu0 0.0
  %4468 = vmatpush1.msra.mxu0 0.0
  %4469 = vmatprep.subr.mxu0 0.0
  %4470 = vmatpush1.msra.mxu0 0.0
  %4471 = vmatprep.subr.mxu0 0.0
  %4472 = vmatpush1.msra.mxu0 0.0
  %4473 = vmatprep.subr.mxu0 0.0
  %4474 = vmatpush1.msra.mxu0 0.0
  %4475 = vmatprep.mubr.f32.mxu0 0.0
  %4476 = vmatmul.mubr.f32.gmra.mrb[0].mxu0 %v4346
  %v4477 = vpop.f32.mrb[0].mxu0
  %v4478 = vadd.f32 0.0, %v4477
  %v4479 = vpop.f32.mrb[0].mxu0
  %v4480 = vadd.f32 0.0, %v4479
  %4481 = vdwg.mxu0
  %4482 = vmatprep.subr.mxu0 %v4350
  %4483 = vmatpush1.msra.mxu0 %v4349
  %4484 = vmatprep.subr.mxu0 %v4354
  %4485 = vmatpush1.msra.mxu0 %v4353
  %4486 = vmatprep.subr.mxu0 %v4358
  %4487 = vmatpush1.msra.mxu0 %v4357
  %4488 = vmatprep.subr.mxu0 %v4362
  %4489 = vmatpush1.msra.mxu0 %v4361
  %4490 = vmatprep.subr.mxu0 %v4366
  %4491 = vmatpush1.msra.mxu0 %v4365
  %4492 = vmatprep.subr.mxu0 %v4370
  %4493 = vmatpush1.msra.mxu0 %v4369
  %4494 = vmatprep.subr.mxu0 %v4374
  %4495 = vmatpush1.msra.mxu0 %v4373
  %4496 = vmatprep.subr.mxu0 %v4378
  %4497 = vmatpush1.msra.mxu0 %v4377
  %4498 = vmatprep.subr.mxu0 %v4382
  %4499 = vmatpush1.msra.mxu0 %v4381
  %4500 = vmatprep.subr.mxu0 %v4386
  %4501 = vmatpush1.msra.mxu0 %v4385
  %4502 = vmatprep.subr.mxu0 %v4390
  %4503 = vmatpush1.msra.mxu0 %v4389
  %4504 = vmatprep.subr.mxu0 %v4394
  %4505 = vmatpush1.msra.mxu0 %v4393
  %4506 = vmatprep.subr.mxu0 %v4398
  %4507 = vmatpush1.msra.mxu0 %v4397
  %4508 = vmatprep.subr.mxu0 %v4402
  %4509 = vmatpush1.msra.mxu0 %v4401
  %4510 = vmatprep.subr.mxu0 %v4406
  %4511 = vmatpush1.msra.mxu0 %v4405
  %4512 = vmatprep.subr.mxu0 %v4410
  %4513 = vmatpush1.msra.mxu0 %v4409
  %4514 = vmatprep.subr.mxu0 0.0
  %4515 = vmatpush1.msra.mxu0 0.0
  %4516 = vmatprep.subr.mxu0 0.0
  %4517 = vmatpush1.msra.mxu0 0.0
  %4518 = vmatprep.subr.mxu0 0.0
  %4519 = vmatpush1.msra.mxu0 0.0
  %4520 = vmatprep.subr.mxu0 0.0
  %4521 = vmatpush1.msra.mxu0 0.0
  %4522 = vmatprep.subr.mxu0 0.0
  %4523 = vmatpush1.msra.mxu0 0.0
  %4524 = vmatprep.subr.mxu0 0.0
  %4525 = vmatpush1.msra.mxu0 0.0
  %4526 = vmatprep.subr.mxu0 0.0
  %4527 = vmatpush1.msra.mxu0 0.0
  %4528 = vmatprep.subr.mxu0 0.0
  %4529 = vmatpush1.msra.mxu0 0.0
  %4530 = vmatprep.subr.mxu0 0.0
  %4531 = vmatpush1.msra.mxu0 0.0
  %4532 = vmatprep.subr.mxu0 0.0
  %4533 = vmatpush1.msra.mxu0 0.0
  %4534 = vmatprep.subr.mxu0 0.0
  %4535 = vmatpush1.msra.mxu0 0.0
  %4536 = vmatprep.subr.mxu0 0.0
  %4537 = vmatpush1.msra.mxu0 0.0
  %4538 = vmatprep.subr.mxu0 0.0
  %4539 = vmatpush1.msra.mxu0 0.0
  %4540 = vmatprep.subr.mxu0 0.0
  %4541 = vmatpush1.msra.mxu0 0.0
  %4542 = vmatprep.subr.mxu0 0.0
  %4543 = vmatpush1.msra.mxu0 0.0
  %4544 = vmatprep.subr.mxu0 0.0
  %4545 = vmatpush1.msra.mxu0 0.0
  %4546 = vmatprep.mubr.f32.mxu0 0.0
  %4547 = vmatmul.mubr.f32.gmra.mrb[0].mxu0 %v4346
  %v4548 = vpop.f32.mrb[0].mxu0
  %v4549 = vadd.f32 0.0, %v4548
  %v4550 = vpop.f32.mrb[0].mxu0
  %v4551 = vadd.f32 0.0, %v4550
  %4552 = vdwg.mxu0
  %v4553 = vadd.f32 %v4102, %v4478
  %v4554 = vadd.f32 %v4104, %v4480
  %v4555 = vadd.f32 %v4173, %v4549
  %v4556 = vadd.f32 %v4175, %v4551
  %v4557 = vxor.u32 %v4553, 2147483648
  %v4558 = vxor.u32 %v4554, 2147483648
  %v4559 = vxor.u32 %v4555, 2147483648
  %v4560 = vmul.f32 %v4557, 1.442695
  %v4561 = vpow.pop %v4560
  %v4562 = vmul.f32 %v4558, 1.442695
  %v4563 = vpow.pop %v4562
  %v4564 = vmul.f32 %v4559, 1.442695
  %v4565 = vpow.pop %v4564
  %v4566 = vadd.f32 %v4561, 1.0
  %v4567 = vadd.f32 %v4563, 1.0
  %v4568 = vadd.f32 %v4565, 1.0
  %v4569 = vrcp.pop %v4566
  %v4570 = vmul.f32 1.0, %v4569
  %v4571 = vrcp.pop %v4567
  %v4572 = vmul.f32 1.0, %v4571
  %v4573 = vrcp.pop %v4568
  %v4574 = vmul.f32 1.0, %v4573
  %v4575 = vtanh.pop %v4556
  %v4576 = vmul.f32 %v4572, %v3967
  %v4577 = vmul.f32 %v4570, %v4575
  %v4578 = vadd.f32 %v4576, %v4577
  %v4579 = vtanh.pop %v4578
  %v4580 = vmul.f32 %v4574, %v4579
  %4581 = vst [vmem:[#allocation2 + $0x30] sm:$0xff] %v4580
  %v4582 = vld [vmem:[%s5] sm:$0xff]
  %v4583 = vld [vmem:[%s5 + $0x8] sm:$0xff]
  %v4584 = vld [vmem:[%s5 + $0x10] sm:$0xff]
  %v4585 = vld [vmem:[%s5 + $0x18] sm:$0xff]
  %v4586 = vld [vmem:[%s5 + $0x20] sm:$0xff]
  %v4587 = vld [vmem:[%s5 + $0x28] sm:$0xff]
  %v4588 = vld [vmem:[%s5 + $0x30] sm:$0xff]
  %v4589 = vld [vmem:[%s5 + $0x38] sm:$0xff]
  %v4590 = vld [vmem:[%s5 + $0x40] sm:$0xff]
  %v4591 = vld [vmem:[%s5 + $0x48] sm:$0xff]
  %v4592 = vld [vmem:[%s5 + $0x50] sm:$0xff]
  %v4593 = vld [vmem:[%s5 + $0x58] sm:$0xff]
  %v4594 = vld [vmem:[%s5 + $0x60] sm:$0xff]
  %v4595 = vld [vmem:[%s5 + $0x68] sm:$0xff]
  %v4596 = vld [vmem:[%s5 + $0x70] sm:$0xff]
  %v4597 = vld [vmem:[%s5 + $0x78] sm:$0xff]
  %v4598 = vld [vmem:[%s5 + $0x80] sm:$0xff]
  %v4599 = vld [vmem:[%s5 + $0x88] sm:$0xff]
  %v4600 = vld [vmem:[%s5 + $0x90] sm:$0xff]
  %v4601 = vld [vmem:[%s5 + $0x98] sm:$0xff]
  %v4602 = vld [vmem:[%s5 + $0xa0] sm:$0xff]
  %v4603 = vld [vmem:[%s5 + $0xa8] sm:$0xff]
  %v4604 = vld [vmem:[%s5 + $0xb0] sm:$0xff]
  %v4605 = vld [vmem:[%s5 + $0xb8] sm:$0xff]
  %v4606 = vld [vmem:[%s5 + $0xc0] sm:$0xff]
  %v4607 = vld [vmem:[%s5 + $0xc8] sm:$0xff]
  %v4608 = vld [vmem:[%s5 + $0xd0] sm:$0xff]
  %v4609 = vld [vmem:[%s5 + $0xd8] sm:$0xff]
  %v4610 = vld [vmem:[%s5 + $0xe0] sm:$0xff]
  %v4611 = vld [vmem:[%s5 + $0xe8] sm:$0xff]
  %v4612 = vld [vmem:[%s5 + $0xf0] sm:$0xff]
  %v4613 = vld [vmem:[%s5 + $0xf8] sm:$0xff]
  %v4614 = vld [vmem:[%s5 + $0x100] sm:$0xff]
  %v4615 = vld [vmem:[%s5 + $0x108] sm:$0xff]
  %v4616 = vld [vmem:[%s5 + $0x110] sm:$0xff]
  %v4617 = vld [vmem:[%s5 + $0x118] sm:$0xff]
  %v4618 = vld [vmem:[%s5 + $0x120] sm:$0xff]
  %v4619 = vld [vmem:[%s5 + $0x128] sm:$0xff]
  %v4620 = vld [vmem:[%s5 + $0x130] sm:$0xff]
  %v4621 = vld [vmem:[%s5 + $0x138] sm:$0xff]
  %v4622 = vld [vmem:[%s5 + $0x140] sm:$0xff]
  %v4623 = vld [vmem:[%s5 + $0x148] sm:$0xff]
  %v4624 = vld [vmem:[%s5 + $0x150] sm:$0xff]
  %v4625 = vld [vmem:[%s5 + $0x158] sm:$0xff]
  %v4626 = vld [vmem:[%s5 + $0x160] sm:$0xff]
  %v4627 = vld [vmem:[%s5 + $0x168] sm:$0xff]
  %v4628 = vld [vmem:[%s5 + $0x170] sm:$0xff]
  %v4629 = vld [vmem:[%s5 + $0x178] sm:$0xff]
  %v4630 = vld [vmem:[%s5 + $0x180] sm:$0xff]
  %v4631 = vld [vmem:[%s5 + $0x188] sm:$0xff]
  %v4632 = vld [vmem:[%s5 + $0x190] sm:$0xff]
  %v4633 = vld [vmem:[%s5 + $0x198] sm:$0xff]
  %v4634 = vld [vmem:[%s5 + $0x1a0] sm:$0xff]
  %v4635 = vld [vmem:[%s5 + $0x1a8] sm:$0xff]
  %v4636 = vld [vmem:[%s5 + $0x1b0] sm:$0xff]
  %v4637 = vld [vmem:[%s5 + $0x1b8] sm:$0xff]
  %v4638 = vld [vmem:[%s5 + $0x1c0] sm:$0xff]
  %v4639 = vld [vmem:[%s5 + $0x1c8] sm:$0xff]
  %v4640 = vld [vmem:[%s5 + $0x1d0] sm:$0xff]
  %v4641 = vld [vmem:[%s5 + $0x1d8] sm:$0xff]
  %v4642 = vld [vmem:[%s5 + $0x1e0] sm:$0xff]
  %v4643 = vld [vmem:[%s5 + $0x1e8] sm:$0xff]
  %v4644 = vld [vmem:[%s5 + $0x1f0] sm:$0xff]
  %v4645 = vld [vmem:[%s5 + $0x1f8] sm:$0xff]
  %4646 = vmatprep.subr.mxu0 %v4583
  %4647 = vmatpush1.msra.mxu0 %v4582
  %4648 = vmatprep.subr.mxu0 %v4587
  %4649 = vmatpush1.msra.mxu0 %v4586
  %4650 = vmatprep.subr.mxu0 %v4591
  %4651 = vmatpush1.msra.mxu0 %v4590
  %4652 = vmatprep.subr.mxu0 %v4595
  %4653 = vmatpush1.msra.mxu0 %v4594
  %4654 = vmatprep.subr.mxu0 %v4599
  %4655 = vmatpush1.msra.mxu0 %v4598
  %4656 = vmatprep.subr.mxu0 %v4603
  %4657 = vmatpush1.msra.mxu0 %v4602
  %4658 = vmatprep.subr.mxu0 %v4607
  %4659 = vmatpush1.msra.mxu0 %v4606
  %4660 = vmatprep.subr.mxu0 %v4611
  %4661 = vmatpush1.msra.mxu0 %v4610
  %4662 = vmatprep.subr.mxu0 %v4615
  %4663 = vmatpush1.msra.mxu0 %v4614
  %4664 = vmatprep.subr.mxu0 %v4619
  %4665 = vmatpush1.msra.mxu0 %v4618
  %4666 = vmatprep.subr.mxu0 %v4623
  %4667 = vmatpush1.msra.mxu0 %v4622
  %4668 = vmatprep.subr.mxu0 %v4627
  %4669 = vmatpush1.msra.mxu0 %v4626
  %4670 = vmatprep.subr.mxu0 %v4631
  %4671 = vmatpush1.msra.mxu0 %v4630
  %4672 = vmatprep.subr.mxu0 %v4635
  %4673 = vmatpush1.msra.mxu0 %v4634
  %4674 = vmatprep.subr.mxu0 %v4639
  %4675 = vmatpush1.msra.mxu0 %v4638
  %4676 = vmatprep.subr.mxu0 %v4643
  %4677 = vmatpush1.msra.mxu0 %v4642
  %4678 = vmatprep.subr.mxu0 0.0
  %4679 = vmatpush1.msra.mxu0 0.0
  %4680 = vmatprep.subr.mxu0 0.0
  %4681 = vmatpush1.msra.mxu0 0.0
  %4682 = vmatprep.subr.mxu0 0.0
  %4683 = vmatpush1.msra.mxu0 0.0
  %4684 = vmatprep.subr.mxu0 0.0
  %4685 = vmatpush1.msra.mxu0 0.0
  %4686 = vmatprep.subr.mxu0 0.0
  %4687 = vmatpush1.msra.mxu0 0.0
  %4688 = vmatprep.subr.mxu0 0.0
  %4689 = vmatpush1.msra.mxu0 0.0
  %4690 = vmatprep.subr.mxu0 0.0
  %4691 = vmatpush1.msra.mxu0 0.0
  %4692 = vmatprep.subr.mxu0 0.0
  %4693 = vmatpush1.msra.mxu0 0.0
  %4694 = vmatprep.subr.mxu0 0.0
  %4695 = vmatpush1.msra.mxu0 0.0
  %4696 = vmatprep.subr.mxu0 0.0
  %4697 = vmatpush1.msra.mxu0 0.0
  %4698 = vmatprep.subr.mxu0 0.0
  %4699 = vmatpush1.msra.mxu0 0.0
  %4700 = vmatprep.subr.mxu0 0.0
  %4701 = vmatpush1.msra.mxu0 0.0
  %4702 = vmatprep.subr.mxu0 0.0
  %4703 = vmatpush1.msra.mxu0 0.0
  %4704 = vmatprep.subr.mxu0 0.0
  %4705 = vmatpush1.msra.mxu0 0.0
  %4706 = vmatprep.subr.mxu0 0.0
  %4707 = vmatpush1.msra.mxu0 0.0
  %4708 = vmatprep.subr.mxu0 0.0
  %4709 = vmatpush1.msra.mxu0 0.0
  %4710 = vmatprep.mubr.f32.mxu0 0.0
  %4711 = vmatmul.mubr.f32.gmra.mrb[0].mxu0 %v4580
  %v4712 = vpop.f32.mrb[0].mxu0
  %v4713 = vadd.f32 %v288, %v4712
  %v4714 = vpop.f32.mrb[0].mxu0
  %v4715 = vadd.f32 %v292, %v4714
  %4716 = vdwg.mxu0
  %4717 = vmatprep.subr.mxu0 %v4585
  %4718 = vmatpush1.msra.mxu0 %v4584
  %4719 = vmatprep.subr.mxu0 %v4589
  %4720 = vmatpush1.msra.mxu0 %v4588
  %4721 = vmatprep.subr.mxu0 %v4593
  %4722 = vmatpush1.msra.mxu0 %v4592
  %4723 = vmatprep.subr.mxu0 %v4597
  %4724 = vmatpush1.msra.mxu0 %v4596
  %4725 = vmatprep.subr.mxu0 %v4601
  %4726 = vmatpush1.msra.mxu0 %v4600
  %4727 = vmatprep.subr.mxu0 %v4605
  %4728 = vmatpush1.msra.mxu0 %v4604
  %4729 = vmatprep.subr.mxu0 %v4609
  %4730 = vmatpush1.msra.mxu0 %v4608
  %4731 = vmatprep.subr.mxu0 %v4613
  %4732 = vmatpush1.msra.mxu0 %v4612
  %4733 = vmatprep.subr.mxu0 %v4617
  %4734 = vmatpush1.msra.mxu0 %v4616
  %4735 = vmatprep.subr.mxu0 %v4621
  %4736 = vmatpush1.msra.mxu0 %v4620
  %4737 = vmatprep.subr.mxu0 %v4625
  %4738 = vmatpush1.msra.mxu0 %v4624
  %4739 = vmatprep.subr.mxu0 %v4629
  %4740 = vmatpush1.msra.mxu0 %v4628
  %4741 = vmatprep.subr.mxu0 %v4633
  %4742 = vmatpush1.msra.mxu0 %v4632
  %4743 = vmatprep.subr.mxu0 %v4637
  %4744 = vmatpush1.msra.mxu0 %v4636
  %4745 = vmatprep.subr.mxu0 %v4641
  %4746 = vmatpush1.msra.mxu0 %v4640
  %4747 = vmatprep.subr.mxu0 %v4645
  %4748 = vmatpush1.msra.mxu0 %v4644
  %4749 = vmatprep.subr.mxu0 0.0
  %4750 = vmatpush1.msra.mxu0 0.0
  %4751 = vmatprep.subr.mxu0 0.0
  %4752 = vmatpush1.msra.mxu0 0.0
  %4753 = vmatprep.subr.mxu0 0.0
  %4754 = vmatpush1.msra.mxu0 0.0
  %4755 = vmatprep.subr.mxu0 0.0
  %4756 = vmatpush1.msra.mxu0 0.0
  %4757 = vmatprep.subr.mxu0 0.0
  %4758 = vmatpush1.msra.mxu0 0.0
  %4759 = vmatprep.subr.mxu0 0.0
  %4760 = vmatpush1.msra.mxu0 0.0
  %4761 = vmatprep.subr.mxu0 0.0
  %4762 = vmatpush1.msra.mxu0 0.0
  %4763 = vmatprep.subr.mxu0 0.0
  %4764 = vmatpush1.msra.mxu0 0.0
  %4765 = vmatprep.subr.mxu0 0.0
  %4766 = vmatpush1.msra.mxu0 0.0
  %4767 = vmatprep.subr.mxu0 0.0
  %4768 = vmatpush1.msra.mxu0 0.0
  %4769 = vmatprep.subr.mxu0 0.0
  %4770 = vmatpush1.msra.mxu0 0.0
  %4771 = vmatprep.subr.mxu0 0.0
  %4772 = vmatpush1.msra.mxu0 0.0
  %4773 = vmatprep.subr.mxu0 0.0
  %4774 = vmatpush1.msra.mxu0 0.0
  %4775 = vmatprep.subr.mxu0 0.0
  %4776 = vmatpush1.msra.mxu0 0.0
  %4777 = vmatprep.subr.mxu0 0.0
  %4778 = vmatpush1.msra.mxu0 0.0
  %4779 = vmatprep.subr.mxu0 0.0
  %4780 = vmatpush1.msra.mxu0 0.0
  %4781 = vmatprep.mubr.f32.mxu0 0.0
  %4782 = vmatmul.mubr.f32.gmra.mrb[0].mxu0 %v4580
  %v4783 = vpop.f32.mrb[0].mxu0
  %v4784 = vadd.f32 %v296, %v4783
  %v4785 = vpop.f32.mrb[0].mxu0
  %v4786 = vadd.f32 %v300, %v4785
  %4787 = vdwg.mxu0
  %4788 = vmatprep.subr.mxu0 %v220
  %4789 = vmatpush1.msra.mxu0 %v219
  %4790 = vmatprep.subr.mxu0 %v224
  %4791 = vmatpush1.msra.mxu0 %v223
  %4792 = vmatprep.subr.mxu0 %v228
  %4793 = vmatpush1.msra.mxu0 %v227
  %4794 = vmatprep.subr.mxu0 %v232
  %4795 = vmatpush1.msra.mxu0 %v231
  %4796 = vmatprep.subr.mxu0 %v236
  %4797 = vmatpush1.msra.mxu0 %v235
  %4798 = vmatprep.subr.mxu0 %v240
  %4799 = vmatpush1.msra.mxu0 %v239
  %4800 = vmatprep.subr.mxu0 %v244
  %4801 = vmatpush1.msra.mxu0 %v243
  %4802 = vmatprep.subr.mxu0 %v248
  %4803 = vmatpush1.msra.mxu0 %v247
  %4804 = vmatprep.subr.mxu0 %v252
  %4805 = vmatpush1.msra.mxu0 %v251
  %4806 = vmatprep.subr.mxu0 %v256
  %4807 = vmatpush1.msra.mxu0 %v255
  %4808 = vmatprep.subr.mxu0 %v260
  %4809 = vmatpush1.msra.mxu0 %v259
  %4810 = vmatprep.subr.mxu0 %v264
  %4811 = vmatpush1.msra.mxu0 %v263
  %4812 = vmatprep.subr.mxu0 %v268
  %4813 = vmatpush1.msra.mxu0 %v267
  %4814 = vmatprep.subr.mxu0 %v272
  %4815 = vmatpush1.msra.mxu0 %v271
  %4816 = vmatprep.subr.mxu0 %v276
  %4817 = vmatpush1.msra.mxu0 %v275
  %4818 = vmatprep.subr.mxu0 %v280
  %4819 = vmatpush1.msra.mxu0 %v279
  %4820 = vmatprep.subr.mxu0 0.0
  %4821 = vmatpush1.msra.mxu0 0.0
  %4822 = vmatprep.subr.mxu0 0.0
  %4823 = vmatpush1.msra.mxu0 0.0
  %4824 = vmatprep.subr.mxu0 0.0
  %4825 = vmatpush1.msra.mxu0 0.0
  %4826 = vmatprep.subr.mxu0 0.0
  %4827 = vmatpush1.msra.mxu0 0.0
  %4828 = vmatprep.subr.mxu0 0.0
  %4829 = vmatpush1.msra.mxu0 0.0
  %4830 = vmatprep.subr.mxu0 0.0
  %4831 = vmatpush1.msra.mxu0 0.0
  %4832 = vmatprep.subr.mxu0 0.0
  %4833 = vmatpush1.msra.mxu0 0.0
  %4834 = vmatprep.subr.mxu0 0.0
  %4835 = vmatpush1.msra.mxu0 0.0
  %4836 = vmatprep.subr.mxu0 0.0
  %4837 = vmatpush1.msra.mxu0 0.0
  %4838 = vmatprep.subr.mxu0 0.0
  %4839 = vmatpush1.msra.mxu0 0.0
  %4840 = vmatprep.subr.mxu0 0.0
  %4841 = vmatpush1.msra.mxu0 0.0
  %4842 = vmatprep.subr.mxu0 0.0
  %4843 = vmatpush1.msra.mxu0 0.0
  %4844 = vmatprep.subr.mxu0 0.0
  %4845 = vmatpush1.msra.mxu0 0.0
  %4846 = vmatprep.subr.mxu0 0.0
  %4847 = vmatpush1.msra.mxu0 0.0
  %4848 = vmatprep.subr.mxu0 0.0
  %4849 = vmatpush1.msra.mxu0 0.0
  %4850 = vmatprep.subr.mxu0 0.0
  %4851 = vmatpush1.msra.mxu0 0.0
  %4852 = vmatprep.mubr.f32.mxu0 0.0
  %4853 = vmatmul.mubr.f32.gmra.mrb[0].mxu0 %v4346
  %v4854 = vpop.f32.mrb[0].mxu0
  %v4855 = vadd.f32 0.0, %v4854
  %v4856 = vpop.f32.mrb[0].mxu0
  %v4857 = vadd.f32 0.0, %v4856
  %4858 = vdwg.mxu0
  %4859 = vmatprep.subr.mxu0 %v222
  %4860 = vmatpush1.msra.mxu0 %v221
  %4861 = vmatprep.subr.mxu0 %v226
  %4862 = vmatpush1.msra.mxu0 %v225
  %4863 = vmatprep.subr.mxu0 %v230
  %4864 = vmatpush1.msra.mxu0 %v229
  %4865 = vmatprep.subr.mxu0 %v234
  %4866 = vmatpush1.msra.mxu0 %v233
  %4867 = vmatprep.subr.mxu0 %v238
  %4868 = vmatpush1.msra.mxu0 %v237
  %4869 = vmatprep.subr.mxu0 %v242
  %4870 = vmatpush1.msra.mxu0 %v241
  %4871 = vmatprep.subr.mxu0 %v246
  %4872 = vmatpush1.msra.mxu0 %v245
  %4873 = vmatprep.subr.mxu0 %v250
  %4874 = vmatpush1.msra.mxu0 %v249
  %4875 = vmatprep.subr.mxu0 %v254
  %4876 = vmatpush1.msra.mxu0 %v253
  %4877 = vmatprep.subr.mxu0 %v258
  %4878 = vmatpush1.msra.mxu0 %v257
  %4879 = vmatprep.subr.mxu0 %v262
  %4880 = vmatpush1.msra.mxu0 %v261
  %4881 = vmatprep.subr.mxu0 %v266
  %4882 = vmatpush1.msra.mxu0 %v265
  %4883 = vmatprep.subr.mxu0 %v270
  %4884 = vmatpush1.msra.mxu0 %v269
  %4885 = vmatprep.subr.mxu0 %v274
  %4886 = vmatpush1.msra.mxu0 %v273
  %4887 = vmatprep.subr.mxu0 %v278
  %4888 = vmatpush1.msra.mxu0 %v277
  %4889 = vmatprep.subr.mxu0 %v282
  %4890 = vmatpush1.msra.mxu0 %v281
  %4891 = vmatprep.subr.mxu0 0.0
  %4892 = vmatpush1.msra.mxu0 0.0
  %4893 = vmatprep.subr.mxu0 0.0
  %4894 = vmatpush1.msra.mxu0 0.0
  %4895 = vmatprep.subr.mxu0 0.0
  %4896 = vmatpush1.msra.mxu0 0.0
  %4897 = vmatprep.subr.mxu0 0.0
  %4898 = vmatpush1.msra.mxu0 0.0
  %4899 = vmatprep.subr.mxu0 0.0
  %4900 = vmatpush1.msra.mxu0 0.0
  %4901 = vmatprep.subr.mxu0 0.0
  %4902 = vmatpush1.msra.mxu0 0.0
  %4903 = vmatprep.subr.mxu0 0.0
  %4904 = vmatpush1.msra.mxu0 0.0
  %4905 = vmatprep.subr.mxu0 0.0
  %4906 = vmatpush1.msra.mxu0 0.0
  %4907 = vmatprep.subr.mxu0 0.0
  %4908 = vmatpush1.msra.mxu0 0.0
  %4909 = vmatprep.subr.mxu0 0.0
  %4910 = vmatpush1.msra.mxu0 0.0
  %4911 = vmatprep.subr.mxu0 0.0
  %4912 = vmatpush1.msra.mxu0 0.0
  %4913 = vmatprep.subr.mxu0 0.0
  %4914 = vmatpush1.msra.mxu0 0.0
  %4915 = vmatprep.subr.mxu0 0.0
  %4916 = vmatpush1.msra.mxu0 0.0
  %4917 = vmatprep.subr.mxu0 0.0
  %4918 = vmatpush1.msra.mxu0 0.0
  %4919 = vmatprep.subr.mxu0 0.0
  %4920 = vmatpush1.msra.mxu0 0.0
  %4921 = vmatprep.subr.mxu0 0.0
  %4922 = vmatpush1.msra.mxu0 0.0
  %4923 = vmatprep.mubr.f32.mxu0 0.0
  %4924 = vmatmul.mubr.f32.gmra.mrb[0].mxu0 %v4346
  %v4925 = vpop.f32.mrb[0].mxu0
  %v4926 = vadd.f32 0.0, %v4925
  %v4927 = vpop.f32.mrb[0].mxu0
  %v4928 = vadd.f32 0.0, %v4927
  %4929 = vdwg.mxu0
  %v4930 = vadd.f32 %v144, %v4855
  %v4931 = vadd.f32 %v146, %v4857
  %v4932 = vadd.f32 %v215, %v4926
  %v4933 = vadd.f32 %v217, %v4928
  %v4934 = vxor.u32 %v4930, 2147483648
  %v4935 = vxor.u32 %v4931, 2147483648
  %v4936 = vxor.u32 %v4932, 2147483648
  %v4937 = vmul.f32 %v4934, 1.442695
  %v4938 = vpow.pop %v4937
  %v4939 = vmul.f32 %v4935, 1.442695
  %v4940 = vpow.pop %v4939
  %v4941 = vmul.f32 %v4936, 1.442695
  %v4942 = vpow.pop %v4941
  %v4943 = vadd.f32 %v4938, 1.0
  %v4944 = vadd.f32 %v4940, 1.0
  %v4945 = vadd.f32 %v4942, 1.0
  %v4946 = vrcp.pop %v4943
  %v4947 = vmul.f32 1.0, %v4946
  %v4948 = vrcp.pop %v4944
  %v4949 = vmul.f32 1.0, %v4948
  %v4950 = vrcp.pop %v4945
  %v4951 = vmul.f32 1.0, %v4950
  %v4952 = vtanh.pop %v4933
  %v4953 = vmul.f32 %v4949, %v4344
  %v4954 = vmul.f32 %v4947, %v4952
  %v4955 = vadd.f32 %v4953, %v4954
  %v4956 = vtanh.pop %v4955
  %v4957 = vmul.f32 %v4951, %v4956
  %v4958 = vld [vmem:[%s4] sm:$0xff]
  %v4959 = vld [vmem:[%s4 + $0x8] sm:$0xff]
  %v4960 = vld [vmem:[%s4 + $0x10] sm:$0xff]
  %v4961 = vld [vmem:[%s4 + $0x18] sm:$0xff]
  %v4962 = vld [vmem:[%s4 + $0x20] sm:$0xff]
  %v4963 = vld [vmem:[%s4 + $0x28] sm:$0xff]
  %v4964 = vld [vmem:[%s4 + $0x30] sm:$0xff]
  %v4965 = vld [vmem:[%s4 + $0x38] sm:$0xff]
  %v4966 = vld [vmem:[%s4 + $0x40] sm:$0xff]
  %v4967 = vld [vmem:[%s4 + $0x48] sm:$0xff]
  %v4968 = vld [vmem:[%s4 + $0x50] sm:$0xff]
  %v4969 = vld [vmem:[%s4 + $0x58] sm:$0xff]
  %v4970 = vld [vmem:[%s4 + $0x60] sm:$0xff]
  %v4971 = vld [vmem:[%s4 + $0x68] sm:$0xff]
  %v4972 = vld [vmem:[%s4 + $0x70] sm:$0xff]
  %v4973 = vld [vmem:[%s4 + $0x78] sm:$0xff]
  %v4974 = vld [vmem:[%s4 + $0x80] sm:$0xff]
  %v4975 = vld [vmem:[%s4 + $0x88] sm:$0xff]
  %v4976 = vld [vmem:[%s4 + $0x90] sm:$0xff]
  %v4977 = vld [vmem:[%s4 + $0x98] sm:$0xff]
  %v4978 = vld [vmem:[%s4 + $0xa0] sm:$0xff]
  %v4979 = vld [vmem:[%s4 + $0xa8] sm:$0xff]
  %v4980 = vld [vmem:[%s4 + $0xb0] sm:$0xff]
  %v4981 = vld [vmem:[%s4 + $0xb8] sm:$0xff]
  %v4982 = vld [vmem:[%s4 + $0xc0] sm:$0xff]
  %v4983 = vld [vmem:[%s4 + $0xc8] sm:$0xff]
  %v4984 = vld [vmem:[%s4 + $0xd0] sm:$0xff]
  %v4985 = vld [vmem:[%s4 + $0xd8] sm:$0xff]
  %v4986 = vld [vmem:[%s4 + $0xe0] sm:$0xff]
  %v4987 = vld [vmem:[%s4 + $0xe8] sm:$0xff]
  %v4988 = vld [vmem:[%s4 + $0xf0] sm:$0xff]
  %v4989 = vld [vmem:[%s4 + $0xf8] sm:$0xff]
  %v4990 = vld [vmem:[%s4 + $0x100] sm:$0xff]
  %v4991 = vld [vmem:[%s4 + $0x108] sm:$0xff]
  %v4992 = vld [vmem:[%s4 + $0x110] sm:$0xff]
  %v4993 = vld [vmem:[%s4 + $0x118] sm:$0xff]
  %v4994 = vld [vmem:[%s4 + $0x120] sm:$0xff]
  %v4995 = vld [vmem:[%s4 + $0x128] sm:$0xff]
  %v4996 = vld [vmem:[%s4 + $0x130] sm:$0xff]
  %v4997 = vld [vmem:[%s4 + $0x138] sm:$0xff]
  %v4998 = vld [vmem:[%s4 + $0x140] sm:$0xff]
  %v4999 = vld [vmem:[%s4 + $0x148] sm:$0xff]
  %v5000 = vld [vmem:[%s4 + $0x150] sm:$0xff]
  %v5001 = vld [vmem:[%s4 + $0x158] sm:$0xff]
  %v5002 = vld [vmem:[%s4 + $0x160] sm:$0xff]
  %v5003 = vld [vmem:[%s4 + $0x168] sm:$0xff]
  %v5004 = vld [vmem:[%s4 + $0x170] sm:$0xff]
  %v5005 = vld [vmem:[%s4 + $0x178] sm:$0xff]
  %v5006 = vld [vmem:[%s4 + $0x180] sm:$0xff]
  %v5007 = vld [vmem:[%s4 + $0x188] sm:$0xff]
  %v5008 = vld [vmem:[%s4 + $0x190] sm:$0xff]
  %v5009 = vld [vmem:[%s4 + $0x198] sm:$0xff]
  %v5010 = vld [vmem:[%s4 + $0x1a0] sm:$0xff]
  %v5011 = vld [vmem:[%s4 + $0x1a8] sm:$0xff]
  %v5012 = vld [vmem:[%s4 + $0x1b0] sm:$0xff]
  %v5013 = vld [vmem:[%s4 + $0x1b8] sm:$0xff]
  %v5014 = vld [vmem:[%s4 + $0x1c0] sm:$0xff]
  %v5015 = vld [vmem:[%s4 + $0x1c8] sm:$0xff]
  %v5016 = vld [vmem:[%s4 + $0x1d0] sm:$0xff]
  %v5017 = vld [vmem:[%s4 + $0x1d8] sm:$0xff]
  %v5018 = vld [vmem:[%s4 + $0x1e0] sm:$0xff]
  %v5019 = vld [vmem:[%s4 + $0x1e8] sm:$0xff]
  %v5020 = vld [vmem:[%s4 + $0x1f0] sm:$0xff]
  %v5021 = vld [vmem:[%s4 + $0x1f8] sm:$0xff]
  %5022 = vmatprep.subr.mxu0 %v4959
  %5023 = vmatpush1.msra.mxu0 %v4958
  %5024 = vmatprep.subr.mxu0 %v4963
  %5025 = vmatpush1.msra.mxu0 %v4962
  %5026 = vmatprep.subr.mxu0 %v4967
  %5027 = vmatpush1.msra.mxu0 %v4966
  %5028 = vmatprep.subr.mxu0 %v4971
  %5029 = vmatpush1.msra.mxu0 %v4970
  %5030 = vmatprep.subr.mxu0 %v4975
  %5031 = vmatpush1.msra.mxu0 %v4974
  %5032 = vmatprep.subr.mxu0 %v4979
  %5033 = vmatpush1.msra.mxu0 %v4978
  %5034 = vmatprep.subr.mxu0 %v4983
  %5035 = vmatpush1.msra.mxu0 %v4982
  %5036 = vmatprep.subr.mxu0 %v4987
  %5037 = vmatpush1.msra.mxu0 %v4986
  %5038 = vmatprep.subr.mxu0 %v4991
  %5039 = vmatpush1.msra.mxu0 %v4990
  %5040 = vmatprep.subr.mxu0 %v4995
  %5041 = vmatpush1.msra.mxu0 %v4994
  %5042 = vmatprep.subr.mxu0 %v4999
  %5043 = vmatpush1.msra.mxu0 %v4998
  %5044 = vmatprep.subr.mxu0 %v5003
  %5045 = vmatpush1.msra.mxu0 %v5002
  %5046 = vmatprep.subr.mxu0 %v5007
  %5047 = vmatpush1.msra.mxu0 %v5006
  %5048 = vmatprep.subr.mxu0 %v5011
  %5049 = vmatpush1.msra.mxu0 %v5010
  %5050 = vmatprep.subr.mxu0 %v5015
  %5051 = vmatpush1.msra.mxu0 %v5014
  %5052 = vmatprep.subr.mxu0 %v5019
  %5053 = vmatpush1.msra.mxu0 %v5018
  %5054 = vmatprep.subr.mxu0 0.0
  %5055 = vmatpush1.msra.mxu0 0.0
  %5056 = vmatprep.subr.mxu0 0.0
  %5057 = vmatpush1.msra.mxu0 0.0
  %5058 = vmatprep.subr.mxu0 0.0
  %5059 = vmatpush1.msra.mxu0 0.0
  %5060 = vmatprep.subr.mxu0 0.0
  %5061 = vmatpush1.msra.mxu0 0.0
  %5062 = vmatprep.subr.mxu0 0.0
  %5063 = vmatpush1.msra.mxu0 0.0
  %5064 = vmatprep.subr.mxu0 0.0
  %5065 = vmatpush1.msra.mxu0 0.0
  %5066 = vmatprep.subr.mxu0 0.0
  %5067 = vmatpush1.msra.mxu0 0.0
  %5068 = vmatprep.subr.mxu0 0.0
  %5069 = vmatpush1.msra.mxu0 0.0
  %5070 = vmatprep.subr.mxu0 0.0
  %5071 = vmatpush1.msra.mxu0 0.0
  %5072 = vmatprep.subr.mxu0 0.0
  %5073 = vmatpush1.msra.mxu0 0.0
  %5074 = vmatprep.subr.mxu0 0.0
  %5075 = vmatpush1.msra.mxu0 0.0
  %5076 = vmatprep.subr.mxu0 0.0
  %5077 = vmatpush1.msra.mxu0 0.0
  %5078 = vmatprep.subr.mxu0 0.0
  %5079 = vmatpush1.msra.mxu0 0.0
  %5080 = vmatprep.subr.mxu0 0.0
  %5081 = vmatpush1.msra.mxu0 0.0
  %5082 = vmatprep.subr.mxu0 0.0
  %5083 = vmatpush1.msra.mxu0 0.0
  %5084 = vmatprep.subr.mxu0 0.0
  %5085 = vmatpush1.msra.mxu0 0.0
  %5086 = vmatprep.mubr.f32.mxu0 0.0
  %5087 = vmatmul.mubr.f32.gmra.mrb[0].mxu0 %v4957
  %v5088 = vpop.f32.mrb[0].mxu0
  %v5089 = vadd.f32 0.0, %v5088
  %v5090 = vpop.f32.mrb[0].mxu0
  %v5091 = vadd.f32 0.0, %v5090
  %5092 = vdwg.mxu0
  %5093 = vmatprep.subr.mxu0 %v4961
  %5094 = vmatpush1.msra.mxu0 %v4960
  %5095 = vmatprep.subr.mxu0 %v4965
  %5096 = vmatpush1.msra.mxu0 %v4964
  %5097 = vmatprep.subr.mxu0 %v4969
  %5098 = vmatpush1.msra.mxu0 %v4968
  %5099 = vmatprep.subr.mxu0 %v4973
  %5100 = vmatpush1.msra.mxu0 %v4972
  %5101 = vmatprep.subr.mxu0 %v4977
  %5102 = vmatpush1.msra.mxu0 %v4976
  %5103 = vmatprep.subr.mxu0 %v4981
  %5104 = vmatpush1.msra.mxu0 %v4980
  %5105 = vmatprep.subr.mxu0 %v4985
  %5106 = vmatpush1.msra.mxu0 %v4984
  %5107 = vmatprep.subr.mxu0 %v4989
  %5108 = vmatpush1.msra.mxu0 %v4988
  %5109 = vmatprep.subr.mxu0 %v4993
  %5110 = vmatpush1.msra.mxu0 %v4992
  %5111 = vmatprep.subr.mxu0 %v4997
  %5112 = vmatpush1.msra.mxu0 %v4996
  %5113 = vmatprep.subr.mxu0 %v5001
  %5114 = vmatpush1.msra.mxu0 %v5000
  %5115 = vmatprep.subr.mxu0 %v5005
  %5116 = vmatpush1.msra.mxu0 %v5004
  %5117 = vmatprep.subr.mxu0 %v5009
  %5118 = vmatpush1.msra.mxu0 %v5008
  %5119 = vmatprep.subr.mxu0 %v5013
  %5120 = vmatpush1.msra.mxu0 %v5012
  %5121 = vmatprep.subr.mxu0 %v5017
  %5122 = vmatpush1.msra.mxu0 %v5016
  %5123 = vmatprep.subr.mxu0 %v5021
  %5124 = vmatpush1.msra.mxu0 %v5020
  %5125 = vmatprep.subr.mxu0 0.0
  %5126 = vmatpush1.msra.mxu0 0.0
  %5127 = vmatprep.subr.mxu0 0.0
  %5128 = vmatpush1.msra.mxu0 0.0
  %5129 = vmatprep.subr.mxu0 0.0
  %5130 = vmatpush1.msra.mxu0 0.0
  %5131 = vmatprep.subr.mxu0 0.0
  %5132 = vmatpush1.msra.mxu0 0.0
  %5133 = vmatprep.subr.mxu0 0.0
  %5134 = vmatpush1.msra.mxu0 0.0
  %5135 = vmatprep.subr.mxu0 0.0
  %5136 = vmatpush1.msra.mxu0 0.0
  %5137 = vmatprep.subr.mxu0 0.0
  %5138 = vmatpush1.msra.mxu0 0.0
  %5139 = vmatprep.subr.mxu0 0.0
  %5140 = vmatpush1.msra.mxu0 0.0
  %5141 = vmatprep.subr.mxu0 0.0
  %5142 = vmatpush1.msra.mxu0 0.0
  %5143 = vmatprep.subr.mxu0 0.0
  %5144 = vmatpush1.msra.mxu0 0.0
  %5145 = vmatprep.subr.mxu0 0.0
  %5146 = vmatpush1.msra.mxu0 0.0
  %5147 = vmatprep.subr.mxu0 0.0
  %5148 = vmatpush1.msra.mxu0 0.0
  %5149 = vmatprep.subr.mxu0 0.0
  %5150 = vmatpush1.msra.mxu0 0.0
  %5151 = vmatprep.subr.mxu0 0.0
  %5152 = vmatpush1.msra.mxu0 0.0
  %5153 = vmatprep.subr.mxu0 0.0
  %5154 = vmatpush1.msra.mxu0 0.0
  %5155 = vmatprep.subr.mxu0 0.0
  %5156 = vmatpush1.msra.mxu0 0.0
  %5157 = vmatprep.mubr.f32.mxu0 0.0
  %5158 = vmatmul.mubr.f32.gmra.mrb[0].mxu0 %v4957
  %v5159 = vpop.f32.mrb[0].mxu0
  %v5160 = vadd.f32 0.0, %v5159
  %v5161 = vpop.f32.mrb[0].mxu0
  %v5162 = vadd.f32 0.0, %v5161
  %5163 = vdwg.mxu0
  %v5164 = vadd.f32 %v4713, %v5089
  %v5165 = vadd.f32 %v4715, %v5091
  %v5166 = vadd.f32 %v4784, %v5160
  %v5167 = vadd.f32 %v4786, %v5162
  %v5168 = vxor.u32 %v5164, 2147483648
  %v5169 = vxor.u32 %v5165, 2147483648
  %v5170 = vxor.u32 %v5166, 2147483648
  %v5171 = vmul.f32 %v5168, 1.442695
  %v5172 = vpow.pop %v5171
  %v5173 = vmul.f32 %v5169, 1.442695
  %v5174 = vpow.pop %v5173
  %v5175 = vmul.f32 %v5170, 1.442695
  %v5176 = vpow.pop %v5175
  %v5177 = vadd.f32 %v5172, 1.0
  %v5178 = vadd.f32 %v5174, 1.0
  %v5179 = vadd.f32 %v5176, 1.0
  %v5180 = vrcp.pop %v5177
  %v5181 = vmul.f32 1.0, %v5180
  %v5182 = vrcp.pop %v5178
  %v5183 = vmul.f32 1.0, %v5182
  %v5184 = vrcp.pop %v5179
  %v5185 = vmul.f32 1.0, %v5184
  %v5186 = vtanh.pop %v5167
  %v5187 = vmul.f32 %v5183, %v4578
  %v5188 = vmul.f32 %v5181, %v5186
  %v5189 = vadd.f32 %v5187, %v5188
  %v5190 = vtanh.pop %v5189
  %v5191 = vmul.f32 %v5185, %v5190
  %5192 = vst [vmem:[#allocation2 + $0x38] sm:$0xff] %v5191
  %v5193 = vld [vmem:[#allocation2] sm:$0xff]
  %v5194 = vld [vmem:[#allocation2 + $0x8] sm:$0xff]
  %v5195 = vld [vmem:[#allocation2 + $0x10] sm:$0xff]
  %v5196 = vld [vmem:[#allocation2 + $0x18] sm:$0xff]
  %v5197 = vld [vmem:[#allocation2 + $0x20] sm:$0xff]
  %v5198 = vld [vmem:[#allocation2 + $0x28] sm:$0xff]
  %v5199 = vld [vmem:[#allocation2 + $0x30] sm:$0xff]
  %v5200 = vld [vmem:[#allocation2 + $0x38] sm:$0xff]
  %v5201 = vld [vmem:[%s7] sm:$0xff]
  %v5202 = vld [vmem:[%s7 + $0x8] sm:$0xff]
  %v5203 = vld [vmem:[%s7 + $0x10] sm:$0xff]
  %v5204 = vld [vmem:[%s7 + $0x18] sm:$0xff]
  %v5205 = vld [vmem:[%s7 + $0x20] sm:$0xff]
  %v5206 = vld [vmem:[%s7 + $0x28] sm:$0xff]
  %v5207 = vld [vmem:[%s7 + $0x30] sm:$0xff]
  %v5208 = vld [vmem:[%s7 + $0x38] sm:$0xff]
  %v5209 = vld [vmem:[%s7 + $0x40] sm:$0xff]
  %v5210 = vld [vmem:[%s7 + $0x48] sm:$0xff]
  %v5211 = vld [vmem:[%s7 + $0x50] sm:$0xff]
  %v5212 = vld [vmem:[%s7 + $0x58] sm:$0xff]
  %v5213 = vld [vmem:[%s7 + $0x60] sm:$0xff]
  %v5214 = vld [vmem:[%s7 + $0x68] sm:$0xff]
  %v5215 = vld [vmem:[%s7 + $0x70] sm:$0xff]
  %v5216 = vld [vmem:[%s7 + $0x78] sm:$0xff]
  %v5217 = vld [vmem:[#allocation3] sm:$0x1]
  %v5219 = vlaneseq
  %v5220 = vshrl.u32 %v5219, 7
  %v5221 = vsub.s32 0, %v5220
  %v5222 = vrot.slane %v5217, %v5221
  %5224 = vmatprep.subr.mxu0 0.0
  %5225 = vmatpush1.msra.mxu0 %v5201
  %5226 = vmatprep.subr.mxu0 0.0
  %5227 = vmatpush1.msra.mxu0 %v5202
  %5228 = vmatprep.subr.mxu0 0.0
  %5229 = vmatpush1.msra.mxu0 %v5203
  %5230 = vmatprep.subr.mxu0 0.0
  %5231 = vmatpush1.msra.mxu0 %v5204
  %5232 = vmatprep.subr.mxu0 0.0
  %5233 = vmatpush1.msra.mxu0 %v5205
  %5234 = vmatprep.subr.mxu0 0.0
  %5235 = vmatpush1.msra.mxu0 %v5206
  %5236 = vmatprep.subr.mxu0 0.0
  %5237 = vmatpush1.msra.mxu0 %v5207
  %5238 = vmatprep.subr.mxu0 0.0
  %5239 = vmatpush1.msra.mxu0 %v5208
  %5240 = vmatprep.subr.mxu0 0.0
  %5241 = vmatpush1.msra.mxu0 %v5209
  %5242 = vmatprep.subr.mxu0 0.0
  %5243 = vmatpush1.msra.mxu0 %v5210
  %5244 = vmatprep.subr.mxu0 0.0
  %5245 = vmatpush1.msra.mxu0 %v5211
  %5246 = vmatprep.subr.mxu0 0.0
  %5247 = vmatpush1.msra.mxu0 %v5212
  %5248 = vmatprep.subr.mxu0 0.0
  %5249 = vmatpush1.msra.mxu0 %v5213
  %5250 = vmatprep.subr.mxu0 0.0
  %5251 = vmatpush1.msra.mxu0 %v5214
  %5252 = vmatprep.subr.mxu0 0.0
  %5253 = vmatpush1.msra.mxu0 %v5215
  %5254 = vmatprep.subr.mxu0 0.0
  %5255 = vmatpush1.msra.mxu0 %v5216
  %5256 = vmatprep.subr.mxu0 0.0
  %5257 = vmatpush1.msra.mxu0 0.0
  %5258 = vmatprep.subr.mxu0 0.0
  %5259 = vmatpush1.msra.mxu0 0.0
  %5260 = vmatprep.subr.mxu0 0.0
  %5261 = vmatpush1.msra.mxu0 0.0
  %5262 = vmatprep.subr.mxu0 0.0
  %5263 = vmatpush1.msra.mxu0 0.0
  %5264 = vmatprep.subr.mxu0 0.0
  %5265 = vmatpush1.msra.mxu0 0.0
  %5266 = vmatprep.subr.mxu0 0.0
  %5267 = vmatpush1.msra.mxu0 0.0
  %5268 = vmatprep.subr.mxu0 0.0
  %5269 = vmatpush1.msra.mxu0 0.0
  %5270 = vmatprep.subr.mxu0 0.0
  %5271 = vmatpush1.msra.mxu0 0.0
  %5272 = vmatprep.subr.mxu0 0.0
  %5273 = vmatpush1.msra.mxu0 0.0
  %5274 = vmatprep.subr.mxu0 0.0
  %5275 = vmatpush1.msra.mxu0 0.0
  %5276 = vmatprep.subr.mxu0 0.0
  %5277 = vmatpush1.msra.mxu0 0.0
  %5278 = vmatprep.subr.mxu0 0.0
  %5279 = vmatpush1.msra.mxu0 0.0
  %5280 = vmatprep.subr.mxu0 0.0
  %5281 = vmatpush1.msra.mxu0 0.0
  %5282 = vmatprep.subr.mxu0 0.0
  %5283 = vmatpush1.msra.mxu0 0.0
  %5284 = vmatprep.subr.mxu0 0.0
  %5285 = vmatpush1.msra.mxu0 0.0
  %5286 = vmatprep.subr.mxu0 0.0
  %5287 = vmatpush1.msra.mxu0 0.0
  %5288 = vmatprep.mubr.f32.mxu0 0.0
  %5289 = vmatmul.mubr.f32.gmra.mrb[0].mxu0 %v5193
  %v5290 = vpop.f32.mrb[0].mxu0
  %v5291 = vadd.f32 %v5222, %v5290
  %v5292 = vpop.f32.mrb[0].mxu0
  %5293 = vmatprep.mubr.f32.mxu0 0.0
  %5294 = vmatmul.mubr.f32.gmra.mrb[0].mxu0 %v5194
  %v5295 = vpop.f32.mrb[0].mxu0
  %v5296 = vadd.f32 %v5222, %v5295
  %v5297 = vpop.f32.mrb[0].mxu0
  %5298 = vmatprep.mubr.f32.mxu0 0.0
  %5299 = vmatmul.mubr.f32.gmra.mrb[0].mxu0 %v5195
  %v5300 = vpop.f32.mrb[0].mxu0
  %v5301 = vadd.f32 %v5222, %v5300
  %v5302 = vpop.f32.mrb[0].mxu0
  %5303 = vmatprep.mubr.f32.mxu0 0.0
  %5304 = vmatmul.mubr.f32.gmra.mrb[0].mxu0 %v5196
  %v5305 = vpop.f32.mrb[0].mxu0
  %v5306 = vadd.f32 %v5222, %v5305
  %v5307 = vpop.f32.mrb[0].mxu0
  %5308 = vmatprep.mubr.f32.mxu0 0.0
  %5309 = vmatmul.mubr.f32.gmra.mrb[0].mxu0 %v5197
  %v5310 = vpop.f32.mrb[0].mxu0
  %v5311 = vadd.f32 %v5222, %v5310
  %v5312 = vpop.f32.mrb[0].mxu0
  %5313 = vmatprep.mubr.f32.mxu0 0.0
  %5314 = vmatmul.mubr.f32.gmra.mrb[0].mxu0 %v5198
  %v5315 = vpop.f32.mrb[0].mxu0
  %v5316 = vadd.f32 %v5222, %v5315
  %v5317 = vpop.f32.mrb[0].mxu0
  %5318 = vmatprep.mubr.f32.mxu0 0.0
  %5319 = vmatmul.mubr.f32.gmra.mrb[0].mxu0 %v5199
  %v5320 = vpop.f32.mrb[0].mxu0
  %v5321 = vadd.f32 %v5222, %v5320
  %v5322 = vpop.f32.mrb[0].mxu0
  %5323 = vmatprep.mubr.f32.mxu0 0.0
  %5324 = vmatmul.mubr.f32.gmra.mrb[0].mxu0 %v5200
  %v5325 = vpop.f32.mrb[0].mxu0
  %v5326 = vadd.f32 %v5222, %v5325
  %v5327 = vpop.f32.mrb[0].mxu0
  %5328 = vdwg.mxu0
  %vm5329 = vcmask 7168
  %5330 = vst.msk [vmem:[%s9] sm:$0xff] %vm5329, %v5291
  %5331 = vst.msk [vmem:[%s9 + $0x8] sm:$0xff] %vm5329, %v5296
  %5332 = vst.msk [vmem:[%s9 + $0x10] sm:$0xff] %vm5329, %v5301
  %5333 = vst.msk [vmem:[%s9 + $0x18] sm:$0xff] %vm5329, %v5306
  %5334 = vst.msk [vmem:[%s9 + $0x20] sm:$0xff] %vm5329, %v5311
  %5335 = vst.msk [vmem:[%s9 + $0x28] sm:$0xff] %vm5329, %v5316
  %5336 = vst.msk [vmem:[%s9 + $0x30] sm:$0xff] %vm5329, %v5321
  %5337 = vst.msk [vmem:[%s9 + $0x38] sm:$0xff] %vm5329, %v5326
  // Predicated region
  $region38: #{decoder_forward.1} parent=0 // pred_check
    _
  $region39: #{decoder_forward.1} parent=0 // pred_check_branch
    %5339 = sbr.rel (0) target = $region41
  $region40: #{decoder_forward.1} parent=0 // pred_region
    _
  $region41: #{decoder_forward.1} parent=0 // pred_fallthru
    _
  // Predicated region
  $region42: #{decoder_forward.1} parent=0 // pred_check
    _
  $region43: #{decoder_forward.1} parent=0 // pred_check_branch
    %5341 = sbr.rel (0) target = $region45
  $region44: #{decoder_forward.1} parent=0 // pred_region
    _
  $region45: #{decoder_forward.1} parent=0 // pred_fallthru
    _

</llo_original>
